<compile_context>
chip_gen: v7x
topology: tpu7x:2x2x1
jax: 0.10.0
libtpu: 0.0.40
codegen_flags: <defaults>
</compile_context>

<pallas_src>
import math

import jax
import jax.numpy as jnp
from jax import lax
from jax.experimental import pallas as pl
from jax.experimental.pallas import tpu as pltpu

# -- small test configuration (module default is d_model=768, dff=2048; shrunk
#    here to keep the synthetic test tiny while preserving all semantics) -----
D_MODEL = 64
NHEAD = 8
HEAD_DIM = D_MODEL // NHEAD   # 8
DFF = 128                     # dim_feedforward
LN_EPS = 1e-5
_SCALE = 1.0 / math.sqrt(HEAD_DIM)
_INV_SQRT2 = 1.0 / math.sqrt(2.0)


# ---------------------------------------------------------------------------
# In-kernel helpers
# ---------------------------------------------------------------------------
def _layernorm(x, gamma, beta):
    mean = jnp.mean(x, axis=-1, keepdims=True)
    var = jnp.mean(jnp.square(x - mean), axis=-1, keepdims=True)
    return (x - mean) * lax.rsqrt(var + LN_EPS) * gamma + beta


def _affine(x, w, b):
    # x: (S, in), w: (in, out) -- host pre-transposed -> plain NN matmul on MXU.
    return jnp.dot(x, w, preferred_element_type=jnp.float32) + b


def _split_heads(x2d):
    # (S, H*Dh) -> (H, S, Dh) head-major stack for batched attention einsums.
    return jnp.stack(
        [x2d[:, h * HEAD_DIM:(h + 1) * HEAD_DIM] for h in range(NHEAD)], axis=0)


def _encoder_layer(x, prm):
    """One post-LN TransformerEncoderLayer (ReLU FFN, NHEAD heads). x: (S, E)."""
    (w_qkv, b_qkv, w_o, b_o, w1, b1, w2, b2, g1, be1, g2, be2) = prm
    E = D_MODEL

    # --- self attention: fused QKV projection (single MXU pass, N = 3E).
    # The 1/sqrt(Dh) scale is already folded into the Q columns on the host.
    qkv = _affine(x, w_qkv, b_qkv)                       # (S, 3E)
    qh = _split_heads(qkv[:, 0:E])                       # (H, S, Dh)
    kh = _split_heads(qkv[:, E:2 * E])
    vh = _split_heads(qkv[:, 2 * E:3 * E])

    # batched-over-heads attention (single dot_general each)
    s = jnp.einsum('hsd,htd->hst', qh, kh,
                   preferred_element_type=jnp.float32)            # (H, S, S)
    s = s - jnp.max(s, axis=-1, keepdims=True)
    p = jnp.exp(s)                                                # unnormalised
    denom = jnp.sum(p, axis=-1, keepdims=True)                    # (H, S, 1)
    ctx = jnp.einsum('hst,htd->hsd', p, vh,
                     preferred_element_type=jnp.float32)          # (H, S, Dh)
    # deferred normalisation on the (H,S,Dh) context (cheaper than on (H,S,S))
    ctx = ctx * pl.reciprocal(denom, approx=True)

    # concat heads back to (S, E) and do ONE out-projection matmul
    ctx2d = jnp.concatenate([ctx[h] for h in range(NHEAD)], axis=-1)  # (S, E)
    attn = _affine(ctx2d, w_o, b_o)

    x = _layernorm(x + attn, g1, be1)

    # --- feed-forward (ReLU, torch default activation) ------------------------
    hdn = jnp.maximum(_affine(x, w1, b1), 0.0)           # (S, DFF)
    ff = _affine(hdn, w2, b2)                            # (S, E)
    return _layernorm(x + ff, g2, be2)


# ---------------------------------------------------------------------------
# Fused kernel: 2 encoder layers + fc head, one batch element per grid step
# ---------------------------------------------------------------------------
def adapter_kernel(x_ref, *refs):
    o_ref = refs[-1]
    prm = [r[...] for r in refs[:-1]]       # all weights resident in VMEM

    x = x_ref[0]                            # (S, E)
    x = _encoder_layer(x, prm[0:12])        # encoder layer 0
    x = _encoder_layer(x, prm[12:24])       # encoder layer 1

    # fc head: Linear -> exact GELU (nn.GELU default) -> Linear
    wa, ba, wb, bb = prm[24:28]
    h = _affine(x, wa, ba)
    h = 0.5 * h * (1.0 + lax.erf(h * _INV_SQRT2))
    y = _affine(h, wb, bb)

    o_ref[0] = y.astype(o_ref.dtype)


# ---------------------------------------------------------------------------
# Host-side parameter preparation (torch (out,in) -> (in,out), fused qkv,
# attention scale folded into the Q slice)
# ---------------------------------------------------------------------------
def prepare_layer_params(raw):
    win, bqkv, wout, bout, w1, b1, w2, b2, g1, be1, g2, be2 = raw
    E = D_MODEL
    w_qkv = jnp.transpose(win)                      # (E, 3E): x @ W = [q|k|v]
    b_qkv = bqkv.reshape(1, 3 * E)                  # (1, 3E)
    # fold 1/sqrt(head_dim) into the Q projection (columns 0:E)
    w_qkv = jnp.concatenate([w_qkv[:, :E] * _SCALE, w_qkv[:, E:]], axis=1)
    b_qkv = jnp.concatenate([b_qkv[:, :E] * _SCALE, b_qkv[:, E:]], axis=1)
    return (w_qkv,
            b_qkv,
            jnp.transpose(wout),               # (E, E)
            bout,                              # (1, E)
            jnp.transpose(w1),                 # (E, F)
            b1,                                # (1, F)
            jnp.transpose(w2),                 # (F, E)
            b2,                                # (1, E)
            g1, be1, g2, be2)


def prepare_fc_params(raw):
    wa, ba, wb, bb = raw
    return (jnp.transpose(wa), ba, jnp.transpose(wb), bb)


# ---------------------------------------------------------------------------
# pallas_call wrapper
# ---------------------------------------------------------------------------
def _weight_spec(shape):
    # Constant index_map: the block index never changes across the batch grid,
    # so the pipeline fetches each weight once and keeps it resident in VMEM.
    return pl.BlockSpec(shape, lambda b: (0, 0))


def transformer_encoder_adapter(src, layer_params_raw, fc_params_raw):
    # src: (S, B, E) -- PyTorch nn.TransformerEncoder layout (batch_first=False)
    params = (prepare_layer_params(layer_params_raw[0])
              + prepare_layer_params(layer_params_raw[1])
              + prepare_fc_params(fc_params_raw))

    x = jnp.transpose(src, (1, 0, 2))          # -> (B, S, E)
    B, S, E = x.shape

    in_specs = [pl.BlockSpec((1, S, E), lambda b: (b, 0, 0))] + \
               [_weight_spec(p.shape) for p in params]

    out = pl.pallas_call(
        adapter_kernel,
        out_shape=jax.ShapeDtypeStruct((B, S, E), jnp.float32),
        grid=(B,),
        in_specs=in_specs,
        out_specs=pl.BlockSpec((1, S, E), lambda b: (b, 0, 0)),
        compiler_params=pltpu.CompilerParams(dimension_semantics=("parallel",)),
    )(x, *params)
    return jnp.transpose(out, (1, 0, 2))       # back to (S, B, E)


# ---------------------------------------------------------------------------
# Deterministic parameter init (torch-like uniform(-1/sqrt(fan_in), +))
# ---------------------------------------------------------------------------
def _uniform(key, shape, bound):
    return jax.random.uniform(key, shape, jnp.float32, -bound, bound)


def init_encoder_layer(key):
    E, F = D_MODEL, DFF
    ks = jax.random.split(key, 8)
    be = 1.0 / math.sqrt(E)
    bf = 1.0 / math.sqrt(F)
    win = _uniform(ks[0], (3 * E, E), be)     # in_proj_weight
    bqkv = _uniform(ks[1], (3, E), be)        # in_proj_bias, (3E,) -> (3, E)
    wout = _uniform(ks[2], (E, E), be)        # out_proj.weight
    bout = _uniform(ks[3], (1, E), be)        # out_proj.bias
    w1 = _uniform(ks[4], (F, E), be)          # linear1.weight
    b1 = _uniform(ks[5], (1, F), be)          # linear1.bias
    w2 = _uniform(ks[6], (E, F), bf)          # linear2.weight
    b2 = _uniform(ks[7], (1, E), bf)          # linear2.bias
    g1, be1 = jnp.ones((1, E)), jnp.zeros((1, E))   # norm1
    g2, be2 = jnp.ones((1, E)), jnp.zeros((1, E))   # norm2
    return (win, bqkv, wout, bout, w1, b1, w2, b2, g1, be1, g2, be2)


def init_fc(key):
    E = D_MODEL
    ks = jax.random.split(key, 4)
    b = 1.0 / math.sqrt(E)
    return (_uniform(ks[0], (E, E), b), _uniform(ks[1], (1, E), b),
            _uniform(ks[2], (E, E), b), _uniform(ks[3], (1, E), b))


# ---------------------------------------------------------------------------
# Pure-JAX reference (same math, torch-layout params) for correctness check
# ---------------------------------------------------------------------------
def _ln_ref(x, g, b):
    mean = jnp.mean(x, axis=-1, keepdims=True)
    var = jnp.mean(jnp.square(x - mean), axis=-1, keepdims=True)
    return (x - mean) * lax.rsqrt(var + LN_EPS) * g + b


def encoder_layer_ref(x, params):                 # x: (B, S, E)
    win, bqkv, wout, bout, w1, b1, w2, b2, g1, be1, g2, be2 = params
    B, S, E = x.shape
    q = jnp.einsum('bse,fe->bsf', x, win[:E]) + bqkv[0]
    k = jnp.einsum('bse,fe->bsf', x, win[E:2 * E]) + bqkv[1]
    v = jnp.einsum('bse,fe->bsf', x, win[2 * E:]) + bqkv[2]
    q = q.reshape(B, S, NHEAD, HEAD_DIM)
    k = k.reshape(B, S, NHEAD, HEAD_DIM)
    v = v.reshape(B, S, NHEAD, HEAD_DIM)
    s = jnp.einsum('bshd,bthd->bhst', q, k) / math.sqrt(HEAD_DIM)
    p = jax.nn.softmax(s, axis=-1)
    ctx = jnp.einsum('bhst,bthd->bshd', p, v).reshape(B, S, E)
    attn = jnp.einsum('bse,fe->bsf', ctx, wout) + bout
    x = _ln_ref(x + attn, g1, be1)
    h = jax.nn.relu(jnp.einsum('bse,fe->bsf', x, w1) + b1)
    ff = jnp.einsum('bsf,ef->bse', h, w2) + b2
    return _ln_ref(x + ff, g2, be2)


def fc_ref(x, params):
    wa, ba, wb, bb = params
    h = jnp.einsum('bse,fe->bsf', x, wa) + ba
    h = 0.5 * h * (1.0 + lax.erf(h / math.sqrt(2.0)))
    return jnp.einsum('bse,fe->bsf', h, wb) + bb


def reference(src, layer_params, fc_params):
    x = jnp.transpose(src, (1, 0, 2))
    for p in layer_params:
        x = encoder_layer_ref(x, p)
    x = fc_ref(x, fc_params)
    return jnp.transpose(x, (1, 0, 2))


# ---------------------------------------------------------------------------
if __name__ == "__main__":
    key = jax.random.PRNGKey(0)
    k_x, k_l0, k_l1, k_fc = jax.random.split(key, 4)

    S, B = 8, 2
    src = jax.random.normal(k_x, (S, B, D_MODEL), jnp.float32)   # (seq, batch, d_model)

    layer_params = [init_encoder_layer(k_l0), init_encoder_layer(k_l1)]
    fc_params = init_fc(k_fc)

    out = transformer_encoder_adapter(src, layer_params, fc_params)
    out = jax.block_until_ready(out)

    ref = reference(src, layer_params, fc_params)
    assert out.shape == src.shape
    assert bool(jnp.allclose(out, ref, atol=2e-3, rtol=2e-3)), \
        f"max abs err {float(jnp.max(jnp.abs(out - ref)))}"

    print("KERNEL_OK")
</pallas_src>

<mosaic_0001>
module attributes {stable_mosaic.version = 11 : i64} {
  func.func @adapter_kernel(%arg0: i32, %arg1: memref<1x8x64xf32, #tpu.memory_space<vmem>>, %arg2: memref<64x192xf32, #tpu.memory_space<vmem>>, %arg3: memref<1x192xf32, #tpu.memory_space<vmem>>, %arg4: memref<64x64xf32, #tpu.memory_space<vmem>>, %arg5: memref<1x64xf32, #tpu.memory_space<vmem>>, %arg6: memref<64x128xf32, #tpu.memory_space<vmem>>, %arg7: memref<1x128xf32, #tpu.memory_space<vmem>>, %arg8: memref<128x64xf32, #tpu.memory_space<vmem>>, %arg9: memref<1x64xf32, #tpu.memory_space<vmem>>, %arg10: memref<1x64xf32, #tpu.memory_space<vmem>>, %arg11: memref<1x64xf32, #tpu.memory_space<vmem>>, %arg12: memref<1x64xf32, #tpu.memory_space<vmem>>, %arg13: memref<1x64xf32, #tpu.memory_space<vmem>>, %arg14: memref<64x192xf32, #tpu.memory_space<vmem>>, %arg15: memref<1x192xf32, #tpu.memory_space<vmem>>, %arg16: memref<64x64xf32, #tpu.memory_space<vmem>>, %arg17: memref<1x64xf32, #tpu.memory_space<vmem>>, %arg18: memref<64x128xf32, #tpu.memory_space<vmem>>, %arg19: memref<1x128xf32, #tpu.memory_space<vmem>>, %arg20: memref<128x64xf32, #tpu.memory_space<vmem>>, %arg21: memref<1x64xf32, #tpu.memory_space<vmem>>, %arg22: memref<1x64xf32, #tpu.memory_space<vmem>>, %arg23: memref<1x64xf32, #tpu.memory_space<vmem>>, %arg24: memref<1x64xf32, #tpu.memory_space<vmem>>, %arg25: memref<1x64xf32, #tpu.memory_space<vmem>>, %arg26: memref<64x64xf32, #tpu.memory_space<vmem>>, %arg27: memref<1x64xf32, #tpu.memory_space<vmem>>, %arg28: memref<64x64xf32, #tpu.memory_space<vmem>>, %arg29: memref<1x64xf32, #tpu.memory_space<vmem>>, %arg30: memref<1x8x64xf32, #tpu.memory_space<vmem>>) attributes {dimension_semantics = [#tpu.dimension_semantics<parallel>], iteration_bounds = array<i64: 2>, scalar_prefetch = 0 : i64, scratch_operands = 0 : i64, tpu.core_type = #tpu.core_type<tc>, window_params = [{transform_indices = @transform_0, window_bounds = array<i64: 1, 8, 64>}, {pipeline_mode = #tpu.pipeline_mode<synchronous>, transform_indices = @transform_1, window_bounds = array<i64: 64, 192>}, {pipeline_mode = #tpu.pipeline_mode<synchronous>, transform_indices = @transform_2, window_bounds = array<i64: 1, 192>}, {pipeline_mode = #tpu.pipeline_mode<synchronous>, transform_indices = @transform_3, window_bounds = array<i64: 64, 64>}, {pipeline_mode = #tpu.pipeline_mode<synchronous>, transform_indices = @transform_4, window_bounds = array<i64: 1, 64>}, {pipeline_mode = #tpu.pipeline_mode<synchronous>, transform_indices = @transform_5, window_bounds = array<i64: 64, 128>}, {pipeline_mode = #tpu.pipeline_mode<synchronous>, transform_indices = @transform_6, window_bounds = array<i64: 1, 128>}, {pipeline_mode = #tpu.pipeline_mode<synchronous>, transform_indices = @transform_7, window_bounds = array<i64: 128, 64>}, {pipeline_mode = #tpu.pipeline_mode<synchronous>, transform_indices = @transform_8, window_bounds = array<i64: 1, 64>}, {pipeline_mode = #tpu.pipeline_mode<synchronous>, transform_indices = @transform_9, window_bounds = array<i64: 1, 64>}, {pipeline_mode = #tpu.pipeline_mode<synchronous>, transform_indices = @transform_10, window_bounds = array<i64: 1, 64>}, {pipeline_mode = #tpu.pipeline_mode<synchronous>, transform_indices = @transform_11, window_bounds = array<i64: 1, 64>}, {pipeline_mode = #tpu.pipeline_mode<synchronous>, transform_indices = @transform_12, window_bounds = array<i64: 1, 64>}, {pipeline_mode = #tpu.pipeline_mode<synchronous>, transform_indices = @transform_13, window_bounds = array<i64: 64, 192>}, {pipeline_mode = #tpu.pipeline_mode<synchronous>, transform_indices = @transform_14, window_bounds = array<i64: 1, 192>}, {pipeline_mode = #tpu.pipeline_mode<synchronous>, transform_indices = @transform_15, window_bounds = array<i64: 64, 64>}, {pipeline_mode = #tpu.pipeline_mode<synchronous>, transform_indices = @transform_16, window_bounds = array<i64: 1, 64>}, {pipeline_mode = #tpu.pipeline_mode<synchronous>, transform_indices = @transform_17, window_bounds = array<i64: 64, 128>}, {pipeline_mode = #tpu.pipeline_mode<synchronous>, transform_indices = @transform_18, window_bounds = array<i64: 1, 128>}, {pipeline_mode = #tpu.pipeline_mode<synchronous>, transform_indices = @transform_19, window_bounds = array<i64: 128, 64>}, {pipeline_mode = #tpu.pipeline_mode<synchronous>, transform_indices = @transform_20, window_bounds = array<i64: 1, 64>}, {pipeline_mode = #tpu.pipeline_mode<synchronous>, transform_indices = @transform_21, window_bounds = array<i64: 1, 64>}, {pipeline_mode = #tpu.pipeline_mode<synchronous>, transform_indices = @transform_22, window_bounds = array<i64: 1, 64>}, {pipeline_mode = #tpu.pipeline_mode<synchronous>, transform_indices = @transform_23, window_bounds = array<i64: 1, 64>}, {pipeline_mode = #tpu.pipeline_mode<synchronous>, transform_indices = @transform_24, window_bounds = array<i64: 1, 64>}, {pipeline_mode = #tpu.pipeline_mode<synchronous>, transform_indices = @transform_25, window_bounds = array<i64: 64, 64>}, {pipeline_mode = #tpu.pipeline_mode<synchronous>, transform_indices = @transform_26, window_bounds = array<i64: 1, 64>}, {pipeline_mode = #tpu.pipeline_mode<synchronous>, transform_indices = @transform_27, window_bounds = array<i64: 64, 64>}, {pipeline_mode = #tpu.pipeline_mode<synchronous>, transform_indices = @transform_28, window_bounds = array<i64: 1, 64>}, {transform_indices = @transform_29, window_bounds = array<i64: 1, 8, 64>}]} {
    %c0 = arith.constant 0 : index
    %c0_0 = arith.constant 0 : index
    %0 = vector.load %arg2[%c0, %c0_0] : memref<64x192xf32, #tpu.memory_space<vmem>>, vector<64x192xf32>
    %c0_1 = arith.constant 0 : index
    %c0_2 = arith.constant 0 : index
    %1 = vector.load %arg3[%c0_1, %c0_2] : memref<1x192xf32, #tpu.memory_space<vmem>>, vector<1x192xf32>
    %c0_3 = arith.constant 0 : index
    %c0_4 = arith.constant 0 : index
    %2 = vector.load %arg4[%c0_3, %c0_4] : memref<64x64xf32, #tpu.memory_space<vmem>>, vector<64x64xf32>
    %c0_5 = arith.constant 0 : index
    %c0_6 = arith.constant 0 : index
    %3 = vector.load %arg5[%c0_5, %c0_6] : memref<1x64xf32, #tpu.memory_space<vmem>>, vector<1x64xf32>
    %c0_7 = arith.constant 0 : index
    %c0_8 = arith.constant 0 : index
    %4 = vector.load %arg6[%c0_7, %c0_8] : memref<64x128xf32, #tpu.memory_space<vmem>>, vector<64x128xf32>
    %c0_9 = arith.constant 0 : index
    %c0_10 = arith.constant 0 : index
    %5 = vector.load %arg7[%c0_9, %c0_10] : memref<1x128xf32, #tpu.memory_space<vmem>>, vector<1x128xf32>
    %c0_11 = arith.constant 0 : index
    %c0_12 = arith.constant 0 : index
    %6 = vector.load %arg8[%c0_11, %c0_12] : memref<128x64xf32, #tpu.memory_space<vmem>>, vector<128x64xf32>
    %c0_13 = arith.constant 0 : index
    %c0_14 = arith.constant 0 : index
    %7 = vector.load %arg9[%c0_13, %c0_14] : memref<1x64xf32, #tpu.memory_space<vmem>>, vector<1x64xf32>
    %c0_15 = arith.constant 0 : index
    %c0_16 = arith.constant 0 : index
    %8 = vector.load %arg10[%c0_15, %c0_16] : memref<1x64xf32, #tpu.memory_space<vmem>>, vector<1x64xf32>
    %c0_17 = arith.constant 0 : index
    %c0_18 = arith.constant 0 : index
    %9 = vector.load %arg11[%c0_17, %c0_18] : memref<1x64xf32, #tpu.memory_space<vmem>>, vector<1x64xf32>
    %c0_19 = arith.constant 0 : index
    %c0_20 = arith.constant 0 : index
    %10 = vector.load %arg12[%c0_19, %c0_20] : memref<1x64xf32, #tpu.memory_space<vmem>>, vector<1x64xf32>
    %c0_21 = arith.constant 0 : index
    %c0_22 = arith.constant 0 : index
    %11 = vector.load %arg13[%c0_21, %c0_22] : memref<1x64xf32, #tpu.memory_space<vmem>>, vector<1x64xf32>
    %c0_23 = arith.constant 0 : index
    %c0_24 = arith.constant 0 : index
    %12 = vector.load %arg14[%c0_23, %c0_24] : memref<64x192xf32, #tpu.memory_space<vmem>>, vector<64x192xf32>
    %c0_25 = arith.constant 0 : index
    %c0_26 = arith.constant 0 : index
    %13 = vector.load %arg15[%c0_25, %c0_26] : memref<1x192xf32, #tpu.memory_space<vmem>>, vector<1x192xf32>
    %c0_27 = arith.constant 0 : index
    %c0_28 = arith.constant 0 : index
    %14 = vector.load %arg16[%c0_27, %c0_28] : memref<64x64xf32, #tpu.memory_space<vmem>>, vector<64x64xf32>
    %c0_29 = arith.constant 0 : index
    %c0_30 = arith.constant 0 : index
    %15 = vector.load %arg17[%c0_29, %c0_30] : memref<1x64xf32, #tpu.memory_space<vmem>>, vector<1x64xf32>
    %c0_31 = arith.constant 0 : index
    %c0_32 = arith.constant 0 : index
    %16 = vector.load %arg18[%c0_31, %c0_32] : memref<64x128xf32, #tpu.memory_space<vmem>>, vector<64x128xf32>
    %c0_33 = arith.constant 0 : index
    %c0_34 = arith.constant 0 : index
    %17 = vector.load %arg19[%c0_33, %c0_34] : memref<1x128xf32, #tpu.memory_space<vmem>>, vector<1x128xf32>
    %c0_35 = arith.constant 0 : index
    %c0_36 = arith.constant 0 : index
    %18 = vector.load %arg20[%c0_35, %c0_36] : memref<128x64xf32, #tpu.memory_space<vmem>>, vector<128x64xf32>
    %c0_37 = arith.constant 0 : index
    %c0_38 = arith.constant 0 : index
    %19 = vector.load %arg21[%c0_37, %c0_38] : memref<1x64xf32, #tpu.memory_space<vmem>>, vector<1x64xf32>
    %c0_39 = arith.constant 0 : index
    %c0_40 = arith.constant 0 : index
    %20 = vector.load %arg22[%c0_39, %c0_40] : memref<1x64xf32, #tpu.memory_space<vmem>>, vector<1x64xf32>
    %c0_41 = arith.constant 0 : index
    %c0_42 = arith.constant 0 : index
    %21 = vector.load %arg23[%c0_41, %c0_42] : memref<1x64xf32, #tpu.memory_space<vmem>>, vector<1x64xf32>
    %c0_43 = arith.constant 0 : index
    %c0_44 = arith.constant 0 : index
    %22 = vector.load %arg24[%c0_43, %c0_44] : memref<1x64xf32, #tpu.memory_space<vmem>>, vector<1x64xf32>
    %c0_45 = arith.constant 0 : index
    %c0_46 = arith.constant 0 : index
    %23 = vector.load %arg25[%c0_45, %c0_46] : memref<1x64xf32, #tpu.memory_space<vmem>>, vector<1x64xf32>
    %c0_47 = arith.constant 0 : index
    %c0_48 = arith.constant 0 : index
    %24 = vector.load %arg26[%c0_47, %c0_48] : memref<64x64xf32, #tpu.memory_space<vmem>>, vector<64x64xf32>
    %c0_49 = arith.constant 0 : index
    %c0_50 = arith.constant 0 : index
    %25 = vector.load %arg27[%c0_49, %c0_50] : memref<1x64xf32, #tpu.memory_space<vmem>>, vector<1x64xf32>
    %c0_51 = arith.constant 0 : index
    %c0_52 = arith.constant 0 : index
    %26 = vector.load %arg28[%c0_51, %c0_52] : memref<64x64xf32, #tpu.memory_space<vmem>>, vector<64x64xf32>
    %c0_53 = arith.constant 0 : index
    %c0_54 = arith.constant 0 : index
    %27 = vector.load %arg29[%c0_53, %c0_54] : memref<1x64xf32, #tpu.memory_space<vmem>>, vector<1x64xf32>
    %c0_55 = arith.constant 0 : index
    %c0_56 = arith.constant 0 : index
    %c0_57 = arith.constant 0 : index
    %28 = vector.load %arg1[%c0_55, %c0_56, %c0_57] : memref<1x8x64xf32, #tpu.memory_space<vmem>>, vector<1x8x64xf32>
    %29 = vector.shape_cast %28 : vector<1x8x64xf32> to vector<8x64xf32>
    %cst = arith.constant dense<0.000000e+00> : vector<8x192xf32>
    %30 = tpu.matmul %29, %0, %cst {dimension_numbers = #tpu.dot_dimension_numbers<[1], [0], [0], [1], [0, 0, 1, 1], [], []>} : vector<8x64xf32>, vector<64x192xf32>, vector<8x192xf32> -> vector<8x192xf32>
    %31 = vector.broadcast %1 : vector<1x192xf32> to vector<8x192xf32>
    %32 = arith.addf %30, %31 : vector<8x192xf32>
    %33 = vector.extract_strided_slice %32 {offsets = [0, 0], sizes = [8, 64], strides = [1, 1]} : vector<8x192xf32> to vector<8x64xf32>
    %34 = vector.extract_strided_slice %33 {offsets = [0, 0], sizes = [8, 8], strides = [1, 1]} : vector<8x64xf32> to vector<8x8xf32>
    %35 = vector.extract_strided_slice %33 {offsets = [0, 8], sizes = [8, 8], strides = [1, 1]} : vector<8x64xf32> to vector<8x8xf32>
    %36 = vector.extract_strided_slice %33 {offsets = [0, 16], sizes = [8, 8], strides = [1, 1]} : vector<8x64xf32> to vector<8x8xf32>
    %37 = vector.extract_strided_slice %33 {offsets = [0, 24], sizes = [8, 8], strides = [1, 1]} : vector<8x64xf32> to vector<8x8xf32>
    %38 = vector.extract_strided_slice %33 {offsets = [0, 32], sizes = [8, 8], strides = [1, 1]} : vector<8x64xf32> to vector<8x8xf32>
    %39 = vector.extract_strided_slice %33 {offsets = [0, 40], sizes = [8, 8], strides = [1, 1]} : vector<8x64xf32> to vector<8x8xf32>
    %40 = vector.extract_strided_slice %33 {offsets = [0, 48], sizes = [8, 8], strides = [1, 1]} : vector<8x64xf32> to vector<8x8xf32>
    %41 = vector.extract_strided_slice %33 {offsets = [0, 56], sizes = [8, 8], strides = [1, 1]} : vector<8x64xf32> to vector<8x8xf32>
    %42 = vector.shape_cast %34 : vector<8x8xf32> to vector<1x8x8xf32>
    %43 = vector.shape_cast %35 : vector<8x8xf32> to vector<1x8x8xf32>
    %44 = vector.shape_cast %36 : vector<8x8xf32> to vector<1x8x8xf32>
    %45 = vector.shape_cast %37 : vector<8x8xf32> to vector<1x8x8xf32>
    %46 = vector.shape_cast %38 : vector<8x8xf32> to vector<1x8x8xf32>
    %47 = vector.shape_cast %39 : vector<8x8xf32> to vector<1x8x8xf32>
    %48 = vector.shape_cast %40 : vector<8x8xf32> to vector<1x8x8xf32>
    %49 = vector.shape_cast %41 : vector<8x8xf32> to vector<1x8x8xf32>
    %50 = tpu.concatenate %42, %43, %44, %45, %46, %47, %48, %49 in 0 : vector<1x8x8xf32>, vector<1x8x8xf32>, vector<1x8x8xf32>, vector<1x8x8xf32>, vector<1x8x8xf32>, vector<1x8x8xf32>, vector<1x8x8xf32>, vector<1x8x8xf32> -> vector<8x8x8xf32>
    %51 = vector.extract_strided_slice %32 {offsets = [0, 64], sizes = [8, 64], strides = [1, 1]} : vector<8x192xf32> to vector<8x64xf32>
    %52 = vector.extract_strided_slice %51 {offsets = [0, 0], sizes = [8, 8], strides = [1, 1]} : vector<8x64xf32> to vector<8x8xf32>
    %53 = vector.extract_strided_slice %51 {offsets = [0, 8], sizes = [8, 8], strides = [1, 1]} : vector<8x64xf32> to vector<8x8xf32>
    %54 = vector.extract_strided_slice %51 {offsets = [0, 16], sizes = [8, 8], strides = [1, 1]} : vector<8x64xf32> to vector<8x8xf32>
    %55 = vector.extract_strided_slice %51 {offsets = [0, 24], sizes = [8, 8], strides = [1, 1]} : vector<8x64xf32> to vector<8x8xf32>
    %56 = vector.extract_strided_slice %51 {offsets = [0, 32], sizes = [8, 8], strides = [1, 1]} : vector<8x64xf32> to vector<8x8xf32>
    %57 = vector.extract_strided_slice %51 {offsets = [0, 40], sizes = [8, 8], strides = [1, 1]} : vector<8x64xf32> to vector<8x8xf32>
    %58 = vector.extract_strided_slice %51 {offsets = [0, 48], sizes = [8, 8], strides = [1, 1]} : vector<8x64xf32> to vector<8x8xf32>
    %59 = vector.extract_strided_slice %51 {offsets = [0, 56], sizes = [8, 8], strides = [1, 1]} : vector<8x64xf32> to vector<8x8xf32>
    %60 = vector.shape_cast %52 : vector<8x8xf32> to vector<1x8x8xf32>
    %61 = vector.shape_cast %53 : vector<8x8xf32> to vector<1x8x8xf32>
    %62 = vector.shape_cast %54 : vector<8x8xf32> to vector<1x8x8xf32>
    %63 = vector.shape_cast %55 : vector<8x8xf32> to vector<1x8x8xf32>
    %64 = vector.shape_cast %56 : vector<8x8xf32> to vector<1x8x8xf32>
    %65 = vector.shape_cast %57 : vector<8x8xf32> to vector<1x8x8xf32>
    %66 = vector.shape_cast %58 : vector<8x8xf32> to vector<1x8x8xf32>
    %67 = vector.shape_cast %59 : vector<8x8xf32> to vector<1x8x8xf32>
    %68 = tpu.concatenate %60, %61, %62, %63, %64, %65, %66, %67 in 0 : vector<1x8x8xf32>, vector<1x8x8xf32>, vector<1x8x8xf32>, vector<1x8x8xf32>, vector<1x8x8xf32>, vector<1x8x8xf32>, vector<1x8x8xf32>, vector<1x8x8xf32> -> vector<8x8x8xf32>
    %69 = vector.extract_strided_slice %32 {offsets = [0, 128], sizes = [8, 64], strides = [1, 1]} : vector<8x192xf32> to vector<8x64xf32>
    %70 = vector.extract_strided_slice %69 {offsets = [0, 0], sizes = [8, 8], strides = [1, 1]} : vector<8x64xf32> to vector<8x8xf32>
    %71 = vector.extract_strided_slice %69 {offsets = [0, 8], sizes = [8, 8], strides = [1, 1]} : vector<8x64xf32> to vector<8x8xf32>
    %72 = vector.extract_strided_slice %69 {offsets = [0, 16], sizes = [8, 8], strides = [1, 1]} : vector<8x64xf32> to vector<8x8xf32>
    %73 = vector.extract_strided_slice %69 {offsets = [0, 24], sizes = [8, 8], strides = [1, 1]} : vector<8x64xf32> to vector<8x8xf32>
    %74 = vector.extract_strided_slice %69 {offsets = [0, 32], sizes = [8, 8], strides = [1, 1]} : vector<8x64xf32> to vector<8x8xf32>
    %75 = vector.extract_strided_slice %69 {offsets = [0, 40], sizes = [8, 8], strides = [1, 1]} : vector<8x64xf32> to vector<8x8xf32>
    %76 = vector.extract_strided_slice %69 {offsets = [0, 48], sizes = [8, 8], strides = [1, 1]} : vector<8x64xf32> to vector<8x8xf32>
    %77 = vector.extract_strided_slice %69 {offsets = [0, 56], sizes = [8, 8], strides = [1, 1]} : vector<8x64xf32> to vector<8x8xf32>
    %78 = vector.shape_cast %70 : vector<8x8xf32> to vector<1x8x8xf32>
    %79 = vector.shape_cast %71 : vector<8x8xf32> to vector<1x8x8xf32>
    %80 = vector.shape_cast %72 : vector<8x8xf32> to vector<1x8x8xf32>
    %81 = vector.shape_cast %73 : vector<8x8xf32> to vector<1x8x8xf32>
    %82 = vector.shape_cast %74 : vector<8x8xf32> to vector<1x8x8xf32>
    %83 = vector.shape_cast %75 : vector<8x8xf32> to vector<1x8x8xf32>
    %84 = vector.shape_cast %76 : vector<8x8xf32> to vector<1x8x8xf32>
    %85 = vector.shape_cast %77 : vector<8x8xf32> to vector<1x8x8xf32>
    %86 = tpu.concatenate %78, %79, %80, %81, %82, %83, %84, %85 in 0 : vector<1x8x8xf32>, vector<1x8x8xf32>, vector<1x8x8xf32>, vector<1x8x8xf32>, vector<1x8x8xf32>, vector<1x8x8xf32>, vector<1x8x8xf32>, vector<1x8x8xf32> -> vector<8x8x8xf32>
    "tpu.trace_start"() <{level = 10 : i32, message = "hsd,htd->hst"}> : () -> ()
    %cst_58 = arith.constant dense<0.000000e+00> : vector<8x8x8xf32>
    %87 = tpu.matmul %50, %68, %cst_58 {dimension_numbers = #tpu.dot_dimension_numbers<[2], [2], [1], [1], [0, 0, 0, 1, 1, 1], [0], [0]>} : vector<8x8x8xf32>, vector<8x8x8xf32>, vector<8x8x8xf32> -> vector<8x8x8xf32>
    "tpu.trace_stop"() : () -> ()
    %cst_59 = arith.constant dense<0xFF800000> : vector<8x8xf32>
    %88 = vector.multi_reduction <maximumf>, %87, %cst_59 [2] : vector<8x8x8xf32> to vector<8x8xf32>
    %89 = vector.shape_cast %88 : vector<8x8xf32> to vector<8x8x1xf32>
    %90 = vector.broadcast %89 : vector<8x8x1xf32> to vector<8x8x8xf32>
    %91 = arith.subf %87, %90 : vector<8x8x8xf32>
    %92 = math.exp %91 : vector<8x8x8xf32>
    %cst_60 = arith.constant dense<0.000000e+00> : vector<8x8xf32>
    %93 = vector.multi_reduction <add>, %92, %cst_60 [2] : vector<8x8x8xf32> to vector<8x8xf32>
    %94 = vector.shape_cast %93 : vector<8x8xf32> to vector<8x8x1xf32>
    "tpu.trace_start"() <{level = 10 : i32, message = "hst,htd->hsd"}> : () -> ()
    %cst_61 = arith.constant dense<0.000000e+00> : vector<8x8x8xf32>
    %95 = tpu.matmul %92, %86, %cst_61 {dimension_numbers = #tpu.dot_dimension_numbers<[2], [1], [1], [2], [0, 0, 0, 1, 1, 2], [0], [0]>} : vector<8x8x8xf32>, vector<8x8x8xf32>, vector<8x8x8xf32> -> vector<8x8x8xf32>
    "tpu.trace_stop"() : () -> ()
    %96 = tpu.reciprocal %94 {approx = true} : vector<8x8x1xf32> -> vector<8x8x1xf32>
    %97 = vector.broadcast %96 : vector<8x8x1xf32> to vector<8x8x8xf32>
    %98 = arith.mulf %95, %97 : vector<8x8x8xf32>
    %99 = vector.extract_strided_slice %98 {offsets = [0, 0, 0], sizes = [1, 8, 8], strides = [1, 1, 1]} : vector<8x8x8xf32> to vector<1x8x8xf32>
    %100 = vector.shape_cast %99 : vector<1x8x8xf32> to vector<8x8xf32>
    %101 = vector.extract_strided_slice %98 {offsets = [1, 0, 0], sizes = [1, 8, 8], strides = [1, 1, 1]} : vector<8x8x8xf32> to vector<1x8x8xf32>
    %102 = vector.shape_cast %101 : vector<1x8x8xf32> to vector<8x8xf32>
    %103 = vector.extract_strided_slice %98 {offsets = [2, 0, 0], sizes = [1, 8, 8], strides = [1, 1, 1]} : vector<8x8x8xf32> to vector<1x8x8xf32>
    %104 = vector.shape_cast %103 : vector<1x8x8xf32> to vector<8x8xf32>
    %105 = vector.extract_strided_slice %98 {offsets = [3, 0, 0], sizes = [1, 8, 8], strides = [1, 1, 1]} : vector<8x8x8xf32> to vector<1x8x8xf32>
    %106 = vector.shape_cast %105 : vector<1x8x8xf32> to vector<8x8xf32>
    %107 = vector.extract_strided_slice %98 {offsets = [4, 0, 0], sizes = [1, 8, 8], strides = [1, 1, 1]} : vector<8x8x8xf32> to vector<1x8x8xf32>
    %108 = vector.shape_cast %107 : vector<1x8x8xf32> to vector<8x8xf32>
    %109 = vector.extract_strided_slice %98 {offsets = [5, 0, 0], sizes = [1, 8, 8], strides = [1, 1, 1]} : vector<8x8x8xf32> to vector<1x8x8xf32>
    %110 = vector.shape_cast %109 : vector<1x8x8xf32> to vector<8x8xf32>
    %111 = vector.extract_strided_slice %98 {offsets = [6, 0, 0], sizes = [1, 8, 8], strides = [1, 1, 1]} : vector<8x8x8xf32> to vector<1x8x8xf32>
    %112 = vector.shape_cast %111 : vector<1x8x8xf32> to vector<8x8xf32>
    %113 = vector.extract_strided_slice %98 {offsets = [7, 0, 0], sizes = [1, 8, 8], strides = [1, 1, 1]} : vector<8x8x8xf32> to vector<1x8x8xf32>
    %114 = vector.shape_cast %113 : vector<1x8x8xf32> to vector<8x8xf32>
    %115 = tpu.concatenate %100, %102, %104, %106, %108, %110, %112, %114 in 1 : vector<8x8xf32>, vector<8x8xf32>, vector<8x8xf32>, vector<8x8xf32>, vector<8x8xf32>, vector<8x8xf32>, vector<8x8xf32>, vector<8x8xf32> -> vector<8x64xf32>
    %cst_62 = arith.constant dense<0.000000e+00> : vector<8x64xf32>
    %116 = tpu.matmul %115, %2, %cst_62 {dimension_numbers = #tpu.dot_dimension_numbers<[1], [0], [0], [1], [0, 0, 1, 1], [], []>} : vector<8x64xf32>, vector<64x64xf32>, vector<8x64xf32> -> vector<8x64xf32>
    %117 = vector.broadcast %3 : vector<1x64xf32> to vector<8x64xf32>
    %118 = arith.addf %116, %117 : vector<8x64xf32>
    %119 = arith.addf %29, %118 : vector<8x64xf32>
    %cst_63 = arith.constant dense<0.000000e+00> : vector<8xf32>
    %120 = vector.multi_reduction <add>, %119, %cst_63 [1] : vector<8x64xf32> to vector<8xf32>
    %121 = vector.shape_cast %120 : vector<8xf32> to vector<8x1xf32>
    %cst_64 = arith.constant 6.400000e+01 : f32
    %122 = vector.broadcast %cst_64 : f32 to vector<8x1xf32>
    %123 = arith.divf %121, %122 : vector<8x1xf32>
    %124 = vector.broadcast %123 : vector<8x1xf32> to vector<8x64xf32>
    %125 = arith.subf %119, %124 : vector<8x64xf32>
    %126 = arith.mulf %125, %125 : vector<8x64xf32>
    %cst_65 = arith.constant dense<0.000000e+00> : vector<8xf32>
    %127 = vector.multi_reduction <add>, %126, %cst_65 [1] : vector<8x64xf32> to vector<8xf32>
    %128 = vector.shape_cast %127 : vector<8xf32> to vector<8x1xf32>
    %cst_66 = arith.constant 6.400000e+01 : f32
    %129 = vector.broadcast %cst_66 : f32 to vector<8x1xf32>
    %130 = arith.divf %128, %129 : vector<8x1xf32>
    %131 = vector.broadcast %123 : vector<8x1xf32> to vector<8x64xf32>
    %132 = arith.subf %119, %131 : vector<8x64xf32>
    %cst_67 = arith.constant 9.99999974E-6 : f32
    %133 = vector.broadcast %cst_67 : f32 to vector<8x1xf32>
    %134 = arith.addf %130, %133 : vector<8x1xf32>
    %135 = math.rsqrt %134 : vector<8x1xf32>
    %136 = vector.broadcast %135 : vector<8x1xf32> to vector<8x64xf32>
    %137 = arith.mulf %132, %136 : vector<8x64xf32>
    %138 = vector.broadcast %8 : vector<1x64xf32> to vector<8x64xf32>
    %139 = arith.mulf %137, %138 : vector<8x64xf32>
    %140 = vector.broadcast %9 : vector<1x64xf32> to vector<8x64xf32>
    %141 = arith.addf %139, %140 : vector<8x64xf32>
    %cst_68 = arith.constant dense<0.000000e+00> : vector<8x128xf32>
    %142 = tpu.matmul %141, %4, %cst_68 {dimension_numbers = #tpu.dot_dimension_numbers<[1], [0], [0], [1], [0, 0, 1, 1], [], []>} : vector<8x64xf32>, vector<64x128xf32>, vector<8x128xf32> -> vector<8x128xf32>
    %143 = vector.broadcast %5 : vector<1x128xf32> to vector<8x128xf32>
    %144 = arith.addf %142, %143 : vector<8x128xf32>
    %cst_69 = arith.constant 0.000000e+00 : f32
    %145 = vector.broadcast %cst_69 : f32 to vector<8x128xf32>
    %146 = arith.maximumf %144, %145 : vector<8x128xf32>
    %cst_70 = arith.constant dense<0.000000e+00> : vector<8x64xf32>
    %147 = tpu.matmul %146, %6, %cst_70 {dimension_numbers = #tpu.dot_dimension_numbers<[1], [0], [0], [1], [0, 0, 1, 1], [], []>} : vector<8x128xf32>, vector<128x64xf32>, vector<8x64xf32> -> vector<8x64xf32>
    %148 = vector.broadcast %7 : vector<1x64xf32> to vector<8x64xf32>
    %149 = arith.addf %147, %148 : vector<8x64xf32>
    %150 = arith.addf %141, %149 : vector<8x64xf32>
    %cst_71 = arith.constant dense<0.000000e+00> : vector<8xf32>
    %151 = vector.multi_reduction <add>, %150, %cst_71 [1] : vector<8x64xf32> to vector<8xf32>
    %152 = vector.shape_cast %151 : vector<8xf32> to vector<8x1xf32>
    %cst_72 = arith.constant 6.400000e+01 : f32
    %153 = vector.broadcast %cst_72 : f32 to vector<8x1xf32>
    %154 = arith.divf %152, %153 : vector<8x1xf32>
    %155 = vector.broadcast %154 : vector<8x1xf32> to vector<8x64xf32>
    %156 = arith.subf %150, %155 : vector<8x64xf32>
    %157 = arith.mulf %156, %156 : vector<8x64xf32>
    %cst_73 = arith.constant dense<0.000000e+00> : vector<8xf32>
    %158 = vector.multi_reduction <add>, %157, %cst_73 [1] : vector<8x64xf32> to vector<8xf32>
    %159 = vector.shape_cast %158 : vector<8xf32> to vector<8x1xf32>
    %cst_74 = arith.constant 6.400000e+01 : f32
    %160 = vector.broadcast %cst_74 : f32 to vector<8x1xf32>
    %161 = arith.divf %159, %160 : vector<8x1xf32>
    %162 = vector.broadcast %154 : vector<8x1xf32> to vector<8x64xf32>
    %163 = arith.subf %150, %162 : vector<8x64xf32>
    %cst_75 = arith.constant 9.99999974E-6 : f32
    %164 = vector.broadcast %cst_75 : f32 to vector<8x1xf32>
    %165 = arith.addf %161, %164 : vector<8x1xf32>
    %166 = math.rsqrt %165 : vector<8x1xf32>
    %167 = vector.broadcast %166 : vector<8x1xf32> to vector<8x64xf32>
    %168 = arith.mulf %163, %167 : vector<8x64xf32>
    %169 = vector.broadcast %10 : vector<1x64xf32> to vector<8x64xf32>
    %170 = arith.mulf %168, %169 : vector<8x64xf32>
    %171 = vector.broadcast %11 : vector<1x64xf32> to vector<8x64xf32>
    %172 = arith.addf %170, %171 : vector<8x64xf32>
    %cst_76 = arith.constant dense<0.000000e+00> : vector<8x192xf32>
    %173 = tpu.matmul %172, %12, %cst_76 {dimension_numbers = #tpu.dot_dimension_numbers<[1], [0], [0], [1], [0, 0, 1, 1], [], []>} : vector<8x64xf32>, vector<64x192xf32>, vector<8x192xf32> -> vector<8x192xf32>
    %174 = vector.broadcast %13 : vector<1x192xf32> to vector<8x192xf32>
    %175 = arith.addf %173, %174 : vector<8x192xf32>
    %176 = vector.extract_strided_slice %175 {offsets = [0, 0], sizes = [8, 64], strides = [1, 1]} : vector<8x192xf32> to vector<8x64xf32>
    %177 = vector.extract_strided_slice %176 {offsets = [0, 0], sizes = [8, 8], strides = [1, 1]} : vector<8x64xf32> to vector<8x8xf32>
    %178 = vector.extract_strided_slice %176 {offsets = [0, 8], sizes = [8, 8], strides = [1, 1]} : vector<8x64xf32> to vector<8x8xf32>
    %179 = vector.extract_strided_slice %176 {offsets = [0, 16], sizes = [8, 8], strides = [1, 1]} : vector<8x64xf32> to vector<8x8xf32>
    %180 = vector.extract_strided_slice %176 {offsets = [0, 24], sizes = [8, 8], strides = [1, 1]} : vector<8x64xf32> to vector<8x8xf32>
    %181 = vector.extract_strided_slice %176 {offsets = [0, 32], sizes = [8, 8], strides = [1, 1]} : vector<8x64xf32> to vector<8x8xf32>
    %182 = vector.extract_strided_slice %176 {offsets = [0, 40], sizes = [8, 8], strides = [1, 1]} : vector<8x64xf32> to vector<8x8xf32>
    %183 = vector.extract_strided_slice %176 {offsets = [0, 48], sizes = [8, 8], strides = [1, 1]} : vector<8x64xf32> to vector<8x8xf32>
    %184 = vector.extract_strided_slice %176 {offsets = [0, 56], sizes = [8, 8], strides = [1, 1]} : vector<8x64xf32> to vector<8x8xf32>
    %185 = vector.shape_cast %177 : vector<8x8xf32> to vector<1x8x8xf32>
    %186 = vector.shape_cast %178 : vector<8x8xf32> to vector<1x8x8xf32>
    %187 = vector.shape_cast %179 : vector<8x8xf32> to vector<1x8x8xf32>
    %188 = vector.shape_cast %180 : vector<8x8xf32> to vector<1x8x8xf32>
    %189 = vector.shape_cast %181 : vector<8x8xf32> to vector<1x8x8xf32>
    %190 = vector.shape_cast %182 : vector<8x8xf32> to vector<1x8x8xf32>
    %191 = vector.shape_cast %183 : vector<8x8xf32> to vector<1x8x8xf32>
    %192 = vector.shape_cast %184 : vector<8x8xf32> to vector<1x8x8xf32>
    %193 = tpu.concatenate %185, %186, %187, %188, %189, %190, %191, %192 in 0 : vector<1x8x8xf32>, vector<1x8x8xf32>, vector<1x8x8xf32>, vector<1x8x8xf32>, vector<1x8x8xf32>, vector<1x8x8xf32>, vector<1x8x8xf32>, vector<1x8x8xf32> -> vector<8x8x8xf32>
    %194 = vector.extract_strided_slice %175 {offsets = [0, 64], sizes = [8, 64], strides = [1, 1]} : vector<8x192xf32> to vector<8x64xf32>
    %195 = vector.extract_strided_slice %194 {offsets = [0, 0], sizes = [8, 8], strides = [1, 1]} : vector<8x64xf32> to vector<8x8xf32>
    %196 = vector.extract_strided_slice %194 {offsets = [0, 8], sizes = [8, 8], strides = [1, 1]} : vector<8x64xf32> to vector<8x8xf32>
    %197 = vector.extract_strided_slice %194 {offsets = [0, 16], sizes = [8, 8], strides = [1, 1]} : vector<8x64xf32> to vector<8x8xf32>
    %198 = vector.extract_strided_slice %194 {offsets = [0, 24], sizes = [8, 8], strides = [1, 1]} : vector<8x64xf32> to vector<8x8xf32>
    %199 = vector.extract_strided_slice %194 {offsets = [0, 32], sizes = [8, 8], strides = [1, 1]} : vector<8x64xf32> to vector<8x8xf32>
    %200 = vector.extract_strided_slice %194 {offsets = [0, 40], sizes = [8, 8], strides = [1, 1]} : vector<8x64xf32> to vector<8x8xf32>
    %201 = vector.extract_strided_slice %194 {offsets = [0, 48], sizes = [8, 8], strides = [1, 1]} : vector<8x64xf32> to vector<8x8xf32>
    %202 = vector.extract_strided_slice %194 {offsets = [0, 56], sizes = [8, 8], strides = [1, 1]} : vector<8x64xf32> to vector<8x8xf32>
    %203 = vector.shape_cast %195 : vector<8x8xf32> to vector<1x8x8xf32>
    %204 = vector.shape_cast %196 : vector<8x8xf32> to vector<1x8x8xf32>
    %205 = vector.shape_cast %197 : vector<8x8xf32> to vector<1x8x8xf32>
    %206 = vector.shape_cast %198 : vector<8x8xf32> to vector<1x8x8xf32>
    %207 = vector.shape_cast %199 : vector<8x8xf32> to vector<1x8x8xf32>
    %208 = vector.shape_cast %200 : vector<8x8xf32> to vector<1x8x8xf32>
    %209 = vector.shape_cast %201 : vector<8x8xf32> to vector<1x8x8xf32>
    %210 = vector.shape_cast %202 : vector<8x8xf32> to vector<1x8x8xf32>
    %211 = tpu.concatenate %203, %204, %205, %206, %207, %208, %209, %210 in 0 : vector<1x8x8xf32>, vector<1x8x8xf32>, vector<1x8x8xf32>, vector<1x8x8xf32>, vector<1x8x8xf32>, vector<1x8x8xf32>, vector<1x8x8xf32>, vector<1x8x8xf32> -> vector<8x8x8xf32>
    %212 = vector.extract_strided_slice %175 {offsets = [0, 128], sizes = [8, 64], strides = [1, 1]} : vector<8x192xf32> to vector<8x64xf32>
    %213 = vector.extract_strided_slice %212 {offsets = [0, 0], sizes = [8, 8], strides = [1, 1]} : vector<8x64xf32> to vector<8x8xf32>
    %214 = vector.extract_strided_slice %212 {offsets = [0, 8], sizes = [8, 8], strides = [1, 1]} : vector<8x64xf32> to vector<8x8xf32>
    %215 = vector.extract_strided_slice %212 {offsets = [0, 16], sizes = [8, 8], strides = [1, 1]} : vector<8x64xf32> to vector<8x8xf32>
    %216 = vector.extract_strided_slice %212 {offsets = [0, 24], sizes = [8, 8], strides = [1, 1]} : vector<8x64xf32> to vector<8x8xf32>
    %217 = vector.extract_strided_slice %212 {offsets = [0, 32], sizes = [8, 8], strides = [1, 1]} : vector<8x64xf32> to vector<8x8xf32>
    %218 = vector.extract_strided_slice %212 {offsets = [0, 40], sizes = [8, 8], strides = [1, 1]} : vector<8x64xf32> to vector<8x8xf32>
    %219 = vector.extract_strided_slice %212 {offsets = [0, 48], sizes = [8, 8], strides = [1, 1]} : vector<8x64xf32> to vector<8x8xf32>
    %220 = vector.extract_strided_slice %212 {offsets = [0, 56], sizes = [8, 8], strides = [1, 1]} : vector<8x64xf32> to vector<8x8xf32>
    %221 = vector.shape_cast %213 : vector<8x8xf32> to vector<1x8x8xf32>
    %222 = vector.shape_cast %214 : vector<8x8xf32> to vector<1x8x8xf32>
    %223 = vector.shape_cast %215 : vector<8x8xf32> to vector<1x8x8xf32>
    %224 = vector.shape_cast %216 : vector<8x8xf32> to vector<1x8x8xf32>
    %225 = vector.shape_cast %217 : vector<8x8xf32> to vector<1x8x8xf32>
    %226 = vector.shape_cast %218 : vector<8x8xf32> to vector<1x8x8xf32>
    %227 = vector.shape_cast %219 : vector<8x8xf32> to vector<1x8x8xf32>
    %228 = vector.shape_cast %220 : vector<8x8xf32> to vector<1x8x8xf32>
    %229 = tpu.concatenate %221, %222, %223, %224, %225, %226, %227, %228 in 0 : vector<1x8x8xf32>, vector<1x8x8xf32>, vector<1x8x8xf32>, vector<1x8x8xf32>, vector<1x8x8xf32>, vector<1x8x8xf32>, vector<1x8x8xf32>, vector<1x8x8xf32> -> vector<8x8x8xf32>
    "tpu.trace_start"() <{level = 10 : i32, message = "hsd,htd->hst"}> : () -> ()
    %cst_77 = arith.constant dense<0.000000e+00> : vector<8x8x8xf32>
    %230 = tpu.matmul %193, %211, %cst_77 {dimension_numbers = #tpu.dot_dimension_numbers<[2], [2], [1], [1], [0, 0, 0, 1, 1, 1], [0], [0]>} : vector<8x8x8xf32>, vector<8x8x8xf32>, vector<8x8x8xf32> -> vector<8x8x8xf32>
    "tpu.trace_stop"() : () -> ()
    %cst_78 = arith.constant dense<0xFF800000> : vector<8x8xf32>
    %231 = vector.multi_reduction <maximumf>, %230, %cst_78 [2] : vector<8x8x8xf32> to vector<8x8xf32>
    %232 = vector.shape_cast %231 : vector<8x8xf32> to vector<8x8x1xf32>
    %233 = vector.broadcast %232 : vector<8x8x1xf32> to vector<8x8x8xf32>
    %234 = arith.subf %230, %233 : vector<8x8x8xf32>
    %235 = math.exp %234 : vector<8x8x8xf32>
    %cst_79 = arith.constant dense<0.000000e+00> : vector<8x8xf32>
    %236 = vector.multi_reduction <add>, %235, %cst_79 [2] : vector<8x8x8xf32> to vector<8x8xf32>
    %237 = vector.shape_cast %236 : vector<8x8xf32> to vector<8x8x1xf32>
    "tpu.trace_start"() <{level = 10 : i32, message = "hst,htd->hsd"}> : () -> ()
    %cst_80 = arith.constant dense<0.000000e+00> : vector<8x8x8xf32>
    %238 = tpu.matmul %235, %229, %cst_80 {dimension_numbers = #tpu.dot_dimension_numbers<[2], [1], [1], [2], [0, 0, 0, 1, 1, 2], [0], [0]>} : vector<8x8x8xf32>, vector<8x8x8xf32>, vector<8x8x8xf32> -> vector<8x8x8xf32>
    "tpu.trace_stop"() : () -> ()
    %239 = tpu.reciprocal %237 {approx = true} : vector<8x8x1xf32> -> vector<8x8x1xf32>
    %240 = vector.broadcast %239 : vector<8x8x1xf32> to vector<8x8x8xf32>
    %241 = arith.mulf %238, %240 : vector<8x8x8xf32>
    %242 = vector.extract_strided_slice %241 {offsets = [0, 0, 0], sizes = [1, 8, 8], strides = [1, 1, 1]} : vector<8x8x8xf32> to vector<1x8x8xf32>
    %243 = vector.shape_cast %242 : vector<1x8x8xf32> to vector<8x8xf32>
    %244 = vector.extract_strided_slice %241 {offsets = [1, 0, 0], sizes = [1, 8, 8], strides = [1, 1, 1]} : vector<8x8x8xf32> to vector<1x8x8xf32>
    %245 = vector.shape_cast %244 : vector<1x8x8xf32> to vector<8x8xf32>
    %246 = vector.extract_strided_slice %241 {offsets = [2, 0, 0], sizes = [1, 8, 8], strides = [1, 1, 1]} : vector<8x8x8xf32> to vector<1x8x8xf32>
    %247 = vector.shape_cast %246 : vector<1x8x8xf32> to vector<8x8xf32>
    %248 = vector.extract_strided_slice %241 {offsets = [3, 0, 0], sizes = [1, 8, 8], strides = [1, 1, 1]} : vector<8x8x8xf32> to vector<1x8x8xf32>
    %249 = vector.shape_cast %248 : vector<1x8x8xf32> to vector<8x8xf32>
    %250 = vector.extract_strided_slice %241 {offsets = [4, 0, 0], sizes = [1, 8, 8], strides = [1, 1, 1]} : vector<8x8x8xf32> to vector<1x8x8xf32>
    %251 = vector.shape_cast %250 : vector<1x8x8xf32> to vector<8x8xf32>
    %252 = vector.extract_strided_slice %241 {offsets = [5, 0, 0], sizes = [1, 8, 8], strides = [1, 1, 1]} : vector<8x8x8xf32> to vector<1x8x8xf32>
    %253 = vector.shape_cast %252 : vector<1x8x8xf32> to vector<8x8xf32>
    %254 = vector.extract_strided_slice %241 {offsets = [6, 0, 0], sizes = [1, 8, 8], strides = [1, 1, 1]} : vector<8x8x8xf32> to vector<1x8x8xf32>
    %255 = vector.shape_cast %254 : vector<1x8x8xf32> to vector<8x8xf32>
    %256 = vector.extract_strided_slice %241 {offsets = [7, 0, 0], sizes = [1, 8, 8], strides = [1, 1, 1]} : vector<8x8x8xf32> to vector<1x8x8xf32>
    %257 = vector.shape_cast %256 : vector<1x8x8xf32> to vector<8x8xf32>
    %258 = tpu.concatenate %243, %245, %247, %249, %251, %253, %255, %257 in 1 : vector<8x8xf32>, vector<8x8xf32>, vector<8x8xf32>, vector<8x8xf32>, vector<8x8xf32>, vector<8x8xf32>, vector<8x8xf32>, vector<8x8xf32> -> vector<8x64xf32>
    %cst_81 = arith.constant dense<0.000000e+00> : vector<8x64xf32>
    %259 = tpu.matmul %258, %14, %cst_81 {dimension_numbers = #tpu.dot_dimension_numbers<[1], [0], [0], [1], [0, 0, 1, 1], [], []>} : vector<8x64xf32>, vector<64x64xf32>, vector<8x64xf32> -> vector<8x64xf32>
    %260 = vector.broadcast %15 : vector<1x64xf32> to vector<8x64xf32>
    %261 = arith.addf %259, %260 : vector<8x64xf32>
    %262 = arith.addf %172, %261 : vector<8x64xf32>
    %cst_82 = arith.constant dense<0.000000e+00> : vector<8xf32>
    %263 = vector.multi_reduction <add>, %262, %cst_82 [1] : vector<8x64xf32> to vector<8xf32>
    %264 = vector.shape_cast %263 : vector<8xf32> to vector<8x1xf32>
    %cst_83 = arith.constant 6.400000e+01 : f32
    %265 = vector.broadcast %cst_83 : f32 to vector<8x1xf32>
    %266 = arith.divf %264, %265 : vector<8x1xf32>
    %267 = vector.broadcast %266 : vector<8x1xf32> to vector<8x64xf32>
    %268 = arith.subf %262, %267 : vector<8x64xf32>
    %269 = arith.mulf %268, %268 : vector<8x64xf32>
    %cst_84 = arith.constant dense<0.000000e+00> : vector<8xf32>
    %270 = vector.multi_reduction <add>, %269, %cst_84 [1] : vector<8x64xf32> to vector<8xf32>
    %271 = vector.shape_cast %270 : vector<8xf32> to vector<8x1xf32>
    %cst_85 = arith.constant 6.400000e+01 : f32
    %272 = vector.broadcast %cst_85 : f32 to vector<8x1xf32>
    %273 = arith.divf %271, %272 : vector<8x1xf32>
    %274 = vector.broadcast %266 : vector<8x1xf32> to vector<8x64xf32>
    %275 = arith.subf %262, %274 : vector<8x64xf32>
    %cst_86 = arith.constant 9.99999974E-6 : f32
    %276 = vector.broadcast %cst_86 : f32 to vector<8x1xf32>
    %277 = arith.addf %273, %276 : vector<8x1xf32>
    %278 = math.rsqrt %277 : vector<8x1xf32>
    %279 = vector.broadcast %278 : vector<8x1xf32> to vector<8x64xf32>
    %280 = arith.mulf %275, %279 : vector<8x64xf32>
    %281 = vector.broadcast %20 : vector<1x64xf32> to vector<8x64xf32>
    %282 = arith.mulf %280, %281 : vector<8x64xf32>
    %283 = vector.broadcast %21 : vector<1x64xf32> to vector<8x64xf32>
    %284 = arith.addf %282, %283 : vector<8x64xf32>
    %cst_87 = arith.constant dense<0.000000e+00> : vector<8x128xf32>
    %285 = tpu.matmul %284, %16, %cst_87 {dimension_numbers = #tpu.dot_dimension_numbers<[1], [0], [0], [1], [0, 0, 1, 1], [], []>} : vector<8x64xf32>, vector<64x128xf32>, vector<8x128xf32> -> vector<8x128xf32>
    %286 = vector.broadcast %17 : vector<1x128xf32> to vector<8x128xf32>
    %287 = arith.addf %285, %286 : vector<8x128xf32>
    %cst_88 = arith.constant 0.000000e+00 : f32
    %288 = vector.broadcast %cst_88 : f32 to vector<8x128xf32>
    %289 = arith.maximumf %287, %288 : vector<8x128xf32>
    %cst_89 = arith.constant dense<0.000000e+00> : vector<8x64xf32>
    %290 = tpu.matmul %289, %18, %cst_89 {dimension_numbers = #tpu.dot_dimension_numbers<[1], [0], [0], [1], [0, 0, 1, 1], [], []>} : vector<8x128xf32>, vector<128x64xf32>, vector<8x64xf32> -> vector<8x64xf32>
    %291 = vector.broadcast %19 : vector<1x64xf32> to vector<8x64xf32>
    %292 = arith.addf %290, %291 : vector<8x64xf32>
    %293 = arith.addf %284, %292 : vector<8x64xf32>
    %cst_90 = arith.constant dense<0.000000e+00> : vector<8xf32>
    %294 = vector.multi_reduction <add>, %293, %cst_90 [1] : vector<8x64xf32> to vector<8xf32>
    %295 = vector.shape_cast %294 : vector<8xf32> to vector<8x1xf32>
    %cst_91 = arith.constant 6.400000e+01 : f32
    %296 = vector.broadcast %cst_91 : f32 to vector<8x1xf32>
    %297 = arith.divf %295, %296 : vector<8x1xf32>
    %298 = vector.broadcast %297 : vector<8x1xf32> to vector<8x64xf32>
    %299 = arith.subf %293, %298 : vector<8x64xf32>
    %300 = arith.mulf %299, %299 : vector<8x64xf32>
    %cst_92 = arith.constant dense<0.000000e+00> : vector<8xf32>
    %301 = vector.multi_reduction <add>, %300, %cst_92 [1] : vector<8x64xf32> to vector<8xf32>
    %302 = vector.shape_cast %301 : vector<8xf32> to vector<8x1xf32>
    %cst_93 = arith.constant 6.400000e+01 : f32
    %303 = vector.broadcast %cst_93 : f32 to vector<8x1xf32>
    %304 = arith.divf %302, %303 : vector<8x1xf32>
    %305 = vector.broadcast %297 : vector<8x1xf32> to vector<8x64xf32>
    %306 = arith.subf %293, %305 : vector<8x64xf32>
    %cst_94 = arith.constant 9.99999974E-6 : f32
    %307 = vector.broadcast %cst_94 : f32 to vector<8x1xf32>
    %308 = arith.addf %304, %307 : vector<8x1xf32>
    %309 = math.rsqrt %308 : vector<8x1xf32>
    %310 = vector.broadcast %309 : vector<8x1xf32> to vector<8x64xf32>
    %311 = arith.mulf %306, %310 : vector<8x64xf32>
    %312 = vector.broadcast %22 : vector<1x64xf32> to vector<8x64xf32>
    %313 = arith.mulf %311, %312 : vector<8x64xf32>
    %314 = vector.broadcast %23 : vector<1x64xf32> to vector<8x64xf32>
    %315 = arith.addf %313, %314 : vector<8x64xf32>
    %cst_95 = arith.constant dense<0.000000e+00> : vector<8x64xf32>
    %316 = tpu.matmul %315, %24, %cst_95 {dimension_numbers = #tpu.dot_dimension_numbers<[1], [0], [0], [1], [0, 0, 1, 1], [], []>} : vector<8x64xf32>, vector<64x64xf32>, vector<8x64xf32> -> vector<8x64xf32>
    %317 = vector.broadcast %25 : vector<1x64xf32> to vector<8x64xf32>
    %318 = arith.addf %316, %317 : vector<8x64xf32>
    %cst_96 = arith.constant 5.000000e-01 : f32
    %319 = vector.broadcast %cst_96 : f32 to vector<8x64xf32>
    %320 = arith.mulf %319, %318 : vector<8x64xf32>
    %cst_97 = arith.constant 0.707106769 : f32
    %321 = vector.broadcast %cst_97 : f32 to vector<8x64xf32>
    %322 = arith.mulf %318, %321 : vector<8x64xf32>
    %323 = math.erf %322 : vector<8x64xf32>
    %cst_98 = arith.constant 1.000000e+00 : f32
    %324 = vector.broadcast %cst_98 : f32 to vector<8x64xf32>
    %325 = arith.addf %324, %323 : vector<8x64xf32>
    %326 = arith.mulf %320, %325 : vector<8x64xf32>
    %cst_99 = arith.constant dense<0.000000e+00> : vector<8x64xf32>
    %327 = tpu.matmul %326, %26, %cst_99 {dimension_numbers = #tpu.dot_dimension_numbers<[1], [0], [0], [1], [0, 0, 1, 1], [], []>} : vector<8x64xf32>, vector<64x64xf32>, vector<8x64xf32> -> vector<8x64xf32>
    %328 = vector.broadcast %27 : vector<1x64xf32> to vector<8x64xf32>
    %329 = arith.addf %327, %328 : vector<8x64xf32>
    %c0_100 = arith.constant 0 : index
    %c0_101 = arith.constant 0 : index
    %c0_102 = arith.constant 0 : index
    %330 = vector.load %arg30[%c0_100, %c0_101, %c0_102] : memref<1x8x64xf32, #tpu.memory_space<vmem>>, vector<1x8x64xf32>
    %331 = vector.shape_cast %330 : vector<1x8x64xf32> to vector<8x64xf32>
    %332 = vector.shape_cast %329 : vector<8x64xf32> to vector<1x8x64xf32>
    tpu.vector_store %arg30[%c0_100, %c0_101, %c0_102], %332 {strides = array<i32>} : memref<1x8x64xf32, #tpu.memory_space<vmem>>, vector<1x8x64xf32>,
    return
  }
  func.func @transform_0(%arg0: i32) -> (i32, i32, i32) {
    %c0_i32 = arith.constant 0 : i32
    %c0_i32_0 = arith.constant 0 : i32
    %c0_i32_1 = arith.constant 0 : i32
    return %arg0, %c0_i32, %c0_i32_0 : i32, i32, i32
  }
  func.func @transform_1(%arg0: i32) -> (i32, i32) {
    %c0_i32 = arith.constant 0 : i32
    %c0_i32_0 = arith.constant 0 : i32
    %c0_i32_1 = arith.constant 0 : i32
    return %c0_i32, %c0_i32_0 : i32, i32
  }
  func.func @transform_2(%arg0: i32) -> (i32, i32) {
    %c0_i32 = arith.constant 0 : i32
    %c0_i32_0 = arith.constant 0 : i32
    %c0_i32_1 = arith.constant 0 : i32
    return %c0_i32, %c0_i32_0 : i32, i32
  }
  func.func @transform_3(%arg0: i32) -> (i32, i32) {
    %c0_i32 = arith.constant 0 : i32
    %c0_i32_0 = arith.constant 0 : i32
    %c0_i32_1 = arith.constant 0 : i32
    return %c0_i32, %c0_i32_0 : i32, i32
  }
  func.func @transform_4(%arg0: i32) -> (i32, i32) {
    %c0_i32 = arith.constant 0 : i32
    %c0_i32_0 = arith.constant 0 : i32
    %c0_i32_1 = arith.constant 0 : i32
    return %c0_i32, %c0_i32_0 : i32, i32
  }
  func.func @transform_5(%arg0: i32) -> (i32, i32) {
    %c0_i32 = arith.constant 0 : i32
    %c0_i32_0 = arith.constant 0 : i32
    %c0_i32_1 = arith.constant 0 : i32
    return %c0_i32, %c0_i32_0 : i32, i32
  }
  func.func @transform_6(%arg0: i32) -> (i32, i32) {
    %c0_i32 = arith.constant 0 : i32
    %c0_i32_0 = arith.constant 0 : i32
    %c0_i32_1 = arith.constant 0 : i32
    return %c0_i32, %c0_i32_0 : i32, i32
  }
  func.func @transform_7(%arg0: i32) -> (i32, i32) {
    %c0_i32 = arith.constant 0 : i32
    %c0_i32_0 = arith.constant 0 : i32
    %c0_i32_1 = arith.constant 0 : i32
    return %c0_i32, %c0_i32_0 : i32, i32
  }
  func.func @transform_8(%arg0: i32) -> (i32, i32) {
    %c0_i32 = arith.constant 0 : i32
    %c0_i32_0 = arith.constant 0 : i32
    %c0_i32_1 = arith.constant 0 : i32
    return %c0_i32, %c0_i32_0 : i32, i32
  }
  func.func @transform_9(%arg0: i32) -> (i32, i32) {
    %c0_i32 = arith.constant 0 : i32
    %c0_i32_0 = arith.constant 0 : i32
    %c0_i32_1 = arith.constant 0 : i32
    return %c0_i32, %c0_i32_0 : i32, i32
  }
  func.func @transform_10(%arg0: i32) -> (i32, i32) {
    %c0_i32 = arith.constant 0 : i32
    %c0_i32_0 = arith.constant 0 : i32
    %c0_i32_1 = arith.constant 0 : i32
    return %c0_i32, %c0_i32_0 : i32, i32
  }
  func.func @transform_11(%arg0: i32) -> (i32, i32) {
    %c0_i32 = arith.constant 0 : i32
    %c0_i32_0 = arith.constant 0 : i32
    %c0_i32_1 = arith.constant 0 : i32
    return %c0_i32, %c0_i32_0 : i32, i32
  }
  func.func @transform_12(%arg0: i32) -> (i32, i32) {
    %c0_i32 = arith.constant 0 : i32
    %c0_i32_0 = arith.constant 0 : i32
    %c0_i32_1 = arith.constant 0 : i32
    return %c0_i32, %c0_i32_0 : i32, i32
  }
  func.func @transform_13(%arg0: i32) -> (i32, i32) {
    %c0_i32 = arith.constant 0 : i32
    %c0_i32_0 = arith.constant 0 : i32
    %c0_i32_1 = arith.constant 0 : i32
    return %c0_i32, %c0_i32_0 : i32, i32
  }
  func.func @transform_14(%arg0: i32) -> (i32, i32) {
    %c0_i32 = arith.constant 0 : i32
    %c0_i32_0 = arith.constant 0 : i32
    %c0_i32_1 = arith.constant 0 : i32
    return %c0_i32, %c0_i32_0 : i32, i32
  }
  func.func @transform_15(%arg0: i32) -> (i32, i32) {
    %c0_i32 = arith.constant 0 : i32
    %c0_i32_0 = arith.constant 0 : i32
    %c0_i32_1 = arith.constant 0 : i32
    return %c0_i32, %c0_i32_0 : i32, i32
  }
  func.func @transform_16(%arg0: i32) -> (i32, i32) {
    %c0_i32 = arith.constant 0 : i32
    %c0_i32_0 = arith.constant 0 : i32
    %c0_i32_1 = arith.constant 0 : i32
    return %c0_i32, %c0_i32_0 : i32, i32
  }
  func.func @transform_17(%arg0: i32) -> (i32, i32) {
    %c0_i32 = arith.constant 0 : i32
    %c0_i32_0 = arith.constant 0 : i32
    %c0_i32_1 = arith.constant 0 : i32
    return %c0_i32, %c0_i32_0 : i32, i32
  }
  func.func @transform_18(%arg0: i32) -> (i32, i32) {
    %c0_i32 = arith.constant 0 : i32
    %c0_i32_0 = arith.constant 0 : i32
    %c0_i32_1 = arith.constant 0 : i32
    return %c0_i32, %c0_i32_0 : i32, i32
  }
  func.func @transform_19(%arg0: i32) -> (i32, i32) {
    %c0_i32 = arith.constant 0 : i32
    %c0_i32_0 = arith.constant 0 : i32
    %c0_i32_1 = arith.constant 0 : i32
    return %c0_i32, %c0_i32_0 : i32, i32
  }
  func.func @transform_20(%arg0: i32) -> (i32, i32) {
    %c0_i32 = arith.constant 0 : i32
    %c0_i32_0 = arith.constant 0 : i32
    %c0_i32_1 = arith.constant 0 : i32
    return %c0_i32, %c0_i32_0 : i32, i32
  }
  func.func @transform_21(%arg0: i32) -> (i32, i32) {
    %c0_i32 = arith.constant 0 : i32
    %c0_i32_0 = arith.constant 0 : i32
    %c0_i32_1 = arith.constant 0 : i32
    return %c0_i32, %c0_i32_0 : i32, i32
  }
  func.func @transform_22(%arg0: i32) -> (i32, i32) {
    %c0_i32 = arith.constant 0 : i32
    %c0_i32_0 = arith.constant 0 : i32
    %c0_i32_1 = arith.constant 0 : i32
    return %c0_i32, %c0_i32_0 : i32, i32
  }
  func.func @transform_23(%arg0: i32) -> (i32, i32) {
    %c0_i32 = arith.constant 0 : i32
    %c0_i32_0 = arith.constant 0 : i32
    %c0_i32_1 = arith.constant 0 : i32
    return %c0_i32, %c0_i32_0 : i32, i32
  }
  func.func @transform_24(%arg0: i32) -> (i32, i32) {
    %c0_i32 = arith.constant 0 : i32
    %c0_i32_0 = arith.constant 0 : i32
    %c0_i32_1 = arith.constant 0 : i32
    return %c0_i32, %c0_i32_0 : i32, i32
  }
  func.func @transform_25(%arg0: i32) -> (i32, i32) {
    %c0_i32 = arith.constant 0 : i32
    %c0_i32_0 = arith.constant 0 : i32
    %c0_i32_1 = arith.constant 0 : i32
    return %c0_i32, %c0_i32_0 : i32, i32
  }
  func.func @transform_26(%arg0: i32) -> (i32, i32) {
    %c0_i32 = arith.constant 0 : i32
    %c0_i32_0 = arith.constant 0 : i32
    %c0_i32_1 = arith.constant 0 : i32
    return %c0_i32, %c0_i32_0 : i32, i32
  }
  func.func @transform_27(%arg0: i32) -> (i32, i32) {
    %c0_i32 = arith.constant 0 : i32
    %c0_i32_0 = arith.constant 0 : i32
    %c0_i32_1 = arith.constant 0 : i32
    return %c0_i32, %c0_i32_0 : i32, i32
  }
  func.func @transform_28(%arg0: i32) -> (i32, i32) {
    %c0_i32 = arith.constant 0 : i32
    %c0_i32_0 = arith.constant 0 : i32
    %c0_i32_1 = arith.constant 0 : i32
    return %c0_i32, %c0_i32_0 : i32, i32
  }
  func.func @transform_29(%arg0: i32) -> (i32, i32, i32) {
    %c0_i32 = arith.constant 0 : i32
    %c0_i32_0 = arith.constant 0 : i32
    %c0_i32_1 = arith.constant 0 : i32
    return %arg0, %c0_i32, %c0_i32_0 : i32, i32, i32
  }
}

</mosaic_0001>

<llo_original>
// kernel: tpu_custom_call.1
$region0: #{tpu_custom_call.1}
  #allocation0 [shape = 'u32[]', space=smem, size = 0x4, offset = 0x4, fixed_abs, tag = 'smem constant byte address 0x4 - core index']
  #allocation1 [shape = 'u32[144,128]{1,0:T(1,128)}', space=vmem, size = 0x12000, scoped, tag = 'internal scratch']
  %s0 = inlined_call_operand.smem [shape: u32[30], index: -1, kind: input, shape index: {}]
  %s1 = sld [smem:[%s0]]
  %s2 = scalar_lea.smem %s0, 1
  %s3 = sld [smem:[%s2]]
  %s4 = scalar_lea.smem %s0, 2
  %s5 = sld [smem:[%s4]]
  %s6 = scalar_lea.smem %s0, 3
  %s7 = sld [smem:[%s6]]
  %s8 = scalar_lea.smem %s0, 4
  %s9 = sld [smem:[%s8]]
  %s10 = scalar_lea.smem %s0, 5
  %s11 = sld [smem:[%s10]]
  %s12 = scalar_lea.smem %s0, 6
  %s13 = sld [smem:[%s12]]
  %s14 = scalar_lea.smem %s0, 7
  %s15 = sld [smem:[%s14]]
  %s16 = scalar_lea.smem %s0, 8
  %s17 = sld [smem:[%s16]]
  %s18 = scalar_lea.smem %s0, 9
  %s19 = sld [smem:[%s18]]
  %s20 = scalar_lea.smem %s0, 10
  %s21 = sld [smem:[%s20]]
  %s22 = scalar_lea.smem %s0, 11
  %s23 = sld [smem:[%s22]]
  %s24 = scalar_lea.smem %s0, 12
  %s25 = sld [smem:[%s24]]
  %s26 = scalar_lea.smem %s0, 13
  %s27 = sld [smem:[%s26]]
  %s28 = scalar_lea.smem %s0, 14
  %s29 = sld [smem:[%s28]]
  %s30 = scalar_lea.smem %s0, 15
  %s31 = sld [smem:[%s30]]
  %s32 = scalar_lea.smem %s0, 16
  %s33 = sld [smem:[%s32]]
  %s34 = scalar_lea.smem %s0, 17
  %s35 = sld [smem:[%s34]]
  %s36 = scalar_lea.smem %s0, 18
  %s37 = sld [smem:[%s36]]
  %s38 = scalar_lea.smem %s0, 19
  %s39 = sld [smem:[%s38]]
  %s40 = scalar_lea.smem %s0, 20
  %s41 = sld [smem:[%s40]]
  %s42 = scalar_lea.smem %s0, 21
  %s43 = sld [smem:[%s42]]
  %s44 = scalar_lea.smem %s0, 22
  %s45 = sld [smem:[%s44]]
  %s46 = scalar_lea.smem %s0, 23
  %s47 = sld [smem:[%s46]]
  %s48 = scalar_lea.smem %s0, 24
  %s49 = sld [smem:[%s48]]
  %s50 = scalar_lea.smem %s0, 25
  %s51 = sld [smem:[%s50]]
  %s52 = scalar_lea.smem %s0, 26
  %s53 = sld [smem:[%s52]]
  %s54 = scalar_lea.smem %s0, 27
  %s55 = sld [smem:[%s54]]
  %s56 = scalar_lea.smem %s0, 28
  %s57 = sld [smem:[%s56]]
  %s58 = scalar_lea.smem %s0, 29
  %s59 = sld [smem:[%s58]]
  %s60 = sld [smem:[#allocation0]]
  $region205: #{tpu_custom_call.1} parent=0
    _
  %s62 = ssub.s32 1, %s60
  %s63 = scalar_select 0, %s62, %s60
  $region1: #{tpu_custom_call.1} parent=0
    #allocation2 [shape = 'u8[8192]{0}', space=vmem, size = 0x2000, scoped, tag = 'input window, operand 0']
    #allocation3 [shape = 's32[2]{0}', space=sflag, size = 0x8, scoped, tag = 'scoped memory for tpu_custom_call.1']
    #allocation4 [shape = 's32[2]{0}', space=sflag, size = 0x8, scoped, tag = 'scoped memory for tpu_custom_call.1']
    #allocation5 [shape = 'u8[512]{0}', space=vmem, size = 0x400, scoped, tag = 'input window, operand 4, single buffered']
    #allocation6 [shape = 's32[1]{0}', space=sflag, size = 0x4, scoped, tag = 'scoped memory for tpu_custom_call.1']
    #allocation7 [shape = 'u8[32768]{0}', space=vmem, size = 0x8000, scoped, tag = 'input window, operand 5, single buffered']
    #allocation8 [shape = 'u8[512]{0}', space=vmem, size = 0x400, scoped, tag = 'input window, operand 6, single buffered']
    #allocation9 [shape = 's32[1]{0}', space=sflag, size = 0x4, scoped, tag = 'scoped memory for tpu_custom_call.1']
    #allocation10 [shape = 'u8[512]{0}', space=vmem, size = 0x400, scoped, tag = 'input window, operand 8, single buffered']
    #allocation11 [shape = 'u8[512]{0}', space=vmem, size = 0x400, scoped, tag = 'input window, operand 9, single buffered']
    #allocation12 [shape = 's32[1]{0}', space=sflag, size = 0x4, scoped, tag = 'scoped memory for tpu_custom_call.1']
    #allocation13 [shape = 'u8[512]{0}', space=vmem, size = 0x400, scoped, tag = 'input window, operand 10, single buffered']
    #allocation14 [shape = 'u8[512]{0}', space=vmem, size = 0x400, scoped, tag = 'input window, operand 11, single buffered']
    #allocation15 [shape = 's32[1]{0}', space=sflag, size = 0x4, scoped, tag = 'scoped memory for tpu_custom_call.1']
    #allocation16 [shape = 'u8[512]{0}', space=vmem, size = 0x400, scoped, tag = 'input window, operand 12, single buffered']
    #allocation17 [shape = 'u8[32768]{0}', space=vmem, size = 0x8000, scoped, tag = 'input window, operand 15, single buffered']
    #allocation18 [shape = 's32[1]{0}', space=sflag, size = 0x4, scoped, tag = 'scoped memory for tpu_custom_call.1']
    #allocation19 [shape = 'u8[512]{0}', space=vmem, size = 0x400, scoped, tag = 'input window, operand 16, single buffered']
    #allocation20 [shape = 'u8[32768]{0}', space=vmem, size = 0x8000, scoped, tag = 'input window, operand 17, single buffered']
    #allocation21 [shape = 's32[1]{0}', space=sflag, size = 0x4, scoped, tag = 'scoped memory for tpu_custom_call.1']
    #allocation22 [shape = 'u8[512]{0}', space=vmem, size = 0x400, scoped, tag = 'input window, operand 18, single buffered']
    #allocation23 [shape = 'u8[32768]{0}', space=vmem, size = 0x8000, scoped, tag = 'input window, operand 27, single buffered']
    #allocation24 [shape = 's32[1]{0}', space=sflag, size = 0x4, scoped, tag = 'scoped memory for tpu_custom_call.1']
    #allocation25 [shape = 'u8[8192]{0}', space=vmem, size = 0x2000, scoped, tag = 'output window, operand 0']
    %64 = vsyncpa [#allocation3], 0
    %s65 = scalar_lea.sflag [#allocation3], 1
    %66 = vsyncpa %s65, 0
    %67 = vsyncpa [#allocation6], 0
    %68 = vsyncpa [#allocation9], 0
    %69 = vsyncpa [#allocation12], 0
    %70 = vsyncpa [#allocation15], 0
    %71 = vsyncpa [#allocation18], 0
    %72 = vsyncpa [#allocation21], 0
    %73 = vsyncpa [#allocation24], 0
    %74 = vsyncpa [#allocation4], 0
    %s75 = scalar_lea.sflag [#allocation4], 1
    %76 = vsyncpa %s75, 0
    loop: start=0, step=1, limit=4
    $region2: #{tpu_custom_call.1} parent=1 // loop_pre_header
      _
    $region3: #{tpu_custom_call.1} parent=1 // loop_header
      %s78 = sphi 0, %s82
      %p79 = scmp.ge.s32.totalorder %s78, 4
      %s88 = sphi 0, %s90
      %s91 = sphi 0, %s88
      %s92 = sphi 0, %s91
      %s108 = sphi 0, %s92
      %s112 = sphi 0, %s112
      %s114 = sphi 0, %s112
      %s115 = sphi 0, %s114
      %s129 = sphi 0, %s115
      %s133 = sphi 0, %s133
      %s135 = sphi 0, %s133
      %s136 = sphi 0, %s135
      %s150 = sphi 0, %s136
      %s154 = sphi 0, %s154
      %s156 = sphi 0, %s154
      %s157 = sphi 0, %s156
      %s171 = sphi 0, %s157
      %s175 = sphi 0, %s175
      %s177 = sphi 0, %s175
      %s178 = sphi 0, %s177
      %s192 = sphi 0, %s178
      %s196 = sphi 0, %s196
      %s198 = sphi 0, %s196
      %s199 = sphi 0, %s198
      %s213 = sphi 0, %s199
      %s217 = sphi 0, %s217
      %s219 = sphi 0, %s217
      %s220 = sphi 0, %s219
      %s234 = sphi 0, %s220
      %s238 = sphi 0, %s238
      %s240 = sphi 0, %s238
      %s241 = sphi 0, %s240
      %s255 = sphi 0, %s241
      %s259 = sphi 0, %s259
      %s261 = sphi 0, %s259
      %s262 = sphi 0, %s261
      %s276 = sphi 0, %s262
      %s280 = sphi 0, %s280
      %s282 = sphi 0, %s280
      %s283 = sphi 0, %s282
      %s297 = sphi 0, %s283
      %s301 = sphi 0, %s301
      %s303 = sphi 0, %s301
      %s304 = sphi 0, %s303
      %s318 = sphi 0, %s304
      %s322 = sphi 0, %s322
      %s324 = sphi 0, %s322
      %s325 = sphi 0, %s324
      %s339 = sphi 0, %s325
      %s343 = sphi 0, %s343
      %s345 = sphi 0, %s343
      %s346 = sphi 0, %s345
      %s360 = sphi 0, %s346
      %s364 = sphi 0, %s364
      %s366 = sphi 0, %s364
      %s367 = sphi 0, %s366
      %s381 = sphi 0, %s367
      %s385 = sphi 0, %s385
      %s387 = sphi 0, %s385
      %s388 = sphi 0, %s387
      %s402 = sphi 0, %s388
      %s406 = sphi 0, %s406
      %s408 = sphi 0, %s406
      %s409 = sphi 0, %s408
      %s423 = sphi 0, %s409
      %s427 = sphi 0, %s427
      %s429 = sphi 0, %s427
      %s430 = sphi 0, %s429
      %s444 = sphi 0, %s430
      %s448 = sphi 0, %s448
      %s450 = sphi 0, %s448
      %s451 = sphi 0, %s450
      %s465 = sphi 0, %s451
      %s469 = sphi 0, %s469
      %s471 = sphi 0, %s469
      %s472 = sphi 0, %s471
      %s486 = sphi 0, %s472
      %s490 = sphi 0, %s490
      %s492 = sphi 0, %s490
      %s493 = sphi 0, %s492
      %s507 = sphi 0, %s493
      %s511 = sphi 0, %s511
      %s513 = sphi 0, %s511
      %s514 = sphi 0, %s513
      %s528 = sphi 0, %s514
      %s532 = sphi 0, %s532
      %s534 = sphi 0, %s532
      %s535 = sphi 0, %s534
      %s549 = sphi 0, %s535
      %s553 = sphi 0, %s553
      %s555 = sphi 0, %s553
      %s556 = sphi 0, %s555
      %s570 = sphi 0, %s556
      %s574 = sphi 0, %s574
      %s576 = sphi 0, %s574
      %s577 = sphi 0, %s576
      %s591 = sphi 0, %s577
      %s595 = sphi 0, %s595
      %s597 = sphi 0, %s595
      %s598 = sphi 0, %s597
      %s612 = sphi 0, %s598
      %s616 = sphi 0, %s616
      %s618 = sphi 0, %s616
      %s619 = sphi 0, %s618
      %s633 = sphi 0, %s619
      %s637 = sphi 0, %s637
      %s639 = sphi 0, %s637
      %s640 = sphi 0, %s639
      %s654 = sphi 0, %s640
      %s658 = sphi 0, %s658
      %s660 = sphi 0, %s658
      %s661 = sphi 0, %s660
      %s675 = sphi 0, %s661
      %s679 = sphi 0, %s679
      %s681 = sphi 0, %s679
      %s682 = sphi 0, %s681
      %s696 = sphi 0, %s682
      %s702 = sphi 0, %s704
      %s705 = sphi 0, %s702
      %s706 = sphi 0, %s705
      %s722 = sphi 0, %s706
    $region4: #{tpu_custom_call.1} parent=1 // loop_header_branch
      %81 = sbr.rel (%p79) target = $region8
    $region5: #{tpu_custom_call.1} parent=1 // loop_body
      %s83 = ssub.s32 %s78, 1
      %s84 = ssub.s32 %s78, 2
      %s85 = sadd.s32 %s78, 1
      %s86 = ssub.s32 %s78, %s85
      %p87 = scmp.eq.s32.totalorder %s86, 0
      %s89 = sadd.s32 %s88, 1
      %s90 = scalar_select %p87, %s88, %s89
      %p93 = pneg %p87
      %p94 = scmp.eq.s32.totalorder %s78, 1
      %p95 = por %p93, %p94
      %p96 = scmp.ne.s32.totalorder %s88, %s91
      %p97 = scmp.eq.s32.totalorder %s78, 0
      %p98 = por %p96, %p97
      %p99 = scmp.ne.s32.totalorder %s88, %s91
      %p100 = scmp.eq.s32.totalorder %s83, 1
      %p101 = por %p99, %p100
      %p102 = scmp.ne.s32.totalorder %s91, %s92
      %p103 = scmp.eq.s32.totalorder %s83, 0
      %p104 = por %p102, %p103
      %p105 = scmp.ne.s32.totalorder %s91, %s92
      %p106 = scmp.eq.s32.totalorder %s84, 1
      %p107 = por %p105, %p106
      %p109 = scmp.ne.s32.totalorder %s92, %s108
      %p110 = scmp.eq.s32.totalorder %s84, 0
      %p111 = por %p109, %p110
      %s113 = sadd.s32 %s112, 1
      %p116 = scmp.eq.s32.totalorder %s78, 1
      %p117 = scmp.ne.s32.totalorder %s112, %s114
      %p118 = scmp.eq.s32.totalorder %s78, 0
      %p119 = por %p117, %p118
      %p120 = scmp.ne.s32.totalorder %s112, %s114
      %p121 = scmp.eq.s32.totalorder %s83, 1
      %p122 = por %p120, %p121
      %p123 = scmp.ne.s32.totalorder %s114, %s115
      %p124 = scmp.eq.s32.totalorder %s83, 0
      %p125 = por %p123, %p124
      %p126 = scmp.ne.s32.totalorder %s114, %s115
      %p127 = scmp.eq.s32.totalorder %s84, 1
      %p128 = por %p126, %p127
      %p130 = scmp.ne.s32.totalorder %s115, %s129
      %p131 = scmp.eq.s32.totalorder %s84, 0
      %p132 = por %p130, %p131
      %s134 = sadd.s32 %s133, 1
      %p137 = scmp.eq.s32.totalorder %s78, 1
      %p138 = scmp.ne.s32.totalorder %s133, %s135
      %p139 = scmp.eq.s32.totalorder %s78, 0
      %p140 = por %p138, %p139
      %p141 = scmp.ne.s32.totalorder %s133, %s135
      %p142 = scmp.eq.s32.totalorder %s83, 1
      %p143 = por %p141, %p142
      %p144 = scmp.ne.s32.totalorder %s135, %s136
      %p145 = scmp.eq.s32.totalorder %s83, 0
      %p146 = por %p144, %p145
      %p147 = scmp.ne.s32.totalorder %s135, %s136
      %p148 = scmp.eq.s32.totalorder %s84, 1
      %p149 = por %p147, %p148
      %p151 = scmp.ne.s32.totalorder %s136, %s150
      %p152 = scmp.eq.s32.totalorder %s84, 0
      %p153 = por %p151, %p152
      %s155 = sadd.s32 %s154, 1
      %p158 = scmp.eq.s32.totalorder %s78, 1
      %p159 = scmp.ne.s32.totalorder %s154, %s156
      %p160 = scmp.eq.s32.totalorder %s78, 0
      %p161 = por %p159, %p160
      %p162 = scmp.ne.s32.totalorder %s154, %s156
      %p163 = scmp.eq.s32.totalorder %s83, 1
      %p164 = por %p162, %p163
      %p165 = scmp.ne.s32.totalorder %s156, %s157
      %p166 = scmp.eq.s32.totalorder %s83, 0
      %p167 = por %p165, %p166
      %p168 = scmp.ne.s32.totalorder %s156, %s157
      %p169 = scmp.eq.s32.totalorder %s84, 1
      %p170 = por %p168, %p169
      %p172 = scmp.ne.s32.totalorder %s157, %s171
      %p173 = scmp.eq.s32.totalorder %s84, 0
      %p174 = por %p172, %p173
      %s176 = sadd.s32 %s175, 1
      %p179 = scmp.eq.s32.totalorder %s78, 1
      %p180 = scmp.ne.s32.totalorder %s175, %s177
      %p181 = scmp.eq.s32.totalorder %s78, 0
      %p182 = por %p180, %p181
      %p183 = scmp.ne.s32.totalorder %s175, %s177
      %p184 = scmp.eq.s32.totalorder %s83, 1
      %p185 = por %p183, %p184
      %p186 = scmp.ne.s32.totalorder %s177, %s178
      %p187 = scmp.eq.s32.totalorder %s83, 0
      %p188 = por %p186, %p187
      %p189 = scmp.ne.s32.totalorder %s177, %s178
      %p190 = scmp.eq.s32.totalorder %s84, 1
      %p191 = por %p189, %p190
      %p193 = scmp.ne.s32.totalorder %s178, %s192
      %p194 = scmp.eq.s32.totalorder %s84, 0
      %p195 = por %p193, %p194
      %s197 = sadd.s32 %s196, 1
      %p200 = scmp.eq.s32.totalorder %s78, 1
      %p201 = scmp.ne.s32.totalorder %s196, %s198
      %p202 = scmp.eq.s32.totalorder %s78, 0
      %p203 = por %p201, %p202
      %p204 = scmp.ne.s32.totalorder %s196, %s198
      %p205 = scmp.eq.s32.totalorder %s83, 1
      %p206 = por %p204, %p205
      %p207 = scmp.ne.s32.totalorder %s198, %s199
      %p208 = scmp.eq.s32.totalorder %s83, 0
      %p209 = por %p207, %p208
      %p210 = scmp.ne.s32.totalorder %s198, %s199
      %p211 = scmp.eq.s32.totalorder %s84, 1
      %p212 = por %p210, %p211
      %p214 = scmp.ne.s32.totalorder %s199, %s213
      %p215 = scmp.eq.s32.totalorder %s84, 0
      %p216 = por %p214, %p215
      %s218 = sadd.s32 %s217, 1
      %p221 = scmp.eq.s32.totalorder %s78, 1
      %p222 = scmp.ne.s32.totalorder %s217, %s219
      %p223 = scmp.eq.s32.totalorder %s78, 0
      %p224 = por %p222, %p223
      %p225 = scmp.ne.s32.totalorder %s217, %s219
      %p226 = scmp.eq.s32.totalorder %s83, 1
      %p227 = por %p225, %p226
      %p228 = scmp.ne.s32.totalorder %s219, %s220
      %p229 = scmp.eq.s32.totalorder %s83, 0
      %p230 = por %p228, %p229
      %p231 = scmp.ne.s32.totalorder %s219, %s220
      %p232 = scmp.eq.s32.totalorder %s84, 1
      %p233 = por %p231, %p232
      %p235 = scmp.ne.s32.totalorder %s220, %s234
      %p236 = scmp.eq.s32.totalorder %s84, 0
      %p237 = por %p235, %p236
      %s239 = sadd.s32 %s238, 1
      %p242 = scmp.eq.s32.totalorder %s78, 1
      %p243 = scmp.ne.s32.totalorder %s238, %s240
      %p244 = scmp.eq.s32.totalorder %s78, 0
      %p245 = por %p243, %p244
      %p246 = scmp.ne.s32.totalorder %s238, %s240
      %p247 = scmp.eq.s32.totalorder %s83, 1
      %p248 = por %p246, %p247
      %p249 = scmp.ne.s32.totalorder %s240, %s241
      %p250 = scmp.eq.s32.totalorder %s83, 0
      %p251 = por %p249, %p250
      %p252 = scmp.ne.s32.totalorder %s240, %s241
      %p253 = scmp.eq.s32.totalorder %s84, 1
      %p254 = por %p252, %p253
      %p256 = scmp.ne.s32.totalorder %s241, %s255
      %p257 = scmp.eq.s32.totalorder %s84, 0
      %p258 = por %p256, %p257
      %s260 = sadd.s32 %s259, 1
      %p263 = scmp.eq.s32.totalorder %s78, 1
      %p264 = scmp.ne.s32.totalorder %s259, %s261
      %p265 = scmp.eq.s32.totalorder %s78, 0
      %p266 = por %p264, %p265
      %p267 = scmp.ne.s32.totalorder %s259, %s261
      %p268 = scmp.eq.s32.totalorder %s83, 1
      %p269 = por %p267, %p268
      %p270 = scmp.ne.s32.totalorder %s261, %s262
      %p271 = scmp.eq.s32.totalorder %s83, 0
      %p272 = por %p270, %p271
      %p273 = scmp.ne.s32.totalorder %s261, %s262
      %p274 = scmp.eq.s32.totalorder %s84, 1
      %p275 = por %p273, %p274
      %p277 = scmp.ne.s32.totalorder %s262, %s276
      %p278 = scmp.eq.s32.totalorder %s84, 0
      %p279 = por %p277, %p278
      %s281 = sadd.s32 %s280, 1
      %p284 = scmp.eq.s32.totalorder %s78, 1
      %p285 = scmp.ne.s32.totalorder %s280, %s282
      %p286 = scmp.eq.s32.totalorder %s78, 0
      %p287 = por %p285, %p286
      %p288 = scmp.ne.s32.totalorder %s280, %s282
      %p289 = scmp.eq.s32.totalorder %s83, 1
      %p290 = por %p288, %p289
      %p291 = scmp.ne.s32.totalorder %s282, %s283
      %p292 = scmp.eq.s32.totalorder %s83, 0
      %p293 = por %p291, %p292
      %p294 = scmp.ne.s32.totalorder %s282, %s283
      %p295 = scmp.eq.s32.totalorder %s84, 1
      %p296 = por %p294, %p295
      %p298 = scmp.ne.s32.totalorder %s283, %s297
      %p299 = scmp.eq.s32.totalorder %s84, 0
      %p300 = por %p298, %p299
      %s302 = sadd.s32 %s301, 1
      %p305 = scmp.eq.s32.totalorder %s78, 1
      %p306 = scmp.ne.s32.totalorder %s301, %s303
      %p307 = scmp.eq.s32.totalorder %s78, 0
      %p308 = por %p306, %p307
      %p309 = scmp.ne.s32.totalorder %s301, %s303
      %p310 = scmp.eq.s32.totalorder %s83, 1
      %p311 = por %p309, %p310
      %p312 = scmp.ne.s32.totalorder %s303, %s304
      %p313 = scmp.eq.s32.totalorder %s83, 0
      %p314 = por %p312, %p313
      %p315 = scmp.ne.s32.totalorder %s303, %s304
      %p316 = scmp.eq.s32.totalorder %s84, 1
      %p317 = por %p315, %p316
      %p319 = scmp.ne.s32.totalorder %s304, %s318
      %p320 = scmp.eq.s32.totalorder %s84, 0
      %p321 = por %p319, %p320
      %s323 = sadd.s32 %s322, 1
      %p326 = scmp.eq.s32.totalorder %s78, 1
      %p327 = scmp.ne.s32.totalorder %s322, %s324
      %p328 = scmp.eq.s32.totalorder %s78, 0
      %p329 = por %p327, %p328
      %p330 = scmp.ne.s32.totalorder %s322, %s324
      %p331 = scmp.eq.s32.totalorder %s83, 1
      %p332 = por %p330, %p331
      %p333 = scmp.ne.s32.totalorder %s324, %s325
      %p334 = scmp.eq.s32.totalorder %s83, 0
      %p335 = por %p333, %p334
      %p336 = scmp.ne.s32.totalorder %s324, %s325
      %p337 = scmp.eq.s32.totalorder %s84, 1
      %p338 = por %p336, %p337
      %p340 = scmp.ne.s32.totalorder %s325, %s339
      %p341 = scmp.eq.s32.totalorder %s84, 0
      %p342 = por %p340, %p341
      %s344 = sadd.s32 %s343, 1
      %p347 = scmp.eq.s32.totalorder %s78, 1
      %p348 = scmp.ne.s32.totalorder %s343, %s345
      %p349 = scmp.eq.s32.totalorder %s78, 0
      %p350 = por %p348, %p349
      %p351 = scmp.ne.s32.totalorder %s343, %s345
      %p352 = scmp.eq.s32.totalorder %s83, 1
      %p353 = por %p351, %p352
      %p354 = scmp.ne.s32.totalorder %s345, %s346
      %p355 = scmp.eq.s32.totalorder %s83, 0
      %p356 = por %p354, %p355
      %p357 = scmp.ne.s32.totalorder %s345, %s346
      %p358 = scmp.eq.s32.totalorder %s84, 1
      %p359 = por %p357, %p358
      %p361 = scmp.ne.s32.totalorder %s346, %s360
      %p362 = scmp.eq.s32.totalorder %s84, 0
      %p363 = por %p361, %p362
      %s365 = sadd.s32 %s364, 1
      %p368 = scmp.eq.s32.totalorder %s78, 1
      %p369 = scmp.ne.s32.totalorder %s364, %s366
      %p370 = scmp.eq.s32.totalorder %s78, 0
      %p371 = por %p369, %p370
      %p372 = scmp.ne.s32.totalorder %s364, %s366
      %p373 = scmp.eq.s32.totalorder %s83, 1
      %p374 = por %p372, %p373
      %p375 = scmp.ne.s32.totalorder %s366, %s367
      %p376 = scmp.eq.s32.totalorder %s83, 0
      %p377 = por %p375, %p376
      %p378 = scmp.ne.s32.totalorder %s366, %s367
      %p379 = scmp.eq.s32.totalorder %s84, 1
      %p380 = por %p378, %p379
      %p382 = scmp.ne.s32.totalorder %s367, %s381
      %p383 = scmp.eq.s32.totalorder %s84, 0
      %p384 = por %p382, %p383
      %s386 = sadd.s32 %s385, 1
      %p389 = scmp.eq.s32.totalorder %s78, 1
      %p390 = scmp.ne.s32.totalorder %s385, %s387
      %p391 = scmp.eq.s32.totalorder %s78, 0
      %p392 = por %p390, %p391
      %p393 = scmp.ne.s32.totalorder %s385, %s387
      %p394 = scmp.eq.s32.totalorder %s83, 1
      %p395 = por %p393, %p394
      %p396 = scmp.ne.s32.totalorder %s387, %s388
      %p397 = scmp.eq.s32.totalorder %s83, 0
      %p398 = por %p396, %p397
      %p399 = scmp.ne.s32.totalorder %s387, %s388
      %p400 = scmp.eq.s32.totalorder %s84, 1
      %p401 = por %p399, %p400
      %p403 = scmp.ne.s32.totalorder %s388, %s402
      %p404 = scmp.eq.s32.totalorder %s84, 0
      %p405 = por %p403, %p404
      %s407 = sadd.s32 %s406, 1
      %p410 = scmp.eq.s32.totalorder %s78, 1
      %p411 = scmp.ne.s32.totalorder %s406, %s408
      %p412 = scmp.eq.s32.totalorder %s78, 0
      %p413 = por %p411, %p412
      %p414 = scmp.ne.s32.totalorder %s406, %s408
      %p415 = scmp.eq.s32.totalorder %s83, 1
      %p416 = por %p414, %p415
      %p417 = scmp.ne.s32.totalorder %s408, %s409
      %p418 = scmp.eq.s32.totalorder %s83, 0
      %p419 = por %p417, %p418
      %p420 = scmp.ne.s32.totalorder %s408, %s409
      %p421 = scmp.eq.s32.totalorder %s84, 1
      %p422 = por %p420, %p421
      %p424 = scmp.ne.s32.totalorder %s409, %s423
      %p425 = scmp.eq.s32.totalorder %s84, 0
      %p426 = por %p424, %p425
      %s428 = sadd.s32 %s427, 1
      %p431 = scmp.eq.s32.totalorder %s78, 1
      %p432 = scmp.ne.s32.totalorder %s427, %s429
      %p433 = scmp.eq.s32.totalorder %s78, 0
      %p434 = por %p432, %p433
      %p435 = scmp.ne.s32.totalorder %s427, %s429
      %p436 = scmp.eq.s32.totalorder %s83, 1
      %p437 = por %p435, %p436
      %p438 = scmp.ne.s32.totalorder %s429, %s430
      %p439 = scmp.eq.s32.totalorder %s83, 0
      %p440 = por %p438, %p439
      %p441 = scmp.ne.s32.totalorder %s429, %s430
      %p442 = scmp.eq.s32.totalorder %s84, 1
      %p443 = por %p441, %p442
      %p445 = scmp.ne.s32.totalorder %s430, %s444
      %p446 = scmp.eq.s32.totalorder %s84, 0
      %p447 = por %p445, %p446
      %s449 = sadd.s32 %s448, 1
      %p452 = scmp.eq.s32.totalorder %s78, 1
      %p453 = scmp.ne.s32.totalorder %s448, %s450
      %p454 = scmp.eq.s32.totalorder %s78, 0
      %p455 = por %p453, %p454
      %p456 = scmp.ne.s32.totalorder %s448, %s450
      %p457 = scmp.eq.s32.totalorder %s83, 1
      %p458 = por %p456, %p457
      %p459 = scmp.ne.s32.totalorder %s450, %s451
      %p460 = scmp.eq.s32.totalorder %s83, 0
      %p461 = por %p459, %p460
      %p462 = scmp.ne.s32.totalorder %s450, %s451
      %p463 = scmp.eq.s32.totalorder %s84, 1
      %p464 = por %p462, %p463
      %p466 = scmp.ne.s32.totalorder %s451, %s465
      %p467 = scmp.eq.s32.totalorder %s84, 0
      %p468 = por %p466, %p467
      %s470 = sadd.s32 %s469, 1
      %p473 = scmp.eq.s32.totalorder %s78, 1
      %p474 = scmp.ne.s32.totalorder %s469, %s471
      %p475 = scmp.eq.s32.totalorder %s78, 0
      %p476 = por %p474, %p475
      %p477 = scmp.ne.s32.totalorder %s469, %s471
      %p478 = scmp.eq.s32.totalorder %s83, 1
      %p479 = por %p477, %p478
      %p480 = scmp.ne.s32.totalorder %s471, %s472
      %p481 = scmp.eq.s32.totalorder %s83, 0
      %p482 = por %p480, %p481
      %p483 = scmp.ne.s32.totalorder %s471, %s472
      %p484 = scmp.eq.s32.totalorder %s84, 1
      %p485 = por %p483, %p484
      %p487 = scmp.ne.s32.totalorder %s472, %s486
      %p488 = scmp.eq.s32.totalorder %s84, 0
      %p489 = por %p487, %p488
      %s491 = sadd.s32 %s490, 1
      %p494 = scmp.eq.s32.totalorder %s78, 1
      %p495 = scmp.ne.s32.totalorder %s490, %s492
      %p496 = scmp.eq.s32.totalorder %s78, 0
      %p497 = por %p495, %p496
      %p498 = scmp.ne.s32.totalorder %s490, %s492
      %p499 = scmp.eq.s32.totalorder %s83, 1
      %p500 = por %p498, %p499
      %p501 = scmp.ne.s32.totalorder %s492, %s493
      %p502 = scmp.eq.s32.totalorder %s83, 0
      %p503 = por %p501, %p502
      %p504 = scmp.ne.s32.totalorder %s492, %s493
      %p505 = scmp.eq.s32.totalorder %s84, 1
      %p506 = por %p504, %p505
      %p508 = scmp.ne.s32.totalorder %s493, %s507
      %p509 = scmp.eq.s32.totalorder %s84, 0
      %p510 = por %p508, %p509
      %s512 = sadd.s32 %s511, 1
      %p515 = scmp.eq.s32.totalorder %s78, 1
      %p516 = scmp.ne.s32.totalorder %s511, %s513
      %p517 = scmp.eq.s32.totalorder %s78, 0
      %p518 = por %p516, %p517
      %p519 = scmp.ne.s32.totalorder %s511, %s513
      %p520 = scmp.eq.s32.totalorder %s83, 1
      %p521 = por %p519, %p520
      %p522 = scmp.ne.s32.totalorder %s513, %s514
      %p523 = scmp.eq.s32.totalorder %s83, 0
      %p524 = por %p522, %p523
      %p525 = scmp.ne.s32.totalorder %s513, %s514
      %p526 = scmp.eq.s32.totalorder %s84, 1
      %p527 = por %p525, %p526
      %p529 = scmp.ne.s32.totalorder %s514, %s528
      %p530 = scmp.eq.s32.totalorder %s84, 0
      %p531 = por %p529, %p530
      %s533 = sadd.s32 %s532, 1
      %p536 = scmp.eq.s32.totalorder %s78, 1
      %p537 = scmp.ne.s32.totalorder %s532, %s534
      %p538 = scmp.eq.s32.totalorder %s78, 0
      %p539 = por %p537, %p538
      %p540 = scmp.ne.s32.totalorder %s532, %s534
      %p541 = scmp.eq.s32.totalorder %s83, 1
      %p542 = por %p540, %p541
      %p543 = scmp.ne.s32.totalorder %s534, %s535
      %p544 = scmp.eq.s32.totalorder %s83, 0
      %p545 = por %p543, %p544
      %p546 = scmp.ne.s32.totalorder %s534, %s535
      %p547 = scmp.eq.s32.totalorder %s84, 1
      %p548 = por %p546, %p547
      %p550 = scmp.ne.s32.totalorder %s535, %s549
      %p551 = scmp.eq.s32.totalorder %s84, 0
      %p552 = por %p550, %p551
      %s554 = sadd.s32 %s553, 1
      %p557 = scmp.eq.s32.totalorder %s78, 1
      %p558 = scmp.ne.s32.totalorder %s553, %s555
      %p559 = scmp.eq.s32.totalorder %s78, 0
      %p560 = por %p558, %p559
      %p561 = scmp.ne.s32.totalorder %s553, %s555
      %p562 = scmp.eq.s32.totalorder %s83, 1
      %p563 = por %p561, %p562
      %p564 = scmp.ne.s32.totalorder %s555, %s556
      %p565 = scmp.eq.s32.totalorder %s83, 0
      %p566 = por %p564, %p565
      %p567 = scmp.ne.s32.totalorder %s555, %s556
      %p568 = scmp.eq.s32.totalorder %s84, 1
      %p569 = por %p567, %p568
      %p571 = scmp.ne.s32.totalorder %s556, %s570
      %p572 = scmp.eq.s32.totalorder %s84, 0
      %p573 = por %p571, %p572
      %s575 = sadd.s32 %s574, 1
      %p578 = scmp.eq.s32.totalorder %s78, 1
      %p579 = scmp.ne.s32.totalorder %s574, %s576
      %p580 = scmp.eq.s32.totalorder %s78, 0
      %p581 = por %p579, %p580
      %p582 = scmp.ne.s32.totalorder %s574, %s576
      %p583 = scmp.eq.s32.totalorder %s83, 1
      %p584 = por %p582, %p583
      %p585 = scmp.ne.s32.totalorder %s576, %s577
      %p586 = scmp.eq.s32.totalorder %s83, 0
      %p587 = por %p585, %p586
      %p588 = scmp.ne.s32.totalorder %s576, %s577
      %p589 = scmp.eq.s32.totalorder %s84, 1
      %p590 = por %p588, %p589
      %p592 = scmp.ne.s32.totalorder %s577, %s591
      %p593 = scmp.eq.s32.totalorder %s84, 0
      %p594 = por %p592, %p593
      %s596 = sadd.s32 %s595, 1
      %p599 = scmp.eq.s32.totalorder %s78, 1
      %p600 = scmp.ne.s32.totalorder %s595, %s597
      %p601 = scmp.eq.s32.totalorder %s78, 0
      %p602 = por %p600, %p601
      %p603 = scmp.ne.s32.totalorder %s595, %s597
      %p604 = scmp.eq.s32.totalorder %s83, 1
      %p605 = por %p603, %p604
      %p606 = scmp.ne.s32.totalorder %s597, %s598
      %p607 = scmp.eq.s32.totalorder %s83, 0
      %p608 = por %p606, %p607
      %p609 = scmp.ne.s32.totalorder %s597, %s598
      %p610 = scmp.eq.s32.totalorder %s84, 1
      %p611 = por %p609, %p610
      %p613 = scmp.ne.s32.totalorder %s598, %s612
      %p614 = scmp.eq.s32.totalorder %s84, 0
      %p615 = por %p613, %p614
      %s617 = sadd.s32 %s616, 1
      %p620 = scmp.eq.s32.totalorder %s78, 1
      %p621 = scmp.ne.s32.totalorder %s616, %s618
      %p622 = scmp.eq.s32.totalorder %s78, 0
      %p623 = por %p621, %p622
      %p624 = scmp.ne.s32.totalorder %s616, %s618
      %p625 = scmp.eq.s32.totalorder %s83, 1
      %p626 = por %p624, %p625
      %p627 = scmp.ne.s32.totalorder %s618, %s619
      %p628 = scmp.eq.s32.totalorder %s83, 0
      %p629 = por %p627, %p628
      %p630 = scmp.ne.s32.totalorder %s618, %s619
      %p631 = scmp.eq.s32.totalorder %s84, 1
      %p632 = por %p630, %p631
      %p634 = scmp.ne.s32.totalorder %s619, %s633
      %p635 = scmp.eq.s32.totalorder %s84, 0
      %p636 = por %p634, %p635
      %s638 = sadd.s32 %s637, 1
      %p641 = scmp.eq.s32.totalorder %s78, 1
      %p642 = scmp.ne.s32.totalorder %s637, %s639
      %p643 = scmp.eq.s32.totalorder %s78, 0
      %p644 = por %p642, %p643
      %p645 = scmp.ne.s32.totalorder %s637, %s639
      %p646 = scmp.eq.s32.totalorder %s83, 1
      %p647 = por %p645, %p646
      %p648 = scmp.ne.s32.totalorder %s639, %s640
      %p649 = scmp.eq.s32.totalorder %s83, 0
      %p650 = por %p648, %p649
      %p651 = scmp.ne.s32.totalorder %s639, %s640
      %p652 = scmp.eq.s32.totalorder %s84, 1
      %p653 = por %p651, %p652
      %p655 = scmp.ne.s32.totalorder %s640, %s654
      %p656 = scmp.eq.s32.totalorder %s84, 0
      %p657 = por %p655, %p656
      %s659 = sadd.s32 %s658, 1
      %p662 = scmp.eq.s32.totalorder %s78, 1
      %p663 = scmp.ne.s32.totalorder %s658, %s660
      %p664 = scmp.eq.s32.totalorder %s78, 0
      %p665 = por %p663, %p664
      %p666 = scmp.ne.s32.totalorder %s658, %s660
      %p667 = scmp.eq.s32.totalorder %s83, 1
      %p668 = por %p666, %p667
      %p669 = scmp.ne.s32.totalorder %s660, %s661
      %p670 = scmp.eq.s32.totalorder %s83, 0
      %p671 = por %p669, %p670
      %p672 = scmp.ne.s32.totalorder %s660, %s661
      %p673 = scmp.eq.s32.totalorder %s84, 1
      %p674 = por %p672, %p673
      %p676 = scmp.ne.s32.totalorder %s661, %s675
      %p677 = scmp.eq.s32.totalorder %s84, 0
      %p678 = por %p676, %p677
      %s680 = sadd.s32 %s679, 1
      %p683 = scmp.eq.s32.totalorder %s78, 1
      %p684 = scmp.ne.s32.totalorder %s679, %s681
      %p685 = scmp.eq.s32.totalorder %s78, 0
      %p686 = por %p684, %p685
      %p687 = scmp.ne.s32.totalorder %s679, %s681
      %p688 = scmp.eq.s32.totalorder %s83, 1
      %p689 = por %p687, %p688
      %p690 = scmp.ne.s32.totalorder %s681, %s682
      %p691 = scmp.eq.s32.totalorder %s83, 0
      %p692 = por %p690, %p691
      %p693 = scmp.ne.s32.totalorder %s681, %s682
      %p694 = scmp.eq.s32.totalorder %s84, 1
      %p695 = por %p693, %p694
      %p697 = scmp.ne.s32.totalorder %s682, %s696
      %p698 = scmp.eq.s32.totalorder %s84, 0
      %p699 = por %p697, %p698
      %s700 = ssub.s32 %s78, %s85
      %p701 = scmp.eq.s32.totalorder %s700, 0
      %s703 = sadd.s32 %s702, 1
      %s704 = scalar_select %p701, %s702, %s703
      %p707 = pneg %p701
      %p708 = scmp.eq.s32.totalorder %s78, 1
      %p709 = por %p707, %p708
      %p710 = scmp.ne.s32.totalorder %s702, %s705
      %p711 = scmp.eq.s32.totalorder %s78, 0
      %p712 = por %p710, %p711
      %p713 = scmp.ne.s32.totalorder %s702, %s705
      %p714 = scmp.eq.s32.totalorder %s83, 1
      %p715 = por %p713, %p714
      %p716 = scmp.ne.s32.totalorder %s705, %s706
      %p717 = scmp.eq.s32.totalorder %s83, 0
      %p718 = por %p716, %p717
      %p719 = scmp.ne.s32.totalorder %s705, %s706
      %p720 = scmp.eq.s32.totalorder %s84, 1
      %p721 = por %p719, %p720
      %p723 = scmp.ne.s32.totalorder %s706, %s722
      %p724 = scmp.eq.s32.totalorder %s84, 0
      %p725 = por %p723, %p724
      %p726 = scmp.le.s32.totalorder 1, %s78
      %p727 = scmp.lt.s32.totalorder %s78, 3
      %p728 = pnand %p726, %p727
      %p729 = pneg %p728
      // Predicated region
      $region9: #{tpu_custom_call.1} parent=5 // pred_check
        _
      $region10: #{tpu_custom_call.1} parent=5 // pred_check_branch
        %731 = sbr.rel (%p728) target = $region12
      $region11: #{tpu_custom_call.1} parent=5 // pred_region
        %s732 = ssub.s32 %s78, 1
        // Predicated region
        $region13: #{tpu_custom_call.1} parent=11 // pred_check
          %p733 = pneg %p125
        $region14: #{tpu_custom_call.1} parent=11 // pred_check_branch
          %735 = sbr.rel (%p733) target = $region16
        $region15: #{tpu_custom_call.1} parent=11 // pred_region
          _
        $region16: #{tpu_custom_call.1} parent=11 // pred_fallthru
          _
        // Predicated region
        $region17: #{tpu_custom_call.1} parent=11 // pred_check
          %p736 = pneg %p146
        $region18: #{tpu_custom_call.1} parent=11 // pred_check_branch
          %738 = sbr.rel (%p736) target = $region20
        $region19: #{tpu_custom_call.1} parent=11 // pred_region
          _
        $region20: #{tpu_custom_call.1} parent=11 // pred_fallthru
          _
        // Predicated region
        $region21: #{tpu_custom_call.1} parent=11 // pred_check
          %p739 = pneg %p167
        $region22: #{tpu_custom_call.1} parent=11 // pred_check_branch
          %741 = sbr.rel (%p739) target = $region24
        $region23: #{tpu_custom_call.1} parent=11 // pred_region
          _
        $region24: #{tpu_custom_call.1} parent=11 // pred_fallthru
          _
        // Predicated region
        $region25: #{tpu_custom_call.1} parent=11 // pred_check
          %p742 = pneg %p188
        $region26: #{tpu_custom_call.1} parent=11 // pred_check_branch
          %744 = sbr.rel (%p742) target = $region28
        $region27: #{tpu_custom_call.1} parent=11 // pred_region
          %s746 = ssub.s32 16, 16
          %747 = vsyncadd [#allocation6], %s746
          %s749 = sshll.u32 [#allocation5], 4
          %s750 = int_to_ptr.vmem [resolvable:$true] %s749
          %752 = dma.hbm_to_vmem [thread:$0]  %s9, 16, %s750, [#allocation6]
        $region28: #{tpu_custom_call.1} parent=11 // pred_fallthru
          _
        // Predicated region
        $region29: #{tpu_custom_call.1} parent=11 // pred_check
          %p753 = pneg %p209
        $region30: #{tpu_custom_call.1} parent=11 // pred_check_branch
          %755 = sbr.rel (%p753) target = $region32
        $region31: #{tpu_custom_call.1} parent=11 // pred_region
          %s757 = ssub.s32 1024, 1024
          %758 = vsyncadd [#allocation6], %s757
          %s759 = sshll.u32 [#allocation7], 4
          %s760 = int_to_ptr.vmem [resolvable:$true] %s759
          %765 = dma.hbm_to_vmem [thread:$0]  %s11, 1024, %s760, [#allocation6], 128, 128, 8
        $region32: #{tpu_custom_call.1} parent=11 // pred_fallthru
          _
        // Predicated region
        $region33: #{tpu_custom_call.1} parent=11 // pred_check
          %p766 = pneg %p230
        $region34: #{tpu_custom_call.1} parent=11 // pred_check_branch
          %768 = sbr.rel (%p766) target = $region36
        $region35: #{tpu_custom_call.1} parent=11 // pred_region
          %s770 = ssub.s32 16, 16
          %771 = vsyncadd [#allocation9], %s770
          %s773 = sshll.u32 [#allocation8], 4
          %s774 = int_to_ptr.vmem [resolvable:$true] %s773
          %776 = dma.hbm_to_vmem [thread:$0]  %s13, 16, %s774, [#allocation9]
        $region36: #{tpu_custom_call.1} parent=11 // pred_fallthru
          _
        // Predicated region
        $region37: #{tpu_custom_call.1} parent=11 // pred_check
          %p777 = pneg %p251
        $region38: #{tpu_custom_call.1} parent=11 // pred_check_branch
          %779 = sbr.rel (%p777) target = $region40
        $region39: #{tpu_custom_call.1} parent=11 // pred_region
          _
        $region40: #{tpu_custom_call.1} parent=11 // pred_fallthru
          _
        // Predicated region
        $region41: #{tpu_custom_call.1} parent=11 // pred_check
          %p780 = pneg %p272
        $region42: #{tpu_custom_call.1} parent=11 // pred_check_branch
          %782 = sbr.rel (%p780) target = $region44
        $region43: #{tpu_custom_call.1} parent=11 // pred_region
          %s784 = ssub.s32 16, 16
          %785 = vsyncadd [#allocation9], %s784
          %s787 = sshll.u32 [#allocation10], 4
          %s788 = int_to_ptr.vmem [resolvable:$true] %s787
          %790 = dma.hbm_to_vmem [thread:$0]  %s17, 16, %s788, [#allocation9]
        $region44: #{tpu_custom_call.1} parent=11 // pred_fallthru
          _
        // Predicated region
        $region45: #{tpu_custom_call.1} parent=11 // pred_check
          %p791 = pneg %p293
        $region46: #{tpu_custom_call.1} parent=11 // pred_check_branch
          %793 = sbr.rel (%p791) target = $region48
        $region47: #{tpu_custom_call.1} parent=11 // pred_region
          %s795 = ssub.s32 16, 16
          %796 = vsyncadd [#allocation12], %s795
          %s798 = sshll.u32 [#allocation11], 4
          %s799 = int_to_ptr.vmem [resolvable:$true] %s798
          %801 = dma.hbm_to_vmem [thread:$0]  %s19, 16, %s799, [#allocation12]
        $region48: #{tpu_custom_call.1} parent=11 // pred_fallthru
          _
        // Predicated region
        $region49: #{tpu_custom_call.1} parent=11 // pred_check
          %p802 = pneg %p314
        $region50: #{tpu_custom_call.1} parent=11 // pred_check_branch
          %804 = sbr.rel (%p802) target = $region52
        $region51: #{tpu_custom_call.1} parent=11 // pred_region
          %s806 = ssub.s32 16, 16
          %807 = vsyncadd [#allocation12], %s806
          %s809 = sshll.u32 [#allocation13], 4
          %s810 = int_to_ptr.vmem [resolvable:$true] %s809
          %812 = dma.hbm_to_vmem [thread:$0]  %s21, 16, %s810, [#allocation12]
        $region52: #{tpu_custom_call.1} parent=11 // pred_fallthru
          _
        // Predicated region
        $region53: #{tpu_custom_call.1} parent=11 // pred_check
          %p813 = pneg %p335
        $region54: #{tpu_custom_call.1} parent=11 // pred_check_branch
          %815 = sbr.rel (%p813) target = $region56
        $region55: #{tpu_custom_call.1} parent=11 // pred_region
          %s817 = ssub.s32 16, 16
          %818 = vsyncadd [#allocation15], %s817
          %s820 = sshll.u32 [#allocation14], 4
          %s821 = int_to_ptr.vmem [resolvable:$true] %s820
          %823 = dma.hbm_to_vmem [thread:$0]  %s23, 16, %s821, [#allocation15]
        $region56: #{tpu_custom_call.1} parent=11 // pred_fallthru
          _
        // Predicated region
        $region57: #{tpu_custom_call.1} parent=11 // pred_check
          %p824 = pneg %p356
        $region58: #{tpu_custom_call.1} parent=11 // pred_check_branch
          %826 = sbr.rel (%p824) target = $region60
        $region59: #{tpu_custom_call.1} parent=11 // pred_region
          %s828 = ssub.s32 16, 16
          %829 = vsyncadd [#allocation15], %s828
          %s831 = sshll.u32 [#allocation16], 4
          %s832 = int_to_ptr.vmem [resolvable:$true] %s831
          %834 = dma.hbm_to_vmem [thread:$0]  %s25, 16, %s832, [#allocation15]
        $region60: #{tpu_custom_call.1} parent=11 // pred_fallthru
          _
        // Predicated region
        $region61: #{tpu_custom_call.1} parent=11 // pred_check
          %p835 = pneg %p377
        $region62: #{tpu_custom_call.1} parent=11 // pred_check_branch
          %837 = sbr.rel (%p835) target = $region64
        $region63: #{tpu_custom_call.1} parent=11 // pred_region
          _
        $region64: #{tpu_custom_call.1} parent=11 // pred_fallthru
          _
        // Predicated region
        $region65: #{tpu_custom_call.1} parent=11 // pred_check
          %p838 = pneg %p398
        $region66: #{tpu_custom_call.1} parent=11 // pred_check_branch
          %840 = sbr.rel (%p838) target = $region68
        $region67: #{tpu_custom_call.1} parent=11 // pred_region
          _
        $region68: #{tpu_custom_call.1} parent=11 // pred_fallthru
          _
        // Predicated region
        $region69: #{tpu_custom_call.1} parent=11 // pred_check
          %p841 = pneg %p419
        $region70: #{tpu_custom_call.1} parent=11 // pred_check_branch
          %843 = sbr.rel (%p841) target = $region72
        $region71: #{tpu_custom_call.1} parent=11 // pred_region
          %s845 = ssub.s32 1024, 1024
          %846 = vsyncadd [#allocation18], %s845
          %s847 = sshll.u32 [#allocation17], 4
          %s848 = int_to_ptr.vmem [resolvable:$true] %s847
          %853 = dma.hbm_to_vmem [thread:$0]  %s31, 1024, %s848, [#allocation18], 128, 128, 8
        $region72: #{tpu_custom_call.1} parent=11 // pred_fallthru
          _
        // Predicated region
        $region73: #{tpu_custom_call.1} parent=11 // pred_check
          %p854 = pneg %p440
        $region74: #{tpu_custom_call.1} parent=11 // pred_check_branch
          %856 = sbr.rel (%p854) target = $region76
        $region75: #{tpu_custom_call.1} parent=11 // pred_region
          %s858 = ssub.s32 16, 16
          %859 = vsyncadd [#allocation18], %s858
          %s861 = sshll.u32 [#allocation19], 4
          %s862 = int_to_ptr.vmem [resolvable:$true] %s861
          %864 = dma.hbm_to_vmem [thread:$0]  %s33, 16, %s862, [#allocation18]
        $region76: #{tpu_custom_call.1} parent=11 // pred_fallthru
          _
        // Predicated region
        $region77: #{tpu_custom_call.1} parent=11 // pred_check
          %p865 = pneg %p461
        $region78: #{tpu_custom_call.1} parent=11 // pred_check_branch
          %867 = sbr.rel (%p865) target = $region80
        $region79: #{tpu_custom_call.1} parent=11 // pred_region
          %s869 = ssub.s32 1024, 1024
          %870 = vsyncadd [#allocation21], %s869
          %s871 = sshll.u32 [#allocation20], 4
          %s872 = int_to_ptr.vmem [resolvable:$true] %s871
          %877 = dma.hbm_to_vmem [thread:$0]  %s35, 1024, %s872, [#allocation21], 128, 128, 8
        $region80: #{tpu_custom_call.1} parent=11 // pred_fallthru
          _
        // Predicated region
        $region81: #{tpu_custom_call.1} parent=11 // pred_check
          %p878 = pneg %p482
        $region82: #{tpu_custom_call.1} parent=11 // pred_check_branch
          %880 = sbr.rel (%p878) target = $region84
        $region83: #{tpu_custom_call.1} parent=11 // pred_region
          %s882 = ssub.s32 16, 16
          %883 = vsyncadd [#allocation21], %s882
          %s885 = sshll.u32 [#allocation22], 4
          %s886 = int_to_ptr.vmem [resolvable:$true] %s885
          %888 = dma.hbm_to_vmem [thread:$0]  %s37, 16, %s886, [#allocation21]
        $region84: #{tpu_custom_call.1} parent=11 // pred_fallthru
          _
        // Predicated region
        $region85: #{tpu_custom_call.1} parent=11 // pred_check
          %p889 = pneg %p503
        $region86: #{tpu_custom_call.1} parent=11 // pred_check_branch
          %891 = sbr.rel (%p889) target = $region88
        $region87: #{tpu_custom_call.1} parent=11 // pred_region
          _
        $region88: #{tpu_custom_call.1} parent=11 // pred_fallthru
          _
        // Predicated region
        $region89: #{tpu_custom_call.1} parent=11 // pred_check
          %p892 = pneg %p524
        $region90: #{tpu_custom_call.1} parent=11 // pred_check_branch
          %894 = sbr.rel (%p892) target = $region92
        $region91: #{tpu_custom_call.1} parent=11 // pred_region
          _
        $region92: #{tpu_custom_call.1} parent=11 // pred_fallthru
          _
        // Predicated region
        $region93: #{tpu_custom_call.1} parent=11 // pred_check
          %p895 = pneg %p545
        $region94: #{tpu_custom_call.1} parent=11 // pred_check_branch
          %897 = sbr.rel (%p895) target = $region96
        $region95: #{tpu_custom_call.1} parent=11 // pred_region
          _
        $region96: #{tpu_custom_call.1} parent=11 // pred_fallthru
          _
        // Predicated region
        $region97: #{tpu_custom_call.1} parent=11 // pred_check
          %p898 = pneg %p566
        $region98: #{tpu_custom_call.1} parent=11 // pred_check_branch
          %900 = sbr.rel (%p898) target = $region100
        $region99: #{tpu_custom_call.1} parent=11 // pred_region
          _
        $region100: #{tpu_custom_call.1} parent=11 // pred_fallthru
          _
        // Predicated region
        $region101: #{tpu_custom_call.1} parent=11 // pred_check
          %p901 = pneg %p587
        $region102: #{tpu_custom_call.1} parent=11 // pred_check_branch
          %903 = sbr.rel (%p901) target = $region104
        $region103: #{tpu_custom_call.1} parent=11 // pred_region
          _
        $region104: #{tpu_custom_call.1} parent=11 // pred_fallthru
          _
        // Predicated region
        $region105: #{tpu_custom_call.1} parent=11 // pred_check
          %p904 = pneg %p608
        $region106: #{tpu_custom_call.1} parent=11 // pred_check_branch
          %906 = sbr.rel (%p904) target = $region108
        $region107: #{tpu_custom_call.1} parent=11 // pred_region
          _
        $region108: #{tpu_custom_call.1} parent=11 // pred_fallthru
          _
        // Predicated region
        $region109: #{tpu_custom_call.1} parent=11 // pred_check
          %p907 = pneg %p629
        $region110: #{tpu_custom_call.1} parent=11 // pred_check_branch
          %909 = sbr.rel (%p907) target = $region112
        $region111: #{tpu_custom_call.1} parent=11 // pred_region
          _
        $region112: #{tpu_custom_call.1} parent=11 // pred_fallthru
          _
        // Predicated region
        $region113: #{tpu_custom_call.1} parent=11 // pred_check
          %p910 = pneg %p650
        $region114: #{tpu_custom_call.1} parent=11 // pred_check_branch
          %912 = sbr.rel (%p910) target = $region116
        $region115: #{tpu_custom_call.1} parent=11 // pred_region
          _
        $region116: #{tpu_custom_call.1} parent=11 // pred_fallthru
          _
        // Predicated region
        $region117: #{tpu_custom_call.1} parent=11 // pred_check
          %p913 = pneg %p671
        $region118: #{tpu_custom_call.1} parent=11 // pred_check_branch
          %915 = sbr.rel (%p913) target = $region120
        $region119: #{tpu_custom_call.1} parent=11 // pred_region
          %s917 = ssub.s32 1024, 1024
          %918 = vsyncadd [#allocation24], %s917
          %s919 = sshll.u32 [#allocation23], 4
          %s920 = int_to_ptr.vmem [resolvable:$true] %s919
          %925 = dma.hbm_to_vmem [thread:$0]  %s55, 1024, %s920, [#allocation24], 128, 128, 8
        $region120: #{tpu_custom_call.1} parent=11 // pred_fallthru
          _
        // Predicated region
        $region121: #{tpu_custom_call.1} parent=11 // pred_check
          %p926 = pneg %p692
        $region122: #{tpu_custom_call.1} parent=11 // pred_check_branch
          %928 = sbr.rel (%p926) target = $region124
        $region123: #{tpu_custom_call.1} parent=11 // pred_region
          _
        $region124: #{tpu_custom_call.1} parent=11 // pred_fallthru
          _
      $region12: #{tpu_custom_call.1} parent=5 // pred_fallthru
        _
      %p929 = scmp.lt.s32.totalorder %s78, 2
      // Predicated region
      $region125: #{tpu_custom_call.1} parent=5 // pred_check
        %p930 = pneg %p929
      $region126: #{tpu_custom_call.1} parent=5 // pred_check_branch
        %932 = sbr.rel (%p930) target = $region128
      $region127: #{tpu_custom_call.1} parent=5 // pred_region
        // Predicated region
        $region129: #{tpu_custom_call.1} parent=127 // pred_check
          %p933 = pneg %p98
        $region130: #{tpu_custom_call.1} parent=127 // pred_check_branch
          %935 = sbr.rel (%p933) target = $region132
        $region131: #{tpu_custom_call.1} parent=127 // pred_region
          %s936 = sand.u32 %s88, 1
          %s937 = scalar_lea.sflag [#allocation3], %s936
          %s938 = sand.u32 %s88, 1
          %s939 = smul.addr %s938, 8
          %s940 = scalar_lea.vmem [#allocation2], %s939
          %s942 = ssub.s32 128, 128
          %943 = vsyncadd %s937, %s942
          %s944 = smul.addr %s78, 128
          %s945 = scalar_lea.hbm %s1, %s944
          %s947 = sshll.u32 %s940, 4
          %s948 = int_to_ptr.vmem [resolvable:$true] %s947
          %950 = dma.hbm_to_vmem [thread:$0]  %s945, 128, %s948, %s937
        $region132: #{tpu_custom_call.1} parent=127 // pred_fallthru
          _
      $region128: #{tpu_custom_call.1} parent=5 // pred_fallthru
        _
      %p951 = scmp.le.s32.totalorder 1, %s78
      %p952 = scmp.lt.s32.totalorder %s78, 3
      %p953 = pnand %p951, %p952
      %p954 = pneg %p953
      // Predicated region
      $region133: #{tpu_custom_call.1} parent=5 // pred_check
        _
      $region134: #{tpu_custom_call.1} parent=5 // pred_check_branch
        %956 = sbr.rel (%p953) target = $region136
      $region135: #{tpu_custom_call.1} parent=5 // pred_region
        %s957 = ssub.s32 %s78, 1
        %s958 = sand.u32 %s91, 1
        %s959 = scalar_lea.sflag [#allocation3], %s958
        %s960 = sand.u32 %s91, 1
        %s961 = smul.addr %s960, 8
        %s962 = scalar_lea.vmem [#allocation2], %s961
        // Predicated region
        $region137: #{tpu_custom_call.1} parent=135 // pred_check
          %p963 = pneg %p104
        $region138: #{tpu_custom_call.1} parent=135 // pred_check_branch
          %965 = sbr.rel (%p963) target = $region140
        $region139: #{tpu_custom_call.1} parent=135 // pred_region
          %966 = dma.done %s959, 128
        $region140: #{tpu_custom_call.1} parent=135 // pred_fallthru
          _
        // Predicated region
        $region141: #{tpu_custom_call.1} parent=135 // pred_check
          %p967 = pneg %p188
        $region142: #{tpu_custom_call.1} parent=135 // pred_check_branch
          %969 = sbr.rel (%p967) target = $region144
        $region143: #{tpu_custom_call.1} parent=135 // pred_region
          %970 = dma.done [#allocation6], 16
        $region144: #{tpu_custom_call.1} parent=135 // pred_fallthru
          _
        // Predicated region
        $region145: #{tpu_custom_call.1} parent=135 // pred_check
          %p971 = pneg %p209
        $region146: #{tpu_custom_call.1} parent=135 // pred_check_branch
          %973 = sbr.rel (%p971) target = $region148
        $region147: #{tpu_custom_call.1} parent=135 // pred_region
          %974 = dma.done [#allocation6], 1024
        $region148: #{tpu_custom_call.1} parent=135 // pred_fallthru
          _
        // Predicated region
        $region149: #{tpu_custom_call.1} parent=135 // pred_check
          %p975 = pneg %p230
        $region150: #{tpu_custom_call.1} parent=135 // pred_check_branch
          %977 = sbr.rel (%p975) target = $region152
        $region151: #{tpu_custom_call.1} parent=135 // pred_region
          %978 = dma.done [#allocation9], 16
        $region152: #{tpu_custom_call.1} parent=135 // pred_fallthru
          _
        // Predicated region
        $region153: #{tpu_custom_call.1} parent=135 // pred_check
          %p979 = pneg %p272
        $region154: #{tpu_custom_call.1} parent=135 // pred_check_branch
          %981 = sbr.rel (%p979) target = $region156
        $region155: #{tpu_custom_call.1} parent=135 // pred_region
          %982 = dma.done [#allocation9], 16
        $region156: #{tpu_custom_call.1} parent=135 // pred_fallthru
          _
        // Predicated region
        $region157: #{tpu_custom_call.1} parent=135 // pred_check
          %p983 = pneg %p293
        $region158: #{tpu_custom_call.1} parent=135 // pred_check_branch
          %985 = sbr.rel (%p983) target = $region160
        $region159: #{tpu_custom_call.1} parent=135 // pred_region
          %986 = dma.done [#allocation12], 16
        $region160: #{tpu_custom_call.1} parent=135 // pred_fallthru
          _
        // Predicated region
        $region161: #{tpu_custom_call.1} parent=135 // pred_check
          %p987 = pneg %p314
        $region162: #{tpu_custom_call.1} parent=135 // pred_check_branch
          %989 = sbr.rel (%p987) target = $region164
        $region163: #{tpu_custom_call.1} parent=135 // pred_region
          %990 = dma.done [#allocation12], 16
        $region164: #{tpu_custom_call.1} parent=135 // pred_fallthru
          _
        // Predicated region
        $region165: #{tpu_custom_call.1} parent=135 // pred_check
          %p991 = pneg %p335
        $region166: #{tpu_custom_call.1} parent=135 // pred_check_branch
          %993 = sbr.rel (%p991) target = $region168
        $region167: #{tpu_custom_call.1} parent=135 // pred_region
          %994 = dma.done [#allocation15], 16
        $region168: #{tpu_custom_call.1} parent=135 // pred_fallthru
          _
        // Predicated region
        $region169: #{tpu_custom_call.1} parent=135 // pred_check
          %p995 = pneg %p356
        $region170: #{tpu_custom_call.1} parent=135 // pred_check_branch
          %997 = sbr.rel (%p995) target = $region172
        $region171: #{tpu_custom_call.1} parent=135 // pred_region
          %998 = dma.done [#allocation15], 16
        $region172: #{tpu_custom_call.1} parent=135 // pred_fallthru
          _
        // Predicated region
        $region173: #{tpu_custom_call.1} parent=135 // pred_check
          %p999 = pneg %p419
        $region174: #{tpu_custom_call.1} parent=135 // pred_check_branch
          %1001 = sbr.rel (%p999) target = $region176
        $region175: #{tpu_custom_call.1} parent=135 // pred_region
          %1002 = dma.done [#allocation18], 1024
        $region176: #{tpu_custom_call.1} parent=135 // pred_fallthru
          _
        // Predicated region
        $region177: #{tpu_custom_call.1} parent=135 // pred_check
          %p1003 = pneg %p440
        $region178: #{tpu_custom_call.1} parent=135 // pred_check_branch
          %1005 = sbr.rel (%p1003) target = $region180
        $region179: #{tpu_custom_call.1} parent=135 // pred_region
          %1006 = dma.done [#allocation18], 16
        $region180: #{tpu_custom_call.1} parent=135 // pred_fallthru
          _
        // Predicated region
        $region181: #{tpu_custom_call.1} parent=135 // pred_check
          %p1007 = pneg %p461
        $region182: #{tpu_custom_call.1} parent=135 // pred_check_branch
          %1009 = sbr.rel (%p1007) target = $region184
        $region183: #{tpu_custom_call.1} parent=135 // pred_region
          %1010 = dma.done [#allocation21], 1024
        $region184: #{tpu_custom_call.1} parent=135 // pred_fallthru
          _
        // Predicated region
        $region185: #{tpu_custom_call.1} parent=135 // pred_check
          %p1011 = pneg %p482
        $region186: #{tpu_custom_call.1} parent=135 // pred_check_branch
          %1013 = sbr.rel (%p1011) target = $region188
        $region187: #{tpu_custom_call.1} parent=135 // pred_region
          %1014 = dma.done [#allocation21], 16
        $region188: #{tpu_custom_call.1} parent=135 // pred_fallthru
          _
        // Predicated region
        $region189: #{tpu_custom_call.1} parent=135 // pred_check
          %p1015 = pneg %p671
        $region190: #{tpu_custom_call.1} parent=135 // pred_check_branch
          %1017 = sbr.rel (%p1015) target = $region192
        $region191: #{tpu_custom_call.1} parent=135 // pred_region
          %1018 = dma.done [#allocation24], 1024
        $region192: #{tpu_custom_call.1} parent=135 // pred_fallthru
          _
        %s1019 = sand.u32 %s91, 1
        %s1020 = scalar_lea.sflag [#allocation3], %s1019
        %s1021 = sand.u32 %s91, 1
        %s1022 = smul.addr %s1021, 8
        %s1023 = scalar_lea.vmem [#allocation2], %s1022
        %p1024 = pneg %p104
        %p1025 = pneg %p101
        %p1026 = pneg %p125
        %p1027 = pneg %p122
        %p1028 = pneg %p146
        %p1029 = pneg %p143
        %p1030 = pneg %p167
        %p1031 = pneg %p164
        %p1032 = pneg %p188
        %p1033 = pneg %p185
        %p1034 = pneg %p209
        %p1035 = pneg %p206
        %p1036 = pneg %p230
        %p1037 = pneg %p227
        %p1038 = pneg %p251
        %p1039 = pneg %p248
        %p1040 = pneg %p272
        %p1041 = pneg %p269
        %p1042 = pneg %p293
        %p1043 = pneg %p290
        %p1044 = pneg %p314
        %p1045 = pneg %p311
        %p1046 = pneg %p335
        %p1047 = pneg %p332
        %p1048 = pneg %p356
        %p1049 = pneg %p353
        %p1050 = pneg %p377
        %p1051 = pneg %p374
        %p1052 = pneg %p398
        %p1053 = pneg %p395
        %p1054 = pneg %p419
        %p1055 = pneg %p416
        %p1056 = pneg %p440
        %p1057 = pneg %p437
        %p1058 = pneg %p461
        %p1059 = pneg %p458
        %p1060 = pneg %p482
        %p1061 = pneg %p479
        %p1062 = pneg %p503
        %p1063 = pneg %p500
        %p1064 = pneg %p524
        %p1065 = pneg %p521
        %p1066 = pneg %p545
        %p1067 = pneg %p542
        %p1068 = pneg %p566
        %p1069 = pneg %p563
        %p1070 = pneg %p587
        %p1071 = pneg %p584
        %p1072 = pneg %p608
        %p1073 = pneg %p605
        %p1074 = pneg %p629
        %p1075 = pneg %p626
        %p1076 = pneg %p650
        %p1077 = pneg %p647
        %p1078 = pneg %p671
        %p1079 = pneg %p668
        %p1080 = pneg %p692
        %p1081 = pneg %p689
        %p1082 = pneg %p718
        %p1083 = pneg %p715
        %s1084 = sand.u32 %s705, 1
        %s1085 = scalar_lea.sflag [#allocation4], %s1084
        %s1086 = sand.u32 %s705, 1
        %s1087 = smul.addr %s1086, 8
        %s1088 = scalar_lea.vmem [#allocation25], %s1087
        %v1089 = vld [vmem:[%s3] sm:$0xff]
        %v1090 = vld [vmem:[%s3 + $0x8] sm:$0xff]
        %v1091 = vld [vmem:[%s3 + $0x10] sm:$0xff]
        %v1092 = vld [vmem:[%s3 + $0x18] sm:$0xff]
        %v1093 = vld [vmem:[%s3 + $0x20] sm:$0xff]
        %v1094 = vld [vmem:[%s3 + $0x28] sm:$0xff]
        %v1095 = vld [vmem:[%s3 + $0x30] sm:$0xff]
        %v1096 = vld [vmem:[%s3 + $0x38] sm:$0xff]
        %v1097 = vld [vmem:[%s3 + $0x40] sm:$0xff]
        %v1098 = vld [vmem:[%s3 + $0x48] sm:$0xff]
        %v1099 = vld [vmem:[%s3 + $0x50] sm:$0xff]
        %v1100 = vld [vmem:[%s3 + $0x58] sm:$0xff]
        %v1101 = vld [vmem:[%s3 + $0x60] sm:$0xff]
        %v1102 = vld [vmem:[%s3 + $0x68] sm:$0xff]
        %v1103 = vld [vmem:[%s3 + $0x70] sm:$0xff]
        %v1104 = vld [vmem:[%s3 + $0x78] sm:$0xff]
        %v1105 = vld [vmem:[%s5] sm:$0x3]
        %v1106 = vld [vmem:[%s7] sm:$0xff]
        %v1107 = vld [vmem:[%s7 + $0x8] sm:$0xff]
        %v1108 = vld [vmem:[%s7 + $0x10] sm:$0xff]
        %v1109 = vld [vmem:[%s7 + $0x18] sm:$0xff]
        %v1110 = vld [vmem:[%s7 + $0x20] sm:$0xff]
        %v1111 = vld [vmem:[%s7 + $0x28] sm:$0xff]
        %v1112 = vld [vmem:[%s7 + $0x30] sm:$0xff]
        %v1113 = vld [vmem:[%s7 + $0x38] sm:$0xff]
        %v1114 = vld [vmem:[#allocation5] sm:$0x1]
        %v1115 = vld [vmem:[#allocation7] sm:$0xff]
        %v1116 = vld [vmem:[#allocation7 + $0x8] sm:$0xff]
        %v1117 = vld [vmem:[#allocation7 + $0x10] sm:$0xff]
        %v1118 = vld [vmem:[#allocation7 + $0x18] sm:$0xff]
        %v1119 = vld [vmem:[#allocation7 + $0x20] sm:$0xff]
        %v1120 = vld [vmem:[#allocation7 + $0x28] sm:$0xff]
        %v1121 = vld [vmem:[#allocation7 + $0x30] sm:$0xff]
        %v1122 = vld [vmem:[#allocation7 + $0x38] sm:$0xff]
        %v1123 = vld [vmem:[#allocation8] sm:$0x1]
        %v1124 = vld [vmem:[%s15] sm:$0xff]
        %v1125 = vld [vmem:[%s15 + $0x8] sm:$0xff]
        %v1126 = vld [vmem:[%s15 + $0x10] sm:$0xff]
        %v1127 = vld [vmem:[%s15 + $0x18] sm:$0xff]
        %v1128 = vld [vmem:[%s15 + $0x20] sm:$0xff]
        %v1129 = vld [vmem:[%s15 + $0x28] sm:$0xff]
        %v1130 = vld [vmem:[%s15 + $0x30] sm:$0xff]
        %v1131 = vld [vmem:[%s15 + $0x38] sm:$0xff]
        %v1132 = vld [vmem:[%s15 + $0x40] sm:$0xff]
        %v1133 = vld [vmem:[%s15 + $0x48] sm:$0xff]
        %v1134 = vld [vmem:[%s15 + $0x50] sm:$0xff]
        %v1135 = vld [vmem:[%s15 + $0x58] sm:$0xff]
        %v1136 = vld [vmem:[%s15 + $0x60] sm:$0xff]
        %v1137 = vld [vmem:[%s15 + $0x68] sm:$0xff]
        %v1138 = vld [vmem:[%s15 + $0x70] sm:$0xff]
        %v1139 = vld [vmem:[%s15 + $0x78] sm:$0xff]
        %v1140 = vld [vmem:[#allocation10] sm:$0x1]
        %v1141 = vld [vmem:[#allocation11] sm:$0x1]
        %v1142 = vld [vmem:[#allocation13] sm:$0x1]
        %v1143 = vld [vmem:[#allocation14] sm:$0x1]
        %v1144 = vld [vmem:[#allocation16] sm:$0x1]
        %v1145 = vld [vmem:[%s27] sm:$0xff]
        %v1146 = vld [vmem:[%s27 + $0x8] sm:$0xff]
        %v1147 = vld [vmem:[%s27 + $0x10] sm:$0xff]
        %v1148 = vld [vmem:[%s27 + $0x18] sm:$0xff]
        %v1149 = vld [vmem:[%s27 + $0x20] sm:$0xff]
        %v1150 = vld [vmem:[%s27 + $0x28] sm:$0xff]
        %v1151 = vld [vmem:[%s27 + $0x30] sm:$0xff]
        %v1152 = vld [vmem:[%s27 + $0x38] sm:$0xff]
        %v1153 = vld [vmem:[%s27 + $0x40] sm:$0xff]
        %v1154 = vld [vmem:[%s27 + $0x48] sm:$0xff]
        %v1155 = vld [vmem:[%s27 + $0x50] sm:$0xff]
        %v1156 = vld [vmem:[%s27 + $0x58] sm:$0xff]
        %v1157 = vld [vmem:[%s27 + $0x60] sm:$0xff]
        %v1158 = vld [vmem:[%s27 + $0x68] sm:$0xff]
        %v1159 = vld [vmem:[%s27 + $0x70] sm:$0xff]
        %v1160 = vld [vmem:[%s27 + $0x78] sm:$0xff]
        %v1161 = vld [vmem:[%s29] sm:$0x3]
        %v1162 = vld [vmem:[#allocation17] sm:$0xff]
        %v1163 = vld [vmem:[#allocation17 + $0x8] sm:$0xff]
        %v1164 = vld [vmem:[#allocation17 + $0x10] sm:$0xff]
        %v1165 = vld [vmem:[#allocation17 + $0x18] sm:$0xff]
        %v1166 = vld [vmem:[#allocation17 + $0x20] sm:$0xff]
        %v1167 = vld [vmem:[#allocation17 + $0x28] sm:$0xff]
        %v1168 = vld [vmem:[#allocation17 + $0x30] sm:$0xff]
        %v1169 = vld [vmem:[#allocation17 + $0x38] sm:$0xff]
        %v1170 = vld [vmem:[#allocation19] sm:$0x1]
        %v1171 = vld [vmem:[#allocation20] sm:$0xff]
        %v1172 = vld [vmem:[#allocation20 + $0x8] sm:$0xff]
        %v1173 = vld [vmem:[#allocation20 + $0x10] sm:$0xff]
        %v1174 = vld [vmem:[#allocation20 + $0x18] sm:$0xff]
        %v1175 = vld [vmem:[#allocation20 + $0x20] sm:$0xff]
        %v1176 = vld [vmem:[#allocation20 + $0x28] sm:$0xff]
        %v1177 = vld [vmem:[#allocation20 + $0x30] sm:$0xff]
        %v1178 = vld [vmem:[#allocation20 + $0x38] sm:$0xff]
        %v1179 = vld [vmem:[#allocation22] sm:$0x1]
        %v1180 = vld [vmem:[%s39] sm:$0xff]
        %v1181 = vld [vmem:[%s39 + $0x8] sm:$0xff]
        %v1182 = vld [vmem:[%s39 + $0x10] sm:$0xff]
        %v1183 = vld [vmem:[%s39 + $0x18] sm:$0xff]
        %v1184 = vld [vmem:[%s39 + $0x20] sm:$0xff]
        %v1185 = vld [vmem:[%s39 + $0x28] sm:$0xff]
        %v1186 = vld [vmem:[%s39 + $0x30] sm:$0xff]
        %v1187 = vld [vmem:[%s39 + $0x38] sm:$0xff]
        %v1188 = vld [vmem:[%s39 + $0x40] sm:$0xff]
        %v1189 = vld [vmem:[%s39 + $0x48] sm:$0xff]
        %v1190 = vld [vmem:[%s39 + $0x50] sm:$0xff]
        %v1191 = vld [vmem:[%s39 + $0x58] sm:$0xff]
        %v1192 = vld [vmem:[%s39 + $0x60] sm:$0xff]
        %v1193 = vld [vmem:[%s39 + $0x68] sm:$0xff]
        %v1194 = vld [vmem:[%s39 + $0x70] sm:$0xff]
        %v1195 = vld [vmem:[%s39 + $0x78] sm:$0xff]
        %v1196 = vld [vmem:[%s41] sm:$0x1]
        %v1197 = vld [vmem:[%s43] sm:$0x1]
        %v1198 = vld [vmem:[%s45] sm:$0x1]
        %v1199 = vld [vmem:[%s47] sm:$0x1]
        %v1200 = vld [vmem:[%s49] sm:$0x1]
        %v1201 = vld [vmem:[%s51] sm:$0xff]
        %v1202 = vld [vmem:[%s51 + $0x8] sm:$0xff]
        %v1203 = vld [vmem:[%s51 + $0x10] sm:$0xff]
        %v1204 = vld [vmem:[%s51 + $0x18] sm:$0xff]
        %v1205 = vld [vmem:[%s51 + $0x20] sm:$0xff]
        %v1206 = vld [vmem:[%s51 + $0x28] sm:$0xff]
        %v1207 = vld [vmem:[%s51 + $0x30] sm:$0xff]
        %v1208 = vld [vmem:[%s51 + $0x38] sm:$0xff]
        %v1209 = vld [vmem:[%s53] sm:$0x1]
        %v1210 = vld [vmem:[#allocation23] sm:$0xff]
        %v1211 = vld [vmem:[#allocation23 + $0x8] sm:$0xff]
        %v1212 = vld [vmem:[#allocation23 + $0x10] sm:$0xff]
        %v1213 = vld [vmem:[#allocation23 + $0x18] sm:$0xff]
        %v1214 = vld [vmem:[#allocation23 + $0x20] sm:$0xff]
        %v1215 = vld [vmem:[#allocation23 + $0x28] sm:$0xff]
        %v1216 = vld [vmem:[#allocation23 + $0x30] sm:$0xff]
        %v1217 = vld [vmem:[#allocation23 + $0x38] sm:$0xff]
        %v1218 = vld [vmem:[%s57] sm:$0x1]
        %v1219 = vld [vmem:[%s962] sm:$0xff]
        %v1221 = vlaneseq
        %v1222 = vshrl.u32 %v1221, 7
        %v1223 = vsub.s32 0, %v1222
        %v1224 = vrot.slane %v1105, %v1223
        %v1225 = vlaneseq
        %v1226 = vshrl.u32 %v1225, 7
        %v1227 = vsub.s32 1, %v1226
        %v1228 = vrot.slane %v1105, %v1227
        %vm1231 = vcmask 523264
        %v1233 = vsel %vm1231, %v1219, 0
        %1235 = vmatprep.subr.mxu0 %v1090
        %1236 = vmatpush1.msra.mxu0 %v1089
        %1237 = vmatprep.subr.mxu0 %v1092
        %1238 = vmatpush1.msra.mxu0 %v1091
        %1239 = vmatprep.subr.mxu0 %v1094
        %1240 = vmatpush1.msra.mxu0 %v1093
        %1241 = vmatprep.subr.mxu0 %v1096
        %1242 = vmatpush1.msra.mxu0 %v1095
        %1243 = vmatprep.subr.mxu0 %v1098
        %1244 = vmatpush1.msra.mxu0 %v1097
        %1245 = vmatprep.subr.mxu0 %v1100
        %1246 = vmatpush1.msra.mxu0 %v1099
        %1247 = vmatprep.subr.mxu0 %v1102
        %1248 = vmatpush1.msra.mxu0 %v1101
        %1249 = vmatprep.subr.mxu0 %v1104
        %1250 = vmatpush1.msra.mxu0 %v1103
        %1251 = vmatprep.subr.mxu0 0.0
        %1252 = vmatpush1.msra.mxu0 0.0
        %1253 = vmatprep.subr.mxu0 0.0
        %1254 = vmatpush1.msra.mxu0 0.0
        %1255 = vmatprep.subr.mxu0 0.0
        %1256 = vmatpush1.msra.mxu0 0.0
        %1257 = vmatprep.subr.mxu0 0.0
        %1258 = vmatpush1.msra.mxu0 0.0
        %1259 = vmatprep.subr.mxu0 0.0
        %1260 = vmatpush1.msra.mxu0 0.0
        %1261 = vmatprep.subr.mxu0 0.0
        %1262 = vmatpush1.msra.mxu0 0.0
        %1263 = vmatprep.subr.mxu0 0.0
        %1264 = vmatpush1.msra.mxu0 0.0
        %1265 = vmatprep.subr.mxu0 0.0
        %1266 = vmatpush1.msra.mxu0 0.0
        %1267 = vmatprep.subr.mxu0 0.0
        %1268 = vmatpush1.msra.mxu0 0.0
        %1269 = vmatprep.subr.mxu0 0.0
        %1270 = vmatpush1.msra.mxu0 0.0
        %1271 = vmatprep.subr.mxu0 0.0
        %1272 = vmatpush1.msra.mxu0 0.0
        %1273 = vmatprep.subr.mxu0 0.0
        %1274 = vmatpush1.msra.mxu0 0.0
        %1275 = vmatprep.subr.mxu0 0.0
        %1276 = vmatpush1.msra.mxu0 0.0
        %1277 = vmatprep.subr.mxu0 0.0
        %1278 = vmatpush1.msra.mxu0 0.0
        %1279 = vmatprep.subr.mxu0 0.0
        %1280 = vmatpush1.msra.mxu0 0.0
        %1281 = vmatprep.subr.mxu0 0.0
        %1282 = vmatpush1.msra.mxu0 0.0
        %1283 = vmatprep.subr.mxu0 0.0
        %1284 = vmatpush1.msra.mxu0 0.0
        %1285 = vmatprep.subr.mxu0 0.0
        %1286 = vmatpush1.msra.mxu0 0.0
        %1287 = vmatprep.subr.mxu0 0.0
        %1288 = vmatpush1.msra.mxu0 0.0
        %1289 = vmatprep.subr.mxu0 0.0
        %1290 = vmatpush1.msra.mxu0 0.0
        %1291 = vmatprep.subr.mxu0 0.0
        %1292 = vmatpush1.msra.mxu0 0.0
        %1293 = vmatprep.subr.mxu0 0.0
        %1294 = vmatpush1.msra.mxu0 0.0
        %1295 = vmatprep.subr.mxu0 0.0
        %1296 = vmatpush1.msra.mxu0 0.0
        %1297 = vmatprep.subr.mxu0 0.0
        %1298 = vmatpush1.msra.mxu0 0.0
        %1299 = vmatprep.mubr.f32.mxu0 0.0
        %1300 = vmatmul.mubr.f32.gmra.mrb[0].mxu0 %v1233
        %v1301 = vpop.f32.mrb[0].mxu0
        %v1302 = vadd.f32 %v1224, %v1301
        %v1303 = vpop.f32.mrb[0].mxu0
        %v1304 = vadd.f32 %v1228, %v1303
        %1305 = vdwg.mxu0
        %1307 = vrot.lane.b32.xlu0 %v1302, 120
        %v1308 = vpop.permute.xlu0 %1307
        %1309 = vrot.lane.b32.xlu0 %v1302, 112
        %v1310 = vpop.permute.xlu0 %1309
        %1311 = vrot.lane.b32.xlu0 %v1302, 104
        %v1312 = vpop.permute.xlu0 %1311
        %1313 = vrot.lane.b32.xlu0 %v1302, 96
        %v1314 = vpop.permute.xlu0 %1313
        %1315 = vrot.lane.b32.xlu0 %v1302, 88
        %v1316 = vpop.permute.xlu0 %1315
        %1317 = vrot.lane.b32.xlu0 %v1302, 80
        %v1318 = vpop.permute.xlu0 %1317
        %1319 = vrot.lane.b32.xlu0 %v1302, 72
        %v1320 = vpop.permute.xlu0 %1319
        %1322 = vrot.lane.b32.xlu0 %v1304, 120
        %v1323 = vpop.permute.xlu0 %1322
        %1325 = vrot.lane.b32.xlu0 %v1304, 112
        %v1326 = vpop.permute.xlu0 %1325
        %1328 = vrot.lane.b32.xlu0 %v1304, 104
        %v1329 = vpop.permute.xlu0 %1328
        %1331 = vrot.lane.b32.xlu0 %v1304, 96
        %v1332 = vpop.permute.xlu0 %1331
        %1334 = vrot.lane.b32.xlu0 %v1304, 88
        %v1335 = vpop.permute.xlu0 %1334
        %1337 = vrot.lane.b32.xlu0 %v1304, 80
        %v1338 = vpop.permute.xlu0 %1337
        %1340 = vrot.lane.b32.xlu0 %v1304, 72
        %v1341 = vpop.permute.xlu0 %1340
        %1343 = vrot.lane.b32.xlu0 %v1302, 64
        %v1344 = vpop.permute.xlu0 %1343
        %vm1345 = vcmask 64512
        %v1346 = vsel %vm1345, %v1302, 0
        %v1348 = vsel %vm1345, %v1344, 0
        %1350 = vmatprep.subr.mxu0 0.0
        %1351 = vmatpush1.xpose.msra.mxu0 %v1348
        %1352 = vmatprep.subr.mxu0 0.0
        %1353 = vmatpush1.xpose.msra.mxu0 0.0
        %1354 = vmatprep.subr.mxu0 0.0
        %1355 = vmatpush1.xpose.msra.mxu0 0.0
        %1356 = vmatprep.subr.mxu0 0.0
        %1357 = vmatpush1.xpose.msra.mxu0 0.0
        %1358 = vmatprep.subr.mxu0 0.0
        %1359 = vmatpush1.xpose.msra.mxu0 0.0
        %1360 = vmatprep.subr.mxu0 0.0
        %1361 = vmatpush1.xpose.msra.mxu0 0.0
        %1362 = vmatprep.subr.mxu0 0.0
        %1363 = vmatpush1.xpose.msra.mxu0 0.0
        %1364 = vmatprep.subr.mxu0 0.0
        %1365 = vmatpush1.xpose.msra.mxu0 0.0
        %1366 = vmatprep.subr.mxu0 0.0
        %1367 = vmatpush1.xpose.msra.mxu0 0.0
        %1368 = vmatprep.subr.mxu0 0.0
        %1369 = vmatpush1.xpose.msra.mxu0 0.0
        %1370 = vmatprep.subr.mxu0 0.0
        %1371 = vmatpush1.xpose.msra.mxu0 0.0
        %1372 = vmatprep.subr.mxu0 0.0
        %1373 = vmatpush1.xpose.msra.mxu0 0.0
        %1374 = vmatprep.subr.mxu0 0.0
        %1375 = vmatpush1.xpose.msra.mxu0 0.0
        %1376 = vmatprep.subr.mxu0 0.0
        %1377 = vmatpush1.xpose.msra.mxu0 0.0
        %1378 = vmatprep.subr.mxu0 0.0
        %1379 = vmatpush1.xpose.msra.mxu0 0.0
        %1380 = vmatprep.subr.mxu0 0.0
        %1381 = vmatpush1.xpose.msra.mxu0 0.0
        %1382 = vmatprep.subr.mxu0 0.0
        %1383 = vmatpush1.xpose.msra.mxu0 0.0
        %1384 = vmatprep.subr.mxu0 0.0
        %1385 = vmatpush1.xpose.msra.mxu0 0.0
        %1386 = vmatprep.subr.mxu0 0.0
        %1387 = vmatpush1.xpose.msra.mxu0 0.0
        %1388 = vmatprep.subr.mxu0 0.0
        %1389 = vmatpush1.xpose.msra.mxu0 0.0
        %1390 = vmatprep.subr.mxu0 0.0
        %1391 = vmatpush1.xpose.msra.mxu0 0.0
        %1392 = vmatprep.subr.mxu0 0.0
        %1393 = vmatpush1.xpose.msra.mxu0 0.0
        %1394 = vmatprep.subr.mxu0 0.0
        %1395 = vmatpush1.xpose.msra.mxu0 0.0
        %1396 = vmatprep.subr.mxu0 0.0
        %1397 = vmatpush1.xpose.msra.mxu0 0.0
        %1398 = vmatprep.subr.mxu0 0.0
        %1399 = vmatpush1.xpose.msra.mxu0 0.0
        %1400 = vmatprep.subr.mxu0 0.0
        %1401 = vmatpush1.xpose.msra.mxu0 0.0
        %1402 = vmatprep.subr.mxu0 0.0
        %1403 = vmatpush1.xpose.msra.mxu0 0.0
        %1404 = vmatprep.subr.mxu0 0.0
        %1405 = vmatpush1.xpose.msra.mxu0 0.0
        %1406 = vmatprep.subr.mxu0 0.0
        %1407 = vmatpush1.xpose.msra.mxu0 0.0
        %1408 = vmatprep.subr.mxu0 0.0
        %1409 = vmatpush1.xpose.msra.mxu0 0.0
        %1410 = vmatprep.subr.mxu0 0.0
        %1411 = vmatpush1.xpose.msra.mxu0 0.0
        %1412 = vmatprep.subr.mxu0 0.0
        %1413 = vmatpush1.xpose.msra.mxu0 0.0
        %1414 = vmatprep.mubr.f32.mxu0 0.0
        %1415 = vmatmul.mubr.f32.gmra.mrb[0].mxu0 %v1346
        %v1416 = vpop.f32.mrb[0].mxu0
        %v1417 = vadd.f32 0.0, %v1416
        %v1418 = vpop.f32.mrb[0].mxu0
        %1419 = vdwg.mxu0
        %1420 = vrot.lane.b32.xlu0 %v1308, 64
        %v1421 = vpop.permute.xlu0 %1420
        %v1422 = vsel %vm1345, %v1308, 0
        %v1424 = vsel %vm1345, %v1421, 0
        %1426 = vmatprep.subr.mxu0 0.0
        %1427 = vmatpush1.xpose.msra.mxu0 %v1424
        %1428 = vmatprep.subr.mxu0 0.0
        %1429 = vmatpush1.xpose.msra.mxu0 0.0
        %1430 = vmatprep.subr.mxu0 0.0
        %1431 = vmatpush1.xpose.msra.mxu0 0.0
        %1432 = vmatprep.subr.mxu0 0.0
        %1433 = vmatpush1.xpose.msra.mxu0 0.0
        %1434 = vmatprep.subr.mxu0 0.0
        %1435 = vmatpush1.xpose.msra.mxu0 0.0
        %1436 = vmatprep.subr.mxu0 0.0
        %1437 = vmatpush1.xpose.msra.mxu0 0.0
        %1438 = vmatprep.subr.mxu0 0.0
        %1439 = vmatpush1.xpose.msra.mxu0 0.0
        %1440 = vmatprep.subr.mxu0 0.0
        %1441 = vmatpush1.xpose.msra.mxu0 0.0
        %1442 = vmatprep.subr.mxu0 0.0
        %1443 = vmatpush1.xpose.msra.mxu0 0.0
        %1444 = vmatprep.subr.mxu0 0.0
        %1445 = vmatpush1.xpose.msra.mxu0 0.0
        %1446 = vmatprep.subr.mxu0 0.0
        %1447 = vmatpush1.xpose.msra.mxu0 0.0
        %1448 = vmatprep.subr.mxu0 0.0
        %1449 = vmatpush1.xpose.msra.mxu0 0.0
        %1450 = vmatprep.subr.mxu0 0.0
        %1451 = vmatpush1.xpose.msra.mxu0 0.0
        %1452 = vmatprep.subr.mxu0 0.0
        %1453 = vmatpush1.xpose.msra.mxu0 0.0
        %1454 = vmatprep.subr.mxu0 0.0
        %1455 = vmatpush1.xpose.msra.mxu0 0.0
        %1456 = vmatprep.subr.mxu0 0.0
        %1457 = vmatpush1.xpose.msra.mxu0 0.0
        %1458 = vmatprep.subr.mxu0 0.0
        %1459 = vmatpush1.xpose.msra.mxu0 0.0
        %1460 = vmatprep.subr.mxu0 0.0
        %1461 = vmatpush1.xpose.msra.mxu0 0.0
        %1462 = vmatprep.subr.mxu0 0.0
        %1463 = vmatpush1.xpose.msra.mxu0 0.0
        %1464 = vmatprep.subr.mxu0 0.0
        %1465 = vmatpush1.xpose.msra.mxu0 0.0
        %1466 = vmatprep.subr.mxu0 0.0
        %1467 = vmatpush1.xpose.msra.mxu0 0.0
        %1468 = vmatprep.subr.mxu0 0.0
        %1469 = vmatpush1.xpose.msra.mxu0 0.0
        %1470 = vmatprep.subr.mxu0 0.0
        %1471 = vmatpush1.xpose.msra.mxu0 0.0
        %1472 = vmatprep.subr.mxu0 0.0
        %1473 = vmatpush1.xpose.msra.mxu0 0.0
        %1474 = vmatprep.subr.mxu0 0.0
        %1475 = vmatpush1.xpose.msra.mxu0 0.0
        %1476 = vmatprep.subr.mxu0 0.0
        %1477 = vmatpush1.xpose.msra.mxu0 0.0
        %1478 = vmatprep.subr.mxu0 0.0
        %1479 = vmatpush1.xpose.msra.mxu0 0.0
        %1480 = vmatprep.subr.mxu0 0.0
        %1481 = vmatpush1.xpose.msra.mxu0 0.0
        %1482 = vmatprep.subr.mxu0 0.0
        %1483 = vmatpush1.xpose.msra.mxu0 0.0
        %1484 = vmatprep.subr.mxu0 0.0
        %1485 = vmatpush1.xpose.msra.mxu0 0.0
        %1486 = vmatprep.subr.mxu0 0.0
        %1487 = vmatpush1.xpose.msra.mxu0 0.0
        %1488 = vmatprep.subr.mxu0 0.0
        %1489 = vmatpush1.xpose.msra.mxu0 0.0
        %1490 = vmatprep.mubr.f32.mxu0 0.0
        %1491 = vmatmul.mubr.f32.gmra.mrb[0].mxu0 %v1422
        %v1492 = vpop.f32.mrb[0].mxu0
        %v1493 = vadd.f32 0.0, %v1492
        %v1494 = vpop.f32.mrb[0].mxu0
        %1495 = vdwg.mxu0
        %1496 = vrot.lane.b32.xlu0 %v1310, 64
        %v1497 = vpop.permute.xlu0 %1496
        %v1498 = vsel %vm1345, %v1310, 0
        %v1500 = vsel %vm1345, %v1497, 0
        %1502 = vmatprep.subr.mxu0 0.0
        %1503 = vmatpush1.xpose.msra.mxu0 %v1500
        %1504 = vmatprep.subr.mxu0 0.0
        %1505 = vmatpush1.xpose.msra.mxu0 0.0
        %1506 = vmatprep.subr.mxu0 0.0
        %1507 = vmatpush1.xpose.msra.mxu0 0.0
        %1508 = vmatprep.subr.mxu0 0.0
        %1509 = vmatpush1.xpose.msra.mxu0 0.0
        %1510 = vmatprep.subr.mxu0 0.0
        %1511 = vmatpush1.xpose.msra.mxu0 0.0
        %1512 = vmatprep.subr.mxu0 0.0
        %1513 = vmatpush1.xpose.msra.mxu0 0.0
        %1514 = vmatprep.subr.mxu0 0.0
        %1515 = vmatpush1.xpose.msra.mxu0 0.0
        %1516 = vmatprep.subr.mxu0 0.0
        %1517 = vmatpush1.xpose.msra.mxu0 0.0
        %1518 = vmatprep.subr.mxu0 0.0
        %1519 = vmatpush1.xpose.msra.mxu0 0.0
        %1520 = vmatprep.subr.mxu0 0.0
        %1521 = vmatpush1.xpose.msra.mxu0 0.0
        %1522 = vmatprep.subr.mxu0 0.0
        %1523 = vmatpush1.xpose.msra.mxu0 0.0
        %1524 = vmatprep.subr.mxu0 0.0
        %1525 = vmatpush1.xpose.msra.mxu0 0.0
        %1526 = vmatprep.subr.mxu0 0.0
        %1527 = vmatpush1.xpose.msra.mxu0 0.0
        %1528 = vmatprep.subr.mxu0 0.0
        %1529 = vmatpush1.xpose.msra.mxu0 0.0
        %1530 = vmatprep.subr.mxu0 0.0
        %1531 = vmatpush1.xpose.msra.mxu0 0.0
        %1532 = vmatprep.subr.mxu0 0.0
        %1533 = vmatpush1.xpose.msra.mxu0 0.0
        %1534 = vmatprep.subr.mxu0 0.0
        %1535 = vmatpush1.xpose.msra.mxu0 0.0
        %1536 = vmatprep.subr.mxu0 0.0
        %1537 = vmatpush1.xpose.msra.mxu0 0.0
        %1538 = vmatprep.subr.mxu0 0.0
        %1539 = vmatpush1.xpose.msra.mxu0 0.0
        %1540 = vmatprep.subr.mxu0 0.0
        %1541 = vmatpush1.xpose.msra.mxu0 0.0
        %1542 = vmatprep.subr.mxu0 0.0
        %1543 = vmatpush1.xpose.msra.mxu0 0.0
        %1544 = vmatprep.subr.mxu0 0.0
        %1545 = vmatpush1.xpose.msra.mxu0 0.0
        %1546 = vmatprep.subr.mxu0 0.0
        %1547 = vmatpush1.xpose.msra.mxu0 0.0
        %1548 = vmatprep.subr.mxu0 0.0
        %1549 = vmatpush1.xpose.msra.mxu0 0.0
        %1550 = vmatprep.subr.mxu0 0.0
        %1551 = vmatpush1.xpose.msra.mxu0 0.0
        %1552 = vmatprep.subr.mxu0 0.0
        %1553 = vmatpush1.xpose.msra.mxu0 0.0
        %1554 = vmatprep.subr.mxu0 0.0
        %1555 = vmatpush1.xpose.msra.mxu0 0.0
        %1556 = vmatprep.subr.mxu0 0.0
        %1557 = vmatpush1.xpose.msra.mxu0 0.0
        %1558 = vmatprep.subr.mxu0 0.0
        %1559 = vmatpush1.xpose.msra.mxu0 0.0
        %1560 = vmatprep.subr.mxu0 0.0
        %1561 = vmatpush1.xpose.msra.mxu0 0.0
        %1562 = vmatprep.subr.mxu0 0.0
        %1563 = vmatpush1.xpose.msra.mxu0 0.0
        %1564 = vmatprep.subr.mxu0 0.0
        %1565 = vmatpush1.xpose.msra.mxu0 0.0
        %1566 = vmatprep.mubr.f32.mxu0 0.0
        %1567 = vmatmul.mubr.f32.gmra.mrb[0].mxu0 %v1498
        %v1568 = vpop.f32.mrb[0].mxu0
        %v1569 = vadd.f32 0.0, %v1568
        %v1570 = vpop.f32.mrb[0].mxu0
        %1571 = vdwg.mxu0
        %1572 = vrot.lane.b32.xlu0 %v1312, 64
        %v1573 = vpop.permute.xlu0 %1572
        %v1574 = vsel %vm1345, %v1312, 0
        %v1576 = vsel %vm1345, %v1573, 0
        %1578 = vmatprep.subr.mxu0 0.0
        %1579 = vmatpush1.xpose.msra.mxu0 %v1576
        %1580 = vmatprep.subr.mxu0 0.0
        %1581 = vmatpush1.xpose.msra.mxu0 0.0
        %1582 = vmatprep.subr.mxu0 0.0
        %1583 = vmatpush1.xpose.msra.mxu0 0.0
        %1584 = vmatprep.subr.mxu0 0.0
        %1585 = vmatpush1.xpose.msra.mxu0 0.0
        %1586 = vmatprep.subr.mxu0 0.0
        %1587 = vmatpush1.xpose.msra.mxu0 0.0
        %1588 = vmatprep.subr.mxu0 0.0
        %1589 = vmatpush1.xpose.msra.mxu0 0.0
        %1590 = vmatprep.subr.mxu0 0.0
        %1591 = vmatpush1.xpose.msra.mxu0 0.0
        %1592 = vmatprep.subr.mxu0 0.0
        %1593 = vmatpush1.xpose.msra.mxu0 0.0
        %1594 = vmatprep.subr.mxu0 0.0
        %1595 = vmatpush1.xpose.msra.mxu0 0.0
        %1596 = vmatprep.subr.mxu0 0.0
        %1597 = vmatpush1.xpose.msra.mxu0 0.0
        %1598 = vmatprep.subr.mxu0 0.0
        %1599 = vmatpush1.xpose.msra.mxu0 0.0
        %1600 = vmatprep.subr.mxu0 0.0
        %1601 = vmatpush1.xpose.msra.mxu0 0.0
        %1602 = vmatprep.subr.mxu0 0.0
        %1603 = vmatpush1.xpose.msra.mxu0 0.0
        %1604 = vmatprep.subr.mxu0 0.0
        %1605 = vmatpush1.xpose.msra.mxu0 0.0
        %1606 = vmatprep.subr.mxu0 0.0
        %1607 = vmatpush1.xpose.msra.mxu0 0.0
        %1608 = vmatprep.subr.mxu0 0.0
        %1609 = vmatpush1.xpose.msra.mxu0 0.0
        %1610 = vmatprep.subr.mxu0 0.0
        %1611 = vmatpush1.xpose.msra.mxu0 0.0
        %1612 = vmatprep.subr.mxu0 0.0
        %1613 = vmatpush1.xpose.msra.mxu0 0.0
        %1614 = vmatprep.subr.mxu0 0.0
        %1615 = vmatpush1.xpose.msra.mxu0 0.0
        %1616 = vmatprep.subr.mxu0 0.0
        %1617 = vmatpush1.xpose.msra.mxu0 0.0
        %1618 = vmatprep.subr.mxu0 0.0
        %1619 = vmatpush1.xpose.msra.mxu0 0.0
        %1620 = vmatprep.subr.mxu0 0.0
        %1621 = vmatpush1.xpose.msra.mxu0 0.0
        %1622 = vmatprep.subr.mxu0 0.0
        %1623 = vmatpush1.xpose.msra.mxu0 0.0
        %1624 = vmatprep.subr.mxu0 0.0
        %1625 = vmatpush1.xpose.msra.mxu0 0.0
        %1626 = vmatprep.subr.mxu0 0.0
        %1627 = vmatpush1.xpose.msra.mxu0 0.0
        %1628 = vmatprep.subr.mxu0 0.0
        %1629 = vmatpush1.xpose.msra.mxu0 0.0
        %1630 = vmatprep.subr.mxu0 0.0
        %1631 = vmatpush1.xpose.msra.mxu0 0.0
        %1632 = vmatprep.subr.mxu0 0.0
        %1633 = vmatpush1.xpose.msra.mxu0 0.0
        %1634 = vmatprep.subr.mxu0 0.0
        %1635 = vmatpush1.xpose.msra.mxu0 0.0
        %1636 = vmatprep.subr.mxu0 0.0
        %1637 = vmatpush1.xpose.msra.mxu0 0.0
        %1638 = vmatprep.subr.mxu0 0.0
        %1639 = vmatpush1.xpose.msra.mxu0 0.0
        %1640 = vmatprep.subr.mxu0 0.0
        %1641 = vmatpush1.xpose.msra.mxu0 0.0
        %1642 = vmatprep.mubr.f32.mxu0 0.0
        %1643 = vmatmul.mubr.f32.gmra.mrb[0].mxu0 %v1574
        %v1644 = vpop.f32.mrb[0].mxu0
        %v1645 = vadd.f32 0.0, %v1644
        %v1646 = vpop.f32.mrb[0].mxu0
        %1647 = vdwg.mxu0
        %1648 = vrot.lane.b32.xlu0 %v1314, 64
        %v1649 = vpop.permute.xlu0 %1648
        %v1650 = vsel %vm1345, %v1314, 0
        %v1652 = vsel %vm1345, %v1649, 0
        %1654 = vmatprep.subr.mxu0 0.0
        %1655 = vmatpush1.xpose.msra.mxu0 %v1652
        %1656 = vmatprep.subr.mxu0 0.0
        %1657 = vmatpush1.xpose.msra.mxu0 0.0
        %1658 = vmatprep.subr.mxu0 0.0
        %1659 = vmatpush1.xpose.msra.mxu0 0.0
        %1660 = vmatprep.subr.mxu0 0.0
        %1661 = vmatpush1.xpose.msra.mxu0 0.0
        %1662 = vmatprep.subr.mxu0 0.0
        %1663 = vmatpush1.xpose.msra.mxu0 0.0
        %1664 = vmatprep.subr.mxu0 0.0
        %1665 = vmatpush1.xpose.msra.mxu0 0.0
        %1666 = vmatprep.subr.mxu0 0.0
        %1667 = vmatpush1.xpose.msra.mxu0 0.0
        %1668 = vmatprep.subr.mxu0 0.0
        %1669 = vmatpush1.xpose.msra.mxu0 0.0
        %1670 = vmatprep.subr.mxu0 0.0
        %1671 = vmatpush1.xpose.msra.mxu0 0.0
        %1672 = vmatprep.subr.mxu0 0.0
        %1673 = vmatpush1.xpose.msra.mxu0 0.0
        %1674 = vmatprep.subr.mxu0 0.0
        %1675 = vmatpush1.xpose.msra.mxu0 0.0
        %1676 = vmatprep.subr.mxu0 0.0
        %1677 = vmatpush1.xpose.msra.mxu0 0.0
        %1678 = vmatprep.subr.mxu0 0.0
        %1679 = vmatpush1.xpose.msra.mxu0 0.0
        %1680 = vmatprep.subr.mxu0 0.0
        %1681 = vmatpush1.xpose.msra.mxu0 0.0
        %1682 = vmatprep.subr.mxu0 0.0
        %1683 = vmatpush1.xpose.msra.mxu0 0.0
        %1684 = vmatprep.subr.mxu0 0.0
        %1685 = vmatpush1.xpose.msra.mxu0 0.0
        %1686 = vmatprep.subr.mxu0 0.0
        %1687 = vmatpush1.xpose.msra.mxu0 0.0
        %1688 = vmatprep.subr.mxu0 0.0
        %1689 = vmatpush1.xpose.msra.mxu0 0.0
        %1690 = vmatprep.subr.mxu0 0.0
        %1691 = vmatpush1.xpose.msra.mxu0 0.0
        %1692 = vmatprep.subr.mxu0 0.0
        %1693 = vmatpush1.xpose.msra.mxu0 0.0
        %1694 = vmatprep.subr.mxu0 0.0
        %1695 = vmatpush1.xpose.msra.mxu0 0.0
        %1696 = vmatprep.subr.mxu0 0.0
        %1697 = vmatpush1.xpose.msra.mxu0 0.0
        %1698 = vmatprep.subr.mxu0 0.0
        %1699 = vmatpush1.xpose.msra.mxu0 0.0
        %1700 = vmatprep.subr.mxu0 0.0
        %1701 = vmatpush1.xpose.msra.mxu0 0.0
        %1702 = vmatprep.subr.mxu0 0.0
        %1703 = vmatpush1.xpose.msra.mxu0 0.0
        %1704 = vmatprep.subr.mxu0 0.0
        %1705 = vmatpush1.xpose.msra.mxu0 0.0
        %1706 = vmatprep.subr.mxu0 0.0
        %1707 = vmatpush1.xpose.msra.mxu0 0.0
        %1708 = vmatprep.subr.mxu0 0.0
        %1709 = vmatpush1.xpose.msra.mxu0 0.0
        %1710 = vmatprep.subr.mxu0 0.0
        %1711 = vmatpush1.xpose.msra.mxu0 0.0
        %1712 = vmatprep.subr.mxu0 0.0
        %1713 = vmatpush1.xpose.msra.mxu0 0.0
        %1714 = vmatprep.subr.mxu0 0.0
        %1715 = vmatpush1.xpose.msra.mxu0 0.0
        %1716 = vmatprep.subr.mxu0 0.0
        %1717 = vmatpush1.xpose.msra.mxu0 0.0
        %1718 = vmatprep.mubr.f32.mxu0 0.0
        %1719 = vmatmul.mubr.f32.gmra.mrb[0].mxu0 %v1650
        %v1720 = vpop.f32.mrb[0].mxu0
        %v1721 = vadd.f32 0.0, %v1720
        %v1722 = vpop.f32.mrb[0].mxu0
        %1723 = vdwg.mxu0
        %1724 = vrot.lane.b32.xlu0 %v1316, 64
        %v1725 = vpop.permute.xlu0 %1724
        %v1726 = vsel %vm1345, %v1316, 0
        %v1728 = vsel %vm1345, %v1725, 0
        %1730 = vmatprep.subr.mxu0 0.0
        %1731 = vmatpush1.xpose.msra.mxu0 %v1728
        %1732 = vmatprep.subr.mxu0 0.0
        %1733 = vmatpush1.xpose.msra.mxu0 0.0
        %1734 = vmatprep.subr.mxu0 0.0
        %1735 = vmatpush1.xpose.msra.mxu0 0.0
        %1736 = vmatprep.subr.mxu0 0.0
        %1737 = vmatpush1.xpose.msra.mxu0 0.0
        %1738 = vmatprep.subr.mxu0 0.0
        %1739 = vmatpush1.xpose.msra.mxu0 0.0
        %1740 = vmatprep.subr.mxu0 0.0
        %1741 = vmatpush1.xpose.msra.mxu0 0.0
        %1742 = vmatprep.subr.mxu0 0.0
        %1743 = vmatpush1.xpose.msra.mxu0 0.0
        %1744 = vmatprep.subr.mxu0 0.0
        %1745 = vmatpush1.xpose.msra.mxu0 0.0
        %1746 = vmatprep.subr.mxu0 0.0
        %1747 = vmatpush1.xpose.msra.mxu0 0.0
        %1748 = vmatprep.subr.mxu0 0.0
        %1749 = vmatpush1.xpose.msra.mxu0 0.0
        %1750 = vmatprep.subr.mxu0 0.0
        %1751 = vmatpush1.xpose.msra.mxu0 0.0
        %1752 = vmatprep.subr.mxu0 0.0
        %1753 = vmatpush1.xpose.msra.mxu0 0.0
        %1754 = vmatprep.subr.mxu0 0.0
        %1755 = vmatpush1.xpose.msra.mxu0 0.0
        %1756 = vmatprep.subr.mxu0 0.0
        %1757 = vmatpush1.xpose.msra.mxu0 0.0
        %1758 = vmatprep.subr.mxu0 0.0
        %1759 = vmatpush1.xpose.msra.mxu0 0.0
        %1760 = vmatprep.subr.mxu0 0.0
        %1761 = vmatpush1.xpose.msra.mxu0 0.0
        %1762 = vmatprep.subr.mxu0 0.0
        %1763 = vmatpush1.xpose.msra.mxu0 0.0
        %1764 = vmatprep.subr.mxu0 0.0
        %1765 = vmatpush1.xpose.msra.mxu0 0.0
        %1766 = vmatprep.subr.mxu0 0.0
        %1767 = vmatpush1.xpose.msra.mxu0 0.0
        %1768 = vmatprep.subr.mxu0 0.0
        %1769 = vmatpush1.xpose.msra.mxu0 0.0
        %1770 = vmatprep.subr.mxu0 0.0
        %1771 = vmatpush1.xpose.msra.mxu0 0.0
        %1772 = vmatprep.subr.mxu0 0.0
        %1773 = vmatpush1.xpose.msra.mxu0 0.0
        %1774 = vmatprep.subr.mxu0 0.0
        %1775 = vmatpush1.xpose.msra.mxu0 0.0
        %1776 = vmatprep.subr.mxu0 0.0
        %1777 = vmatpush1.xpose.msra.mxu0 0.0
        %1778 = vmatprep.subr.mxu0 0.0
        %1779 = vmatpush1.xpose.msra.mxu0 0.0
        %1780 = vmatprep.subr.mxu0 0.0
        %1781 = vmatpush1.xpose.msra.mxu0 0.0
        %1782 = vmatprep.subr.mxu0 0.0
        %1783 = vmatpush1.xpose.msra.mxu0 0.0
        %1784 = vmatprep.subr.mxu0 0.0
        %1785 = vmatpush1.xpose.msra.mxu0 0.0
        %1786 = vmatprep.subr.mxu0 0.0
        %1787 = vmatpush1.xpose.msra.mxu0 0.0
        %1788 = vmatprep.subr.mxu0 0.0
        %1789 = vmatpush1.xpose.msra.mxu0 0.0
        %1790 = vmatprep.subr.mxu0 0.0
        %1791 = vmatpush1.xpose.msra.mxu0 0.0
        %1792 = vmatprep.subr.mxu0 0.0
        %1793 = vmatpush1.xpose.msra.mxu0 0.0
        %1794 = vmatprep.mubr.f32.mxu0 0.0
        %1795 = vmatmul.mubr.f32.gmra.mrb[0].mxu0 %v1726
        %v1796 = vpop.f32.mrb[0].mxu0
        %v1797 = vadd.f32 0.0, %v1796
        %v1798 = vpop.f32.mrb[0].mxu0
        %1799 = vdwg.mxu0
        %1800 = vrot.lane.b32.xlu0 %v1318, 64
        %v1801 = vpop.permute.xlu0 %1800
        %v1802 = vsel %vm1345, %v1318, 0
        %v1804 = vsel %vm1345, %v1801, 0
        %1806 = vmatprep.subr.mxu0 0.0
        %1807 = vmatpush1.xpose.msra.mxu0 %v1804
        %1808 = vmatprep.subr.mxu0 0.0
        %1809 = vmatpush1.xpose.msra.mxu0 0.0
        %1810 = vmatprep.subr.mxu0 0.0
        %1811 = vmatpush1.xpose.msra.mxu0 0.0
        %1812 = vmatprep.subr.mxu0 0.0
        %1813 = vmatpush1.xpose.msra.mxu0 0.0
        %1814 = vmatprep.subr.mxu0 0.0
        %1815 = vmatpush1.xpose.msra.mxu0 0.0
        %1816 = vmatprep.subr.mxu0 0.0
        %1817 = vmatpush1.xpose.msra.mxu0 0.0
        %1818 = vmatprep.subr.mxu0 0.0
        %1819 = vmatpush1.xpose.msra.mxu0 0.0
        %1820 = vmatprep.subr.mxu0 0.0
        %1821 = vmatpush1.xpose.msra.mxu0 0.0
        %1822 = vmatprep.subr.mxu0 0.0
        %1823 = vmatpush1.xpose.msra.mxu0 0.0
        %1824 = vmatprep.subr.mxu0 0.0
        %1825 = vmatpush1.xpose.msra.mxu0 0.0
        %1826 = vmatprep.subr.mxu0 0.0
        %1827 = vmatpush1.xpose.msra.mxu0 0.0
        %1828 = vmatprep.subr.mxu0 0.0
        %1829 = vmatpush1.xpose.msra.mxu0 0.0
        %1830 = vmatprep.subr.mxu0 0.0
        %1831 = vmatpush1.xpose.msra.mxu0 0.0
        %1832 = vmatprep.subr.mxu0 0.0
        %1833 = vmatpush1.xpose.msra.mxu0 0.0
        %1834 = vmatprep.subr.mxu0 0.0
        %1835 = vmatpush1.xpose.msra.mxu0 0.0
        %1836 = vmatprep.subr.mxu0 0.0
        %1837 = vmatpush1.xpose.msra.mxu0 0.0
        %1838 = vmatprep.subr.mxu0 0.0
        %1839 = vmatpush1.xpose.msra.mxu0 0.0
        %1840 = vmatprep.subr.mxu0 0.0
        %1841 = vmatpush1.xpose.msra.mxu0 0.0
        %1842 = vmatprep.subr.mxu0 0.0
        %1843 = vmatpush1.xpose.msra.mxu0 0.0
        %1844 = vmatprep.subr.mxu0 0.0
        %1845 = vmatpush1.xpose.msra.mxu0 0.0
        %1846 = vmatprep.subr.mxu0 0.0
        %1847 = vmatpush1.xpose.msra.mxu0 0.0
        %1848 = vmatprep.subr.mxu0 0.0
        %1849 = vmatpush1.xpose.msra.mxu0 0.0
        %1850 = vmatprep.subr.mxu0 0.0
        %1851 = vmatpush1.xpose.msra.mxu0 0.0
        %1852 = vmatprep.subr.mxu0 0.0
        %1853 = vmatpush1.xpose.msra.mxu0 0.0
        %1854 = vmatprep.subr.mxu0 0.0
        %1855 = vmatpush1.xpose.msra.mxu0 0.0
        %1856 = vmatprep.subr.mxu0 0.0
        %1857 = vmatpush1.xpose.msra.mxu0 0.0
        %1858 = vmatprep.subr.mxu0 0.0
        %1859 = vmatpush1.xpose.msra.mxu0 0.0
        %1860 = vmatprep.subr.mxu0 0.0
        %1861 = vmatpush1.xpose.msra.mxu0 0.0
        %1862 = vmatprep.subr.mxu0 0.0
        %1863 = vmatpush1.xpose.msra.mxu0 0.0
        %1864 = vmatprep.subr.mxu0 0.0
        %1865 = vmatpush1.xpose.msra.mxu0 0.0
        %1866 = vmatprep.subr.mxu0 0.0
        %1867 = vmatpush1.xpose.msra.mxu0 0.0
        %1868 = vmatprep.subr.mxu0 0.0
        %1869 = vmatpush1.xpose.msra.mxu0 0.0
        %1870 = vmatprep.mubr.f32.mxu0 0.0
        %1871 = vmatmul.mubr.f32.gmra.mrb[0].mxu0 %v1802
        %v1872 = vpop.f32.mrb[0].mxu0
        %v1873 = vadd.f32 0.0, %v1872
        %v1874 = vpop.f32.mrb[0].mxu0
        %1875 = vdwg.mxu0
        %1876 = vrot.lane.b32.xlu0 %v1320, 64
        %v1877 = vpop.permute.xlu0 %1876
        %v1878 = vsel %vm1345, %v1320, 0
        %v1880 = vsel %vm1345, %v1877, 0
        %1882 = vmatprep.subr.mxu0 0.0
        %1883 = vmatpush1.xpose.msra.mxu0 %v1880
        %1884 = vmatprep.subr.mxu0 0.0
        %1885 = vmatpush1.xpose.msra.mxu0 0.0
        %1886 = vmatprep.subr.mxu0 0.0
        %1887 = vmatpush1.xpose.msra.mxu0 0.0
        %1888 = vmatprep.subr.mxu0 0.0
        %1889 = vmatpush1.xpose.msra.mxu0 0.0
        %1890 = vmatprep.subr.mxu0 0.0
        %1891 = vmatpush1.xpose.msra.mxu0 0.0
        %1892 = vmatprep.subr.mxu0 0.0
        %1893 = vmatpush1.xpose.msra.mxu0 0.0
        %1894 = vmatprep.subr.mxu0 0.0
        %1895 = vmatpush1.xpose.msra.mxu0 0.0
        %1896 = vmatprep.subr.mxu0 0.0
        %1897 = vmatpush1.xpose.msra.mxu0 0.0
        %1898 = vmatprep.subr.mxu0 0.0
        %1899 = vmatpush1.xpose.msra.mxu0 0.0
        %1900 = vmatprep.subr.mxu0 0.0
        %1901 = vmatpush1.xpose.msra.mxu0 0.0
        %1902 = vmatprep.subr.mxu0 0.0
        %1903 = vmatpush1.xpose.msra.mxu0 0.0
        %1904 = vmatprep.subr.mxu0 0.0
        %1905 = vmatpush1.xpose.msra.mxu0 0.0
        %1906 = vmatprep.subr.mxu0 0.0
        %1907 = vmatpush1.xpose.msra.mxu0 0.0
        %1908 = vmatprep.subr.mxu0 0.0
        %1909 = vmatpush1.xpose.msra.mxu0 0.0
        %1910 = vmatprep.subr.mxu0 0.0
        %1911 = vmatpush1.xpose.msra.mxu0 0.0
        %1912 = vmatprep.subr.mxu0 0.0
        %1913 = vmatpush1.xpose.msra.mxu0 0.0
        %1914 = vmatprep.subr.mxu0 0.0
        %1915 = vmatpush1.xpose.msra.mxu0 0.0
        %1916 = vmatprep.subr.mxu0 0.0
        %1917 = vmatpush1.xpose.msra.mxu0 0.0
        %1918 = vmatprep.subr.mxu0 0.0
        %1919 = vmatpush1.xpose.msra.mxu0 0.0
        %1920 = vmatprep.subr.mxu0 0.0
        %1921 = vmatpush1.xpose.msra.mxu0 0.0
        %1922 = vmatprep.subr.mxu0 0.0
        %1923 = vmatpush1.xpose.msra.mxu0 0.0
        %1924 = vmatprep.subr.mxu0 0.0
        %1925 = vmatpush1.xpose.msra.mxu0 0.0
        %1926 = vmatprep.subr.mxu0 0.0
        %1927 = vmatpush1.xpose.msra.mxu0 0.0
        %1928 = vmatprep.subr.mxu0 0.0
        %1929 = vmatpush1.xpose.msra.mxu0 0.0
        %1930 = vmatprep.subr.mxu0 0.0
        %1931 = vmatpush1.xpose.msra.mxu0 0.0
        %1932 = vmatprep.subr.mxu0 0.0
        %1933 = vmatpush1.xpose.msra.mxu0 0.0
        %1934 = vmatprep.subr.mxu0 0.0
        %1935 = vmatpush1.xpose.msra.mxu0 0.0
        %1936 = vmatprep.subr.mxu0 0.0
        %1937 = vmatpush1.xpose.msra.mxu0 0.0
        %1938 = vmatprep.subr.mxu0 0.0
        %1939 = vmatpush1.xpose.msra.mxu0 0.0
        %1940 = vmatprep.subr.mxu0 0.0
        %1941 = vmatpush1.xpose.msra.mxu0 0.0
        %1942 = vmatprep.subr.mxu0 0.0
        %1943 = vmatpush1.xpose.msra.mxu0 0.0
        %1944 = vmatprep.subr.mxu0 0.0
        %1945 = vmatpush1.xpose.msra.mxu0 0.0
        %1946 = vmatprep.mubr.f32.mxu0 0.0
        %1947 = vmatmul.mubr.f32.gmra.mrb[0].mxu0 %v1878
        %v1948 = vpop.f32.mrb[0].mxu0
        %v1949 = vadd.f32 0.0, %v1948
        %v1950 = vpop.f32.mrb[0].mxu0
        %1951 = vdwg.mxu0
        %v1952 = vsel %vm1345, %v1417, -inf
        %1953 = vmax.xlane.f32.xlu0 %v1952
        %v1954 = vpop.xlane.xlu0 %1953
        %v1955 = vsel %vm1345, %v1493, -inf
        %1956 = vmax.xlane.f32.xlu0 %v1955
        %v1957 = vpop.xlane.xlu0 %1956
        %v1958 = vsel %vm1345, %v1569, -inf
        %1959 = vmax.xlane.f32.xlu0 %v1958
        %v1960 = vpop.xlane.xlu0 %1959
        %v1961 = vsel %vm1345, %v1645, -inf
        %1962 = vmax.xlane.f32.xlu0 %v1961
        %v1963 = vpop.xlane.xlu0 %1962
        %v1964 = vsel %vm1345, %v1721, -inf
        %1965 = vmax.xlane.f32.xlu0 %v1964
        %v1966 = vpop.xlane.xlu0 %1965
        %v1967 = vsel %vm1345, %v1797, -inf
        %1968 = vmax.xlane.f32.xlu0 %v1967
        %v1969 = vpop.xlane.xlu0 %1968
        %v1970 = vsel %vm1345, %v1873, -inf
        %1971 = vmax.xlane.f32.xlu0 %v1970
        %v1972 = vpop.xlane.xlu0 %1971
        %v1973 = vsel %vm1345, %v1949, -inf
        %1974 = vmax.xlane.f32.xlu0 %v1973
        %v1975 = vpop.xlane.xlu0 %1974
        %v1976 = vsub.f32 %v1417, %v1954
        %v1977 = vsub.f32 %v1493, %v1957
        %v1978 = vsub.f32 %v1569, %v1960
        %v1979 = vsub.f32 %v1645, %v1963
        %v1980 = vsub.f32 %v1721, %v1966
        %v1981 = vsub.f32 %v1797, %v1969
        %v1982 = vsub.f32 %v1873, %v1972
        %v1983 = vsub.f32 %v1949, %v1975
        %v1984 = vmul.f32 %v1976, 1.442695
        %v1985 = vpow.pop %v1984
        %v1986 = vmul.f32 %v1977, 1.442695
        %v1987 = vpow.pop %v1986
        %v1988 = vmul.f32 %v1978, 1.442695
        %v1989 = vpow.pop %v1988
        %v1990 = vmul.f32 %v1979, 1.442695
        %v1991 = vpow.pop %v1990
        %v1992 = vmul.f32 %v1980, 1.442695
        %v1993 = vpow.pop %v1992
        %v1994 = vmul.f32 %v1981, 1.442695
        %v1995 = vpow.pop %v1994
        %v1996 = vmul.f32 %v1982, 1.442695
        %v1997 = vpow.pop %v1996
        %v1998 = vmul.f32 %v1983, 1.442695
        %v1999 = vpow.pop %v1998
        %v2000 = vsel %vm1345, %v1985, 0.0
        %2001 = vadd.xlane.f32.xlu0 %v2000
        %v2002 = vpop.xlane.xlu0 %2001
        %v2003 = vsel %vm1345, %v1987, 0.0
        %2004 = vadd.xlane.f32.xlu0 %v2003
        %v2005 = vpop.xlane.xlu0 %2004
        %v2006 = vsel %vm1345, %v1989, 0.0
        %2007 = vadd.xlane.f32.xlu0 %v2006
        %v2008 = vpop.xlane.xlu0 %2007
        %v2009 = vsel %vm1345, %v1991, 0.0
        %2010 = vadd.xlane.f32.xlu0 %v2009
        %v2011 = vpop.xlane.xlu0 %2010
        %v2012 = vsel %vm1345, %v1993, 0.0
        %2013 = vadd.xlane.f32.xlu0 %v2012
        %v2014 = vpop.xlane.xlu0 %2013
        %v2015 = vsel %vm1345, %v1995, 0.0
        %2016 = vadd.xlane.f32.xlu0 %v2015
        %v2017 = vpop.xlane.xlu0 %2016
        %v2018 = vsel %vm1345, %v1997, 0.0
        %2019 = vadd.xlane.f32.xlu0 %v2018
        %v2020 = vpop.xlane.xlu0 %2019
        %v2021 = vsel %vm1345, %v1999, 0.0
        %2022 = vadd.xlane.f32.xlu0 %v2021
        %v2023 = vpop.xlane.xlu0 %2022
        %v2025 = vsel %vm1345, %v1985, 0
        %2027 = vmatprep.subr.mxu0 0.0
        %2028 = vmatpush1.msra.mxu0 %v1304
        %2029 = vmatprep.subr.mxu0 0.0
        %2030 = vmatpush1.msra.mxu0 0.0
        %2031 = vmatprep.subr.mxu0 0.0
        %2032 = vmatpush1.msra.mxu0 0.0
        %2033 = vmatprep.subr.mxu0 0.0
        %2034 = vmatpush1.msra.mxu0 0.0
        %2035 = vmatprep.subr.mxu0 0.0
        %2036 = vmatpush1.msra.mxu0 0.0
        %2037 = vmatprep.subr.mxu0 0.0
        %2038 = vmatpush1.msra.mxu0 0.0
        %2039 = vmatprep.subr.mxu0 0.0
        %2040 = vmatpush1.msra.mxu0 0.0
        %2041 = vmatprep.subr.mxu0 0.0
        %2042 = vmatpush1.msra.mxu0 0.0
        %2043 = vmatprep.subr.mxu0 0.0
        %2044 = vmatpush1.msra.mxu0 0.0
        %2045 = vmatprep.subr.mxu0 0.0
        %2046 = vmatpush1.msra.mxu0 0.0
        %2047 = vmatprep.subr.mxu0 0.0
        %2048 = vmatpush1.msra.mxu0 0.0
        %2049 = vmatprep.subr.mxu0 0.0
        %2050 = vmatpush1.msra.mxu0 0.0
        %2051 = vmatprep.subr.mxu0 0.0
        %2052 = vmatpush1.msra.mxu0 0.0
        %2053 = vmatprep.subr.mxu0 0.0
        %2054 = vmatpush1.msra.mxu0 0.0
        %2055 = vmatprep.subr.mxu0 0.0
        %2056 = vmatpush1.msra.mxu0 0.0
        %2057 = vmatprep.subr.mxu0 0.0
        %2058 = vmatpush1.msra.mxu0 0.0
        %2059 = vmatprep.subr.mxu0 0.0
        %2060 = vmatpush1.msra.mxu0 0.0
        %2061 = vmatprep.subr.mxu0 0.0
        %2062 = vmatpush1.msra.mxu0 0.0
        %2063 = vmatprep.subr.mxu0 0.0
        %2064 = vmatpush1.msra.mxu0 0.0
        %2065 = vmatprep.subr.mxu0 0.0
        %2066 = vmatpush1.msra.mxu0 0.0
        %2067 = vmatprep.subr.mxu0 0.0
        %2068 = vmatpush1.msra.mxu0 0.0
        %2069 = vmatprep.subr.mxu0 0.0
        %2070 = vmatpush1.msra.mxu0 0.0
        %2071 = vmatprep.subr.mxu0 0.0
        %2072 = vmatpush1.msra.mxu0 0.0
        %2073 = vmatprep.subr.mxu0 0.0
        %2074 = vmatpush1.msra.mxu0 0.0
        %2075 = vmatprep.subr.mxu0 0.0
        %2076 = vmatpush1.msra.mxu0 0.0
        %2077 = vmatprep.subr.mxu0 0.0
        %2078 = vmatpush1.msra.mxu0 0.0
        %2079 = vmatprep.subr.mxu0 0.0
        %2080 = vmatpush1.msra.mxu0 0.0
        %2081 = vmatprep.subr.mxu0 0.0
        %2082 = vmatpush1.msra.mxu0 0.0
        %2083 = vmatprep.subr.mxu0 0.0
        %2084 = vmatpush1.msra.mxu0 0.0
        %2085 = vmatprep.subr.mxu0 0.0
        %2086 = vmatpush1.msra.mxu0 0.0
        %2087 = vmatprep.subr.mxu0 0.0
        %2088 = vmatpush1.msra.mxu0 0.0
        %2089 = vmatprep.subr.mxu0 0.0
        %2090 = vmatpush1.msra.mxu0 0.0
        %2091 = vmatprep.mubr.f32.mxu0 0.0
        %2092 = vmatmul.mubr.f32.gmra.mrb[0].mxu0 %v2025
        %v2093 = vpop.f32.mrb[0].mxu0
        %v2094 = vadd.f32 0.0, %v2093
        %v2095 = vpop.f32.mrb[0].mxu0
        %2096 = vdwg.mxu0
        %v2098 = vsel %vm1345, %v1987, 0
        %2100 = vmatprep.subr.mxu0 0.0
        %2101 = vmatpush1.msra.mxu0 %v1323
        %2102 = vmatprep.subr.mxu0 0.0
        %2103 = vmatpush1.msra.mxu0 0.0
        %2104 = vmatprep.subr.mxu0 0.0
        %2105 = vmatpush1.msra.mxu0 0.0
        %2106 = vmatprep.subr.mxu0 0.0
        %2107 = vmatpush1.msra.mxu0 0.0
        %2108 = vmatprep.subr.mxu0 0.0
        %2109 = vmatpush1.msra.mxu0 0.0
        %2110 = vmatprep.subr.mxu0 0.0
        %2111 = vmatpush1.msra.mxu0 0.0
        %2112 = vmatprep.subr.mxu0 0.0
        %2113 = vmatpush1.msra.mxu0 0.0
        %2114 = vmatprep.subr.mxu0 0.0
        %2115 = vmatpush1.msra.mxu0 0.0
        %2116 = vmatprep.subr.mxu0 0.0
        %2117 = vmatpush1.msra.mxu0 0.0
        %2118 = vmatprep.subr.mxu0 0.0
        %2119 = vmatpush1.msra.mxu0 0.0
        %2120 = vmatprep.subr.mxu0 0.0
        %2121 = vmatpush1.msra.mxu0 0.0
        %2122 = vmatprep.subr.mxu0 0.0
        %2123 = vmatpush1.msra.mxu0 0.0
        %2124 = vmatprep.subr.mxu0 0.0
        %2125 = vmatpush1.msra.mxu0 0.0
        %2126 = vmatprep.subr.mxu0 0.0
        %2127 = vmatpush1.msra.mxu0 0.0
        %2128 = vmatprep.subr.mxu0 0.0
        %2129 = vmatpush1.msra.mxu0 0.0
        %2130 = vmatprep.subr.mxu0 0.0
        %2131 = vmatpush1.msra.mxu0 0.0
        %2132 = vmatprep.subr.mxu0 0.0
        %2133 = vmatpush1.msra.mxu0 0.0
        %2134 = vmatprep.subr.mxu0 0.0
        %2135 = vmatpush1.msra.mxu0 0.0
        %2136 = vmatprep.subr.mxu0 0.0
        %2137 = vmatpush1.msra.mxu0 0.0
        %2138 = vmatprep.subr.mxu0 0.0
        %2139 = vmatpush1.msra.mxu0 0.0
        %2140 = vmatprep.subr.mxu0 0.0
        %2141 = vmatpush1.msra.mxu0 0.0
        %2142 = vmatprep.subr.mxu0 0.0
        %2143 = vmatpush1.msra.mxu0 0.0
        %2144 = vmatprep.subr.mxu0 0.0
        %2145 = vmatpush1.msra.mxu0 0.0
        %2146 = vmatprep.subr.mxu0 0.0
        %2147 = vmatpush1.msra.mxu0 0.0
        %2148 = vmatprep.subr.mxu0 0.0
        %2149 = vmatpush1.msra.mxu0 0.0
        %2150 = vmatprep.subr.mxu0 0.0
        %2151 = vmatpush1.msra.mxu0 0.0
        %2152 = vmatprep.subr.mxu0 0.0
        %2153 = vmatpush1.msra.mxu0 0.0
        %2154 = vmatprep.subr.mxu0 0.0
        %2155 = vmatpush1.msra.mxu0 0.0
        %2156 = vmatprep.subr.mxu0 0.0
        %2157 = vmatpush1.msra.mxu0 0.0
        %2158 = vmatprep.subr.mxu0 0.0
        %2159 = vmatpush1.msra.mxu0 0.0
        %2160 = vmatprep.subr.mxu0 0.0
        %2161 = vmatpush1.msra.mxu0 0.0
        %2162 = vmatprep.subr.mxu0 0.0
        %2163 = vmatpush1.msra.mxu0 0.0
        %2164 = vmatprep.mubr.f32.mxu0 0.0
        %2165 = vmatmul.mubr.f32.gmra.mrb[0].mxu0 %v2098
        %v2166 = vpop.f32.mrb[0].mxu0
        %v2167 = vadd.f32 0.0, %v2166
        %v2168 = vpop.f32.mrb[0].mxu0
        %2169 = vdwg.mxu0
        %v2171 = vsel %vm1345, %v1989, 0
        %2173 = vmatprep.subr.mxu0 0.0
        %2174 = vmatpush1.msra.mxu0 %v1326
        %2175 = vmatprep.subr.mxu0 0.0
        %2176 = vmatpush1.msra.mxu0 0.0
        %2177 = vmatprep.subr.mxu0 0.0
        %2178 = vmatpush1.msra.mxu0 0.0
        %2179 = vmatprep.subr.mxu0 0.0
        %2180 = vmatpush1.msra.mxu0 0.0
        %2181 = vmatprep.subr.mxu0 0.0
        %2182 = vmatpush1.msra.mxu0 0.0
        %2183 = vmatprep.subr.mxu0 0.0
        %2184 = vmatpush1.msra.mxu0 0.0
        %2185 = vmatprep.subr.mxu0 0.0
        %2186 = vmatpush1.msra.mxu0 0.0
        %2187 = vmatprep.subr.mxu0 0.0
        %2188 = vmatpush1.msra.mxu0 0.0
        %2189 = vmatprep.subr.mxu0 0.0
        %2190 = vmatpush1.msra.mxu0 0.0
        %2191 = vmatprep.subr.mxu0 0.0
        %2192 = vmatpush1.msra.mxu0 0.0
        %2193 = vmatprep.subr.mxu0 0.0
        %2194 = vmatpush1.msra.mxu0 0.0
        %2195 = vmatprep.subr.mxu0 0.0
        %2196 = vmatpush1.msra.mxu0 0.0
        %2197 = vmatprep.subr.mxu0 0.0
        %2198 = vmatpush1.msra.mxu0 0.0
        %2199 = vmatprep.subr.mxu0 0.0
        %2200 = vmatpush1.msra.mxu0 0.0
        %2201 = vmatprep.subr.mxu0 0.0
        %2202 = vmatpush1.msra.mxu0 0.0
        %2203 = vmatprep.subr.mxu0 0.0
        %2204 = vmatpush1.msra.mxu0 0.0
        %2205 = vmatprep.subr.mxu0 0.0
        %2206 = vmatpush1.msra.mxu0 0.0
        %2207 = vmatprep.subr.mxu0 0.0
        %2208 = vmatpush1.msra.mxu0 0.0
        %2209 = vmatprep.subr.mxu0 0.0
        %2210 = vmatpush1.msra.mxu0 0.0
        %2211 = vmatprep.subr.mxu0 0.0
        %2212 = vmatpush1.msra.mxu0 0.0
        %2213 = vmatprep.subr.mxu0 0.0
        %2214 = vmatpush1.msra.mxu0 0.0
        %2215 = vmatprep.subr.mxu0 0.0
        %2216 = vmatpush1.msra.mxu0 0.0
        %2217 = vmatprep.subr.mxu0 0.0
        %2218 = vmatpush1.msra.mxu0 0.0
        %2219 = vmatprep.subr.mxu0 0.0
        %2220 = vmatpush1.msra.mxu0 0.0
        %2221 = vmatprep.subr.mxu0 0.0
        %2222 = vmatpush1.msra.mxu0 0.0
        %2223 = vmatprep.subr.mxu0 0.0
        %2224 = vmatpush1.msra.mxu0 0.0
        %2225 = vmatprep.subr.mxu0 0.0
        %2226 = vmatpush1.msra.mxu0 0.0
        %2227 = vmatprep.subr.mxu0 0.0
        %2228 = vmatpush1.msra.mxu0 0.0
        %2229 = vmatprep.subr.mxu0 0.0
        %2230 = vmatpush1.msra.mxu0 0.0
        %2231 = vmatprep.subr.mxu0 0.0
        %2232 = vmatpush1.msra.mxu0 0.0
        %2233 = vmatprep.subr.mxu0 0.0
        %2234 = vmatpush1.msra.mxu0 0.0
        %2235 = vmatprep.subr.mxu0 0.0
        %2236 = vmatpush1.msra.mxu0 0.0
        %2237 = vmatprep.mubr.f32.mxu0 0.0
        %2238 = vmatmul.mubr.f32.gmra.mrb[0].mxu0 %v2171
        %v2239 = vpop.f32.mrb[0].mxu0
        %v2240 = vadd.f32 0.0, %v2239
        %v2241 = vpop.f32.mrb[0].mxu0
        %2242 = vdwg.mxu0
        %v2244 = vsel %vm1345, %v1991, 0
        %2246 = vmatprep.subr.mxu0 0.0
        %2247 = vmatpush1.msra.mxu0 %v1329
        %2248 = vmatprep.subr.mxu0 0.0
        %2249 = vmatpush1.msra.mxu0 0.0
        %2250 = vmatprep.subr.mxu0 0.0
        %2251 = vmatpush1.msra.mxu0 0.0
        %2252 = vmatprep.subr.mxu0 0.0
        %2253 = vmatpush1.msra.mxu0 0.0
        %2254 = vmatprep.subr.mxu0 0.0
        %2255 = vmatpush1.msra.mxu0 0.0
        %2256 = vmatprep.subr.mxu0 0.0
        %2257 = vmatpush1.msra.mxu0 0.0
        %2258 = vmatprep.subr.mxu0 0.0
        %2259 = vmatpush1.msra.mxu0 0.0
        %2260 = vmatprep.subr.mxu0 0.0
        %2261 = vmatpush1.msra.mxu0 0.0
        %2262 = vmatprep.subr.mxu0 0.0
        %2263 = vmatpush1.msra.mxu0 0.0
        %2264 = vmatprep.subr.mxu0 0.0
        %2265 = vmatpush1.msra.mxu0 0.0
        %2266 = vmatprep.subr.mxu0 0.0
        %2267 = vmatpush1.msra.mxu0 0.0
        %2268 = vmatprep.subr.mxu0 0.0
        %2269 = vmatpush1.msra.mxu0 0.0
        %2270 = vmatprep.subr.mxu0 0.0
        %2271 = vmatpush1.msra.mxu0 0.0
        %2272 = vmatprep.subr.mxu0 0.0
        %2273 = vmatpush1.msra.mxu0 0.0
        %2274 = vmatprep.subr.mxu0 0.0
        %2275 = vmatpush1.msra.mxu0 0.0
        %2276 = vmatprep.subr.mxu0 0.0
        %2277 = vmatpush1.msra.mxu0 0.0
        %2278 = vmatprep.subr.mxu0 0.0
        %2279 = vmatpush1.msra.mxu0 0.0
        %2280 = vmatprep.subr.mxu0 0.0
        %2281 = vmatpush1.msra.mxu0 0.0
        %2282 = vmatprep.subr.mxu0 0.0
        %2283 = vmatpush1.msra.mxu0 0.0
        %2284 = vmatprep.subr.mxu0 0.0
        %2285 = vmatpush1.msra.mxu0 0.0
        %2286 = vmatprep.subr.mxu0 0.0
        %2287 = vmatpush1.msra.mxu0 0.0
        %2288 = vmatprep.subr.mxu0 0.0
        %2289 = vmatpush1.msra.mxu0 0.0
        %2290 = vmatprep.subr.mxu0 0.0
        %2291 = vmatpush1.msra.mxu0 0.0
        %2292 = vmatprep.subr.mxu0 0.0
        %2293 = vmatpush1.msra.mxu0 0.0
        %2294 = vmatprep.subr.mxu0 0.0
        %2295 = vmatpush1.msra.mxu0 0.0
        %2296 = vmatprep.subr.mxu0 0.0
        %2297 = vmatpush1.msra.mxu0 0.0
        %2298 = vmatprep.subr.mxu0 0.0
        %2299 = vmatpush1.msra.mxu0 0.0
        %2300 = vmatprep.subr.mxu0 0.0
        %2301 = vmatpush1.msra.mxu0 0.0
        %2302 = vmatprep.subr.mxu0 0.0
        %2303 = vmatpush1.msra.mxu0 0.0
        %2304 = vmatprep.subr.mxu0 0.0
        %2305 = vmatpush1.msra.mxu0 0.0
        %2306 = vmatprep.subr.mxu0 0.0
        %2307 = vmatpush1.msra.mxu0 0.0
        %2308 = vmatprep.subr.mxu0 0.0
        %2309 = vmatpush1.msra.mxu0 0.0
        %2310 = vmatprep.mubr.f32.mxu0 0.0
        %2311 = vmatmul.mubr.f32.gmra.mrb[0].mxu0 %v2244
        %v2312 = vpop.f32.mrb[0].mxu0
        %v2313 = vadd.f32 0.0, %v2312
        %v2314 = vpop.f32.mrb[0].mxu0
        %2315 = vdwg.mxu0
        %v2317 = vsel %vm1345, %v1993, 0
        %2319 = vmatprep.subr.mxu0 0.0
        %2320 = vmatpush1.msra.mxu0 %v1332
        %2321 = vmatprep.subr.mxu0 0.0
        %2322 = vmatpush1.msra.mxu0 0.0
        %2323 = vmatprep.subr.mxu0 0.0
        %2324 = vmatpush1.msra.mxu0 0.0
        %2325 = vmatprep.subr.mxu0 0.0
        %2326 = vmatpush1.msra.mxu0 0.0
        %2327 = vmatprep.subr.mxu0 0.0
        %2328 = vmatpush1.msra.mxu0 0.0
        %2329 = vmatprep.subr.mxu0 0.0
        %2330 = vmatpush1.msra.mxu0 0.0
        %2331 = vmatprep.subr.mxu0 0.0
        %2332 = vmatpush1.msra.mxu0 0.0
        %2333 = vmatprep.subr.mxu0 0.0
        %2334 = vmatpush1.msra.mxu0 0.0
        %2335 = vmatprep.subr.mxu0 0.0
        %2336 = vmatpush1.msra.mxu0 0.0
        %2337 = vmatprep.subr.mxu0 0.0
        %2338 = vmatpush1.msra.mxu0 0.0
        %2339 = vmatprep.subr.mxu0 0.0
        %2340 = vmatpush1.msra.mxu0 0.0
        %2341 = vmatprep.subr.mxu0 0.0
        %2342 = vmatpush1.msra.mxu0 0.0
        %2343 = vmatprep.subr.mxu0 0.0
        %2344 = vmatpush1.msra.mxu0 0.0
        %2345 = vmatprep.subr.mxu0 0.0
        %2346 = vmatpush1.msra.mxu0 0.0
        %2347 = vmatprep.subr.mxu0 0.0
        %2348 = vmatpush1.msra.mxu0 0.0
        %2349 = vmatprep.subr.mxu0 0.0
        %2350 = vmatpush1.msra.mxu0 0.0
        %2351 = vmatprep.subr.mxu0 0.0
        %2352 = vmatpush1.msra.mxu0 0.0
        %2353 = vmatprep.subr.mxu0 0.0
        %2354 = vmatpush1.msra.mxu0 0.0
        %2355 = vmatprep.subr.mxu0 0.0
        %2356 = vmatpush1.msra.mxu0 0.0
        %2357 = vmatprep.subr.mxu0 0.0
        %2358 = vmatpush1.msra.mxu0 0.0
        %2359 = vmatprep.subr.mxu0 0.0
        %2360 = vmatpush1.msra.mxu0 0.0
        %2361 = vmatprep.subr.mxu0 0.0
        %2362 = vmatpush1.msra.mxu0 0.0
        %2363 = vmatprep.subr.mxu0 0.0
        %2364 = vmatpush1.msra.mxu0 0.0
        %2365 = vmatprep.subr.mxu0 0.0
        %2366 = vmatpush1.msra.mxu0 0.0
        %2367 = vmatprep.subr.mxu0 0.0
        %2368 = vmatpush1.msra.mxu0 0.0
        %2369 = vmatprep.subr.mxu0 0.0
        %2370 = vmatpush1.msra.mxu0 0.0
        %2371 = vmatprep.subr.mxu0 0.0
        %2372 = vmatpush1.msra.mxu0 0.0
        %2373 = vmatprep.subr.mxu0 0.0
        %2374 = vmatpush1.msra.mxu0 0.0
        %2375 = vmatprep.subr.mxu0 0.0
        %2376 = vmatpush1.msra.mxu0 0.0
        %2377 = vmatprep.subr.mxu0 0.0
        %2378 = vmatpush1.msra.mxu0 0.0
        %2379 = vmatprep.subr.mxu0 0.0
        %2380 = vmatpush1.msra.mxu0 0.0
        %2381 = vmatprep.subr.mxu0 0.0
        %2382 = vmatpush1.msra.mxu0 0.0
        %2383 = vmatprep.mubr.f32.mxu0 0.0
        %2384 = vmatmul.mubr.f32.gmra.mrb[0].mxu0 %v2317
        %v2385 = vpop.f32.mrb[0].mxu0
        %v2386 = vadd.f32 0.0, %v2385
        %v2387 = vpop.f32.mrb[0].mxu0
        %2388 = vdwg.mxu0
        %v2390 = vsel %vm1345, %v1995, 0
        %2392 = vmatprep.subr.mxu0 0.0
        %2393 = vmatpush1.msra.mxu0 %v1335
        %2394 = vmatprep.subr.mxu0 0.0
        %2395 = vmatpush1.msra.mxu0 0.0
        %2396 = vmatprep.subr.mxu0 0.0
        %2397 = vmatpush1.msra.mxu0 0.0
        %2398 = vmatprep.subr.mxu0 0.0
        %2399 = vmatpush1.msra.mxu0 0.0
        %2400 = vmatprep.subr.mxu0 0.0
        %2401 = vmatpush1.msra.mxu0 0.0
        %2402 = vmatprep.subr.mxu0 0.0
        %2403 = vmatpush1.msra.mxu0 0.0
        %2404 = vmatprep.subr.mxu0 0.0
        %2405 = vmatpush1.msra.mxu0 0.0
        %2406 = vmatprep.subr.mxu0 0.0
        %2407 = vmatpush1.msra.mxu0 0.0
        %2408 = vmatprep.subr.mxu0 0.0
        %2409 = vmatpush1.msra.mxu0 0.0
        %2410 = vmatprep.subr.mxu0 0.0
        %2411 = vmatpush1.msra.mxu0 0.0
        %2412 = vmatprep.subr.mxu0 0.0
        %2413 = vmatpush1.msra.mxu0 0.0
        %2414 = vmatprep.subr.mxu0 0.0
        %2415 = vmatpush1.msra.mxu0 0.0
        %2416 = vmatprep.subr.mxu0 0.0
        %2417 = vmatpush1.msra.mxu0 0.0
        %2418 = vmatprep.subr.mxu0 0.0
        %2419 = vmatpush1.msra.mxu0 0.0
        %2420 = vmatprep.subr.mxu0 0.0
        %2421 = vmatpush1.msra.mxu0 0.0
        %2422 = vmatprep.subr.mxu0 0.0
        %2423 = vmatpush1.msra.mxu0 0.0
        %2424 = vmatprep.subr.mxu0 0.0
        %2425 = vmatpush1.msra.mxu0 0.0
        %2426 = vmatprep.subr.mxu0 0.0
        %2427 = vmatpush1.msra.mxu0 0.0
        %2428 = vmatprep.subr.mxu0 0.0
        %2429 = vmatpush1.msra.mxu0 0.0
        %2430 = vmatprep.subr.mxu0 0.0
        %2431 = vmatpush1.msra.mxu0 0.0
        %2432 = vmatprep.subr.mxu0 0.0
        %2433 = vmatpush1.msra.mxu0 0.0
        %2434 = vmatprep.subr.mxu0 0.0
        %2435 = vmatpush1.msra.mxu0 0.0
        %2436 = vmatprep.subr.mxu0 0.0
        %2437 = vmatpush1.msra.mxu0 0.0
        %2438 = vmatprep.subr.mxu0 0.0
        %2439 = vmatpush1.msra.mxu0 0.0
        %2440 = vmatprep.subr.mxu0 0.0
        %2441 = vmatpush1.msra.mxu0 0.0
        %2442 = vmatprep.subr.mxu0 0.0
        %2443 = vmatpush1.msra.mxu0 0.0
        %2444 = vmatprep.subr.mxu0 0.0
        %2445 = vmatpush1.msra.mxu0 0.0
        %2446 = vmatprep.subr.mxu0 0.0
        %2447 = vmatpush1.msra.mxu0 0.0
        %2448 = vmatprep.subr.mxu0 0.0
        %2449 = vmatpush1.msra.mxu0 0.0
        %2450 = vmatprep.subr.mxu0 0.0
        %2451 = vmatpush1.msra.mxu0 0.0
        %2452 = vmatprep.subr.mxu0 0.0
        %2453 = vmatpush1.msra.mxu0 0.0
        %2454 = vmatprep.subr.mxu0 0.0
        %2455 = vmatpush1.msra.mxu0 0.0
        %2456 = vmatprep.mubr.f32.mxu0 0.0
        %2457 = vmatmul.mubr.f32.gmra.mrb[0].mxu0 %v2390
        %v2458 = vpop.f32.mrb[0].mxu0
        %v2459 = vadd.f32 0.0, %v2458
        %v2460 = vpop.f32.mrb[0].mxu0
        %2461 = vdwg.mxu0
        %v2463 = vsel %vm1345, %v1997, 0
        %2465 = vmatprep.subr.mxu0 0.0
        %2466 = vmatpush1.msra.mxu0 %v1338
        %2467 = vmatprep.subr.mxu0 0.0
        %2468 = vmatpush1.msra.mxu0 0.0
        %2469 = vmatprep.subr.mxu0 0.0
        %2470 = vmatpush1.msra.mxu0 0.0
        %2471 = vmatprep.subr.mxu0 0.0
        %2472 = vmatpush1.msra.mxu0 0.0
        %2473 = vmatprep.subr.mxu0 0.0
        %2474 = vmatpush1.msra.mxu0 0.0
        %2475 = vmatprep.subr.mxu0 0.0
        %2476 = vmatpush1.msra.mxu0 0.0
        %2477 = vmatprep.subr.mxu0 0.0
        %2478 = vmatpush1.msra.mxu0 0.0
        %2479 = vmatprep.subr.mxu0 0.0
        %2480 = vmatpush1.msra.mxu0 0.0
        %2481 = vmatprep.subr.mxu0 0.0
        %2482 = vmatpush1.msra.mxu0 0.0
        %2483 = vmatprep.subr.mxu0 0.0
        %2484 = vmatpush1.msra.mxu0 0.0
        %2485 = vmatprep.subr.mxu0 0.0
        %2486 = vmatpush1.msra.mxu0 0.0
        %2487 = vmatprep.subr.mxu0 0.0
        %2488 = vmatpush1.msra.mxu0 0.0
        %2489 = vmatprep.subr.mxu0 0.0
        %2490 = vmatpush1.msra.mxu0 0.0
        %2491 = vmatprep.subr.mxu0 0.0
        %2492 = vmatpush1.msra.mxu0 0.0
        %2493 = vmatprep.subr.mxu0 0.0
        %2494 = vmatpush1.msra.mxu0 0.0
        %2495 = vmatprep.subr.mxu0 0.0
        %2496 = vmatpush1.msra.mxu0 0.0
        %2497 = vmatprep.subr.mxu0 0.0
        %2498 = vmatpush1.msra.mxu0 0.0
        %2499 = vmatprep.subr.mxu0 0.0
        %2500 = vmatpush1.msra.mxu0 0.0
        %2501 = vmatprep.subr.mxu0 0.0
        %2502 = vmatpush1.msra.mxu0 0.0
        %2503 = vmatprep.subr.mxu0 0.0
        %2504 = vmatpush1.msra.mxu0 0.0
        %2505 = vmatprep.subr.mxu0 0.0
        %2506 = vmatpush1.msra.mxu0 0.0
        %2507 = vmatprep.subr.mxu0 0.0
        %2508 = vmatpush1.msra.mxu0 0.0
        %2509 = vmatprep.subr.mxu0 0.0
        %2510 = vmatpush1.msra.mxu0 0.0
        %2511 = vmatprep.subr.mxu0 0.0
        %2512 = vmatpush1.msra.mxu0 0.0
        %2513 = vmatprep.subr.mxu0 0.0
        %2514 = vmatpush1.msra.mxu0 0.0
        %2515 = vmatprep.subr.mxu0 0.0
        %2516 = vmatpush1.msra.mxu0 0.0
        %2517 = vmatprep.subr.mxu0 0.0
        %2518 = vmatpush1.msra.mxu0 0.0
        %2519 = vmatprep.subr.mxu0 0.0
        %2520 = vmatpush1.msra.mxu0 0.0
        %2521 = vmatprep.subr.mxu0 0.0
        %2522 = vmatpush1.msra.mxu0 0.0
        %2523 = vmatprep.subr.mxu0 0.0
        %2524 = vmatpush1.msra.mxu0 0.0
        %2525 = vmatprep.subr.mxu0 0.0
        %2526 = vmatpush1.msra.mxu0 0.0
        %2527 = vmatprep.subr.mxu0 0.0
        %2528 = vmatpush1.msra.mxu0 0.0
        %2529 = vmatprep.mubr.f32.mxu0 0.0
        %2530 = vmatmul.mubr.f32.gmra.mrb[0].mxu0 %v2463
        %v2531 = vpop.f32.mrb[0].mxu0
        %v2532 = vadd.f32 0.0, %v2531
        %v2533 = vpop.f32.mrb[0].mxu0
        %2534 = vdwg.mxu0
        %v2536 = vsel %vm1345, %v1999, 0
        %2538 = vmatprep.subr.mxu0 0.0
        %2539 = vmatpush1.msra.mxu0 %v1341
        %2540 = vmatprep.subr.mxu0 0.0
        %2541 = vmatpush1.msra.mxu0 0.0
        %2542 = vmatprep.subr.mxu0 0.0
        %2543 = vmatpush1.msra.mxu0 0.0
        %2544 = vmatprep.subr.mxu0 0.0
        %2545 = vmatpush1.msra.mxu0 0.0
        %2546 = vmatprep.subr.mxu0 0.0
        %2547 = vmatpush1.msra.mxu0 0.0
        %2548 = vmatprep.subr.mxu0 0.0
        %2549 = vmatpush1.msra.mxu0 0.0
        %2550 = vmatprep.subr.mxu0 0.0
        %2551 = vmatpush1.msra.mxu0 0.0
        %2552 = vmatprep.subr.mxu0 0.0
        %2553 = vmatpush1.msra.mxu0 0.0
        %2554 = vmatprep.subr.mxu0 0.0
        %2555 = vmatpush1.msra.mxu0 0.0
        %2556 = vmatprep.subr.mxu0 0.0
        %2557 = vmatpush1.msra.mxu0 0.0
        %2558 = vmatprep.subr.mxu0 0.0
        %2559 = vmatpush1.msra.mxu0 0.0
        %2560 = vmatprep.subr.mxu0 0.0
        %2561 = vmatpush1.msra.mxu0 0.0
        %2562 = vmatprep.subr.mxu0 0.0
        %2563 = vmatpush1.msra.mxu0 0.0
        %2564 = vmatprep.subr.mxu0 0.0
        %2565 = vmatpush1.msra.mxu0 0.0
        %2566 = vmatprep.subr.mxu0 0.0
        %2567 = vmatpush1.msra.mxu0 0.0
        %2568 = vmatprep.subr.mxu0 0.0
        %2569 = vmatpush1.msra.mxu0 0.0
        %2570 = vmatprep.subr.mxu0 0.0
        %2571 = vmatpush1.msra.mxu0 0.0
        %2572 = vmatprep.subr.mxu0 0.0
        %2573 = vmatpush1.msra.mxu0 0.0
        %2574 = vmatprep.subr.mxu0 0.0
        %2575 = vmatpush1.msra.mxu0 0.0
        %2576 = vmatprep.subr.mxu0 0.0
        %2577 = vmatpush1.msra.mxu0 0.0
        %2578 = vmatprep.subr.mxu0 0.0
        %2579 = vmatpush1.msra.mxu0 0.0
        %2580 = vmatprep.subr.mxu0 0.0
        %2581 = vmatpush1.msra.mxu0 0.0
        %2582 = vmatprep.subr.mxu0 0.0
        %2583 = vmatpush1.msra.mxu0 0.0
        %2584 = vmatprep.subr.mxu0 0.0
        %2585 = vmatpush1.msra.mxu0 0.0
        %2586 = vmatprep.subr.mxu0 0.0
        %2587 = vmatpush1.msra.mxu0 0.0
        %2588 = vmatprep.subr.mxu0 0.0
        %2589 = vmatpush1.msra.mxu0 0.0
        %2590 = vmatprep.subr.mxu0 0.0
        %2591 = vmatpush1.msra.mxu0 0.0
        %2592 = vmatprep.subr.mxu0 0.0
        %2593 = vmatpush1.msra.mxu0 0.0
        %2594 = vmatprep.subr.mxu0 0.0
        %2595 = vmatpush1.msra.mxu0 0.0
        %2596 = vmatprep.subr.mxu0 0.0
        %2597 = vmatpush1.msra.mxu0 0.0
        %2598 = vmatprep.subr.mxu0 0.0
        %2599 = vmatpush1.msra.mxu0 0.0
        %2600 = vmatprep.subr.mxu0 0.0
        %2601 = vmatpush1.msra.mxu0 0.0
        %2602 = vmatprep.mubr.f32.mxu0 0.0
        %2603 = vmatmul.mubr.f32.gmra.mrb[0].mxu0 %v2536
        %v2604 = vpop.f32.mrb[0].mxu0
        %v2605 = vadd.f32 0.0, %v2604
        %v2606 = vpop.f32.mrb[0].mxu0
        %2607 = vdwg.mxu0
        %v2608 = vrcp.pop %v2002
        %v2609 = vrcp.pop %v2005
        %v2610 = vrcp.pop %v2008
        %v2611 = vrcp.pop %v2011
        %v2612 = vrcp.pop %v2014
        %v2613 = vrcp.pop %v2017
        %v2614 = vrcp.pop %v2020
        %v2615 = vrcp.pop %v2023
        %v2616 = vmul.f32 %v2094, %v2608
        %v2617 = vmul.f32 %v2167, %v2609
        %v2618 = vmul.f32 %v2240, %v2610
        %v2619 = vmul.f32 %v2313, %v2611
        %v2620 = vmul.f32 %v2386, %v2612
        %v2621 = vmul.f32 %v2459, %v2613
        %v2622 = vmul.f32 %v2532, %v2614
        %v2623 = vmul.f32 %v2605, %v2615
        %2625 = vrot.lane.b32.xlu0 %v2617, 8
        %v2626 = vpop.permute.xlu0 %2625
        %2629 = vrot.lane.b32.xlu0 %v2618, 16
        %v2630 = vpop.permute.xlu0 %2629
        %2633 = vrot.lane.b32.xlu0 %v2619, 24
        %v2634 = vpop.permute.xlu0 %2633
        %2637 = vrot.lane.b32.xlu0 %v2620, 32
        %v2638 = vpop.permute.xlu0 %2637
        %2641 = vrot.lane.b32.xlu0 %v2621, 40
        %v2642 = vpop.permute.xlu0 %2641
        %2645 = vrot.lane.b32.xlu0 %v2622, 48
        %v2646 = vpop.permute.xlu0 %2645
        %2649 = vrot.lane.b32.xlu0 %v2623, 56
        %v2650 = vpop.permute.xlu0 %2649
        %v2652 = vsel %vm1345, %v2616, %v2626
        %vm2653 = vcmask 130048
        %v2654 = vsel %vm2653, %v2652, %v2630
        %vm2655 = vcmask 195584
        %v2656 = vsel %vm2655, %v2654, %v2634
        %vm2657 = vcmask 261120
        %v2658 = vsel %vm2657, %v2656, %v2638
        %vm2659 = vcmask 326656
        %v2660 = vsel %vm2659, %v2658, %v2642
        %vm2661 = vcmask 392192
        %v2662 = vsel %vm2661, %v2660, %v2646
        %vm2663 = vcmask 457728
        %v2664 = vsel %vm2663, %v2662, %v2650
        %v2666 = vlaneseq
        %v2667 = vshrl.u32 %v2666, 7
        %v2668 = vsub.s32 0, %v2667
        %v2669 = vrot.slane %v1114, %v2668
        %v2672 = vsel %vm1231, %v2664, 0
        %2674 = vmatprep.subr.mxu0 0.0
        %2675 = vmatpush1.msra.mxu0 %v1106
        %2676 = vmatprep.subr.mxu0 0.0
        %2677 = vmatpush1.msra.mxu0 %v1107
        %2678 = vmatprep.subr.mxu0 0.0
        %2679 = vmatpush1.msra.mxu0 %v1108
        %2680 = vmatprep.subr.mxu0 0.0
        %2681 = vmatpush1.msra.mxu0 %v1109
        %2682 = vmatprep.subr.mxu0 0.0
        %2683 = vmatpush1.msra.mxu0 %v1110
        %2684 = vmatprep.subr.mxu0 0.0
        %2685 = vmatpush1.msra.mxu0 %v1111
        %2686 = vmatprep.subr.mxu0 0.0
        %2687 = vmatpush1.msra.mxu0 %v1112
        %2688 = vmatprep.subr.mxu0 0.0
        %2689 = vmatpush1.msra.mxu0 %v1113
        %2690 = vmatprep.subr.mxu0 0.0
        %2691 = vmatpush1.msra.mxu0 0.0
        %2692 = vmatprep.subr.mxu0 0.0
        %2693 = vmatpush1.msra.mxu0 0.0
        %2694 = vmatprep.subr.mxu0 0.0
        %2695 = vmatpush1.msra.mxu0 0.0
        %2696 = vmatprep.subr.mxu0 0.0
        %2697 = vmatpush1.msra.mxu0 0.0
        %2698 = vmatprep.subr.mxu0 0.0
        %2699 = vmatpush1.msra.mxu0 0.0
        %2700 = vmatprep.subr.mxu0 0.0
        %2701 = vmatpush1.msra.mxu0 0.0
        %2702 = vmatprep.subr.mxu0 0.0
        %2703 = vmatpush1.msra.mxu0 0.0
        %2704 = vmatprep.subr.mxu0 0.0
        %2705 = vmatpush1.msra.mxu0 0.0
        %2706 = vmatprep.subr.mxu0 0.0
        %2707 = vmatpush1.msra.mxu0 0.0
        %2708 = vmatprep.subr.mxu0 0.0
        %2709 = vmatpush1.msra.mxu0 0.0
        %2710 = vmatprep.subr.mxu0 0.0
        %2711 = vmatpush1.msra.mxu0 0.0
        %2712 = vmatprep.subr.mxu0 0.0
        %2713 = vmatpush1.msra.mxu0 0.0
        %2714 = vmatprep.subr.mxu0 0.0
        %2715 = vmatpush1.msra.mxu0 0.0
        %2716 = vmatprep.subr.mxu0 0.0
        %2717 = vmatpush1.msra.mxu0 0.0
        %2718 = vmatprep.subr.mxu0 0.0
        %2719 = vmatpush1.msra.mxu0 0.0
        %2720 = vmatprep.subr.mxu0 0.0
        %2721 = vmatpush1.msra.mxu0 0.0
        %2722 = vmatprep.subr.mxu0 0.0
        %2723 = vmatpush1.msra.mxu0 0.0
        %2724 = vmatprep.subr.mxu0 0.0
        %2725 = vmatpush1.msra.mxu0 0.0
        %2726 = vmatprep.subr.mxu0 0.0
        %2727 = vmatpush1.msra.mxu0 0.0
        %2728 = vmatprep.subr.mxu0 0.0
        %2729 = vmatpush1.msra.mxu0 0.0
        %2730 = vmatprep.subr.mxu0 0.0
        %2731 = vmatpush1.msra.mxu0 0.0
        %2732 = vmatprep.subr.mxu0 0.0
        %2733 = vmatpush1.msra.mxu0 0.0
        %2734 = vmatprep.subr.mxu0 0.0
        %2735 = vmatpush1.msra.mxu0 0.0
        %2736 = vmatprep.subr.mxu0 0.0
        %2737 = vmatpush1.msra.mxu0 0.0
        %2738 = vmatprep.mubr.f32.mxu0 0.0
        %2739 = vmatmul.mubr.f32.gmra.mrb[0].mxu0 %v2672
        %v2740 = vpop.f32.mrb[0].mxu0
        %v2741 = vadd.f32 %v2669, %v2740
        %v2742 = vpop.f32.mrb[0].mxu0
        %2743 = vdwg.mxu0
        %v2744 = vadd.f32 %v1219, %v2741
        %v2745 = vsel %vm1231, %v2744, 0.0
        %2746 = vadd.xlane.f32.xlu0 %v2745
        %v2747 = vpop.xlane.xlu0 %2746
        %v2748 = vrcp.pop 64.0
        %v2749 = vmul.f32 %v2747, %v2748
        %v2750 = vsub.f32 %v2744, %v2749
        %v2751 = vmul.f32 %v2750, %v2750
        %v2752 = vsel %vm1231, %v2751, 0.0
        %2753 = vadd.xlane.f32.xlu0 %v2752
        %v2754 = vpop.xlane.xlu0 %2753
        %v2755 = vmul.f32 %v2754, %v2748
        %v2756 = vadd.f32 %v2755, 1e-05
        %v2757 = vrsqrt.pop %v2756
        %v2758 = vmul.f32 %v2750, %v2757
        %v2760 = vlaneseq
        %v2761 = vshrl.u32 %v2760, 7
        %v2762 = vsub.s32 0, %v2761
        %v2763 = vrot.slane %v1141, %v2762
        %v2765 = vmul.f32 %v2758, %v2763
        %v2767 = vlaneseq
        %v2768 = vshrl.u32 %v2767, 7
        %v2769 = vsub.s32 0, %v2768
        %v2770 = vrot.slane %v1142, %v2769
        %v2772 = vadd.f32 %v2765, %v2770
        %v2774 = vlaneseq
        %v2775 = vshrl.u32 %v2774, 7
        %v2776 = vsub.s32 0, %v2775
        %v2777 = vrot.slane %v1123, %v2776
        %v2780 = vsel %vm1231, %v2772, 0
        %2782 = vmatprep.subr.mxu0 0.0
        %2783 = vmatpush1.msra.mxu0 %v1115
        %2784 = vmatprep.subr.mxu0 0.0
        %2785 = vmatpush1.msra.mxu0 %v1116
        %2786 = vmatprep.subr.mxu0 0.0
        %2787 = vmatpush1.msra.mxu0 %v1117
        %2788 = vmatprep.subr.mxu0 0.0
        %2789 = vmatpush1.msra.mxu0 %v1118
        %2790 = vmatprep.subr.mxu0 0.0
        %2791 = vmatpush1.msra.mxu0 %v1119
        %2792 = vmatprep.subr.mxu0 0.0
        %2793 = vmatpush1.msra.mxu0 %v1120
        %2794 = vmatprep.subr.mxu0 0.0
        %2795 = vmatpush1.msra.mxu0 %v1121
        %2796 = vmatprep.subr.mxu0 0.0
        %2797 = vmatpush1.msra.mxu0 %v1122
        %2798 = vmatprep.subr.mxu0 0.0
        %2799 = vmatpush1.msra.mxu0 0.0
        %2800 = vmatprep.subr.mxu0 0.0
        %2801 = vmatpush1.msra.mxu0 0.0
        %2802 = vmatprep.subr.mxu0 0.0
        %2803 = vmatpush1.msra.mxu0 0.0
        %2804 = vmatprep.subr.mxu0 0.0
        %2805 = vmatpush1.msra.mxu0 0.0
        %2806 = vmatprep.subr.mxu0 0.0
        %2807 = vmatpush1.msra.mxu0 0.0
        %2808 = vmatprep.subr.mxu0 0.0
        %2809 = vmatpush1.msra.mxu0 0.0
        %2810 = vmatprep.subr.mxu0 0.0
        %2811 = vmatpush1.msra.mxu0 0.0
        %2812 = vmatprep.subr.mxu0 0.0
        %2813 = vmatpush1.msra.mxu0 0.0
        %2814 = vmatprep.subr.mxu0 0.0
        %2815 = vmatpush1.msra.mxu0 0.0
        %2816 = vmatprep.subr.mxu0 0.0
        %2817 = vmatpush1.msra.mxu0 0.0
        %2818 = vmatprep.subr.mxu0 0.0
        %2819 = vmatpush1.msra.mxu0 0.0
        %2820 = vmatprep.subr.mxu0 0.0
        %2821 = vmatpush1.msra.mxu0 0.0
        %2822 = vmatprep.subr.mxu0 0.0
        %2823 = vmatpush1.msra.mxu0 0.0
        %2824 = vmatprep.subr.mxu0 0.0
        %2825 = vmatpush1.msra.mxu0 0.0
        %2826 = vmatprep.subr.mxu0 0.0
        %2827 = vmatpush1.msra.mxu0 0.0
        %2828 = vmatprep.subr.mxu0 0.0
        %2829 = vmatpush1.msra.mxu0 0.0
        %2830 = vmatprep.subr.mxu0 0.0
        %2831 = vmatpush1.msra.mxu0 0.0
        %2832 = vmatprep.subr.mxu0 0.0
        %2833 = vmatpush1.msra.mxu0 0.0
        %2834 = vmatprep.subr.mxu0 0.0
        %2835 = vmatpush1.msra.mxu0 0.0
        %2836 = vmatprep.subr.mxu0 0.0
        %2837 = vmatpush1.msra.mxu0 0.0
        %2838 = vmatprep.subr.mxu0 0.0
        %2839 = vmatpush1.msra.mxu0 0.0
        %2840 = vmatprep.subr.mxu0 0.0
        %2841 = vmatpush1.msra.mxu0 0.0
        %2842 = vmatprep.subr.mxu0 0.0
        %2843 = vmatpush1.msra.mxu0 0.0
        %2844 = vmatprep.subr.mxu0 0.0
        %2845 = vmatpush1.msra.mxu0 0.0
        %2846 = vmatprep.mubr.f32.mxu0 0.0
        %2847 = vmatmul.mubr.f32.gmra.mrb[0].mxu0 %v2780
        %v2848 = vpop.f32.mrb[0].mxu0
        %v2849 = vadd.f32 %v2777, %v2848
        %v2850 = vpop.f32.mrb[0].mxu0
        %2851 = vdwg.mxu0
        %v2852 = vmax.f32 %v2849, 0.0
        %v2854 = vlaneseq
        %v2855 = vshrl.u32 %v2854, 7
        %v2856 = vsub.s32 0, %v2855
        %v2857 = vrot.slane %v1140, %v2856
        %2859 = vmatprep.subr.mxu0 0.0
        %2860 = vmatpush1.msra.mxu0 %v1124
        %2861 = vmatprep.subr.mxu0 0.0
        %2862 = vmatpush1.msra.mxu0 %v1125
        %2863 = vmatprep.subr.mxu0 0.0
        %2864 = vmatpush1.msra.mxu0 %v1126
        %2865 = vmatprep.subr.mxu0 0.0
        %2866 = vmatpush1.msra.mxu0 %v1127
        %2867 = vmatprep.subr.mxu0 0.0
        %2868 = vmatpush1.msra.mxu0 %v1128
        %2869 = vmatprep.subr.mxu0 0.0
        %2870 = vmatpush1.msra.mxu0 %v1129
        %2871 = vmatprep.subr.mxu0 0.0
        %2872 = vmatpush1.msra.mxu0 %v1130
        %2873 = vmatprep.subr.mxu0 0.0
        %2874 = vmatpush1.msra.mxu0 %v1131
        %2875 = vmatprep.subr.mxu0 0.0
        %2876 = vmatpush1.msra.mxu0 %v1132
        %2877 = vmatprep.subr.mxu0 0.0
        %2878 = vmatpush1.msra.mxu0 %v1133
        %2879 = vmatprep.subr.mxu0 0.0
        %2880 = vmatpush1.msra.mxu0 %v1134
        %2881 = vmatprep.subr.mxu0 0.0
        %2882 = vmatpush1.msra.mxu0 %v1135
        %2883 = vmatprep.subr.mxu0 0.0
        %2884 = vmatpush1.msra.mxu0 %v1136
        %2885 = vmatprep.subr.mxu0 0.0
        %2886 = vmatpush1.msra.mxu0 %v1137
        %2887 = vmatprep.subr.mxu0 0.0
        %2888 = vmatpush1.msra.mxu0 %v1138
        %2889 = vmatprep.subr.mxu0 0.0
        %2890 = vmatpush1.msra.mxu0 %v1139
        %2891 = vmatprep.subr.mxu0 0.0
        %2892 = vmatpush1.msra.mxu0 0.0
        %2893 = vmatprep.subr.mxu0 0.0
        %2894 = vmatpush1.msra.mxu0 0.0
        %2895 = vmatprep.subr.mxu0 0.0
        %2896 = vmatpush1.msra.mxu0 0.0
        %2897 = vmatprep.subr.mxu0 0.0
        %2898 = vmatpush1.msra.mxu0 0.0
        %2899 = vmatprep.subr.mxu0 0.0
        %2900 = vmatpush1.msra.mxu0 0.0
        %2901 = vmatprep.subr.mxu0 0.0
        %2902 = vmatpush1.msra.mxu0 0.0
        %2903 = vmatprep.subr.mxu0 0.0
        %2904 = vmatpush1.msra.mxu0 0.0
        %2905 = vmatprep.subr.mxu0 0.0
        %2906 = vmatpush1.msra.mxu0 0.0
        %2907 = vmatprep.subr.mxu0 0.0
        %2908 = vmatpush1.msra.mxu0 0.0
        %2909 = vmatprep.subr.mxu0 0.0
        %2910 = vmatpush1.msra.mxu0 0.0
        %2911 = vmatprep.subr.mxu0 0.0
        %2912 = vmatpush1.msra.mxu0 0.0
        %2913 = vmatprep.subr.mxu0 0.0
        %2914 = vmatpush1.msra.mxu0 0.0
        %2915 = vmatprep.subr.mxu0 0.0
        %2916 = vmatpush1.msra.mxu0 0.0
        %2917 = vmatprep.subr.mxu0 0.0
        %2918 = vmatpush1.msra.mxu0 0.0
        %2919 = vmatprep.subr.mxu0 0.0
        %2920 = vmatpush1.msra.mxu0 0.0
        %2921 = vmatprep.subr.mxu0 0.0
        %2922 = vmatpush1.msra.mxu0 0.0
        %2923 = vmatprep.mubr.f32.mxu0 0.0
        %2924 = vmatmul.mubr.f32.gmra.mrb[0].mxu0 %v2852
        %v2925 = vpop.f32.mrb[0].mxu0
        %v2926 = vadd.f32 %v2857, %v2925
        %v2927 = vpop.f32.mrb[0].mxu0
        %2928 = vdwg.mxu0
        %v2929 = vadd.f32 %v2772, %v2926
        %v2930 = vsel %vm1231, %v2929, 0.0
        %2931 = vadd.xlane.f32.xlu0 %v2930
        %v2932 = vpop.xlane.xlu0 %2931
        %v2933 = vmul.f32 %v2932, %v2748
        %v2934 = vsub.f32 %v2929, %v2933
        %v2935 = vmul.f32 %v2934, %v2934
        %v2936 = vsel %vm1231, %v2935, 0.0
        %2937 = vadd.xlane.f32.xlu0 %v2936
        %v2938 = vpop.xlane.xlu0 %2937
        %v2939 = vmul.f32 %v2938, %v2748
        %v2940 = vadd.f32 %v2939, 1e-05
        %v2941 = vrsqrt.pop %v2940
        %v2942 = vmul.f32 %v2934, %v2941
        %v2944 = vlaneseq
        %v2945 = vshrl.u32 %v2944, 7
        %v2946 = vsub.s32 0, %v2945
        %v2947 = vrot.slane %v1143, %v2946
        %v2949 = vmul.f32 %v2942, %v2947
        %v2951 = vlaneseq
        %v2952 = vshrl.u32 %v2951, 7
        %v2953 = vsub.s32 0, %v2952
        %v2954 = vrot.slane %v1144, %v2953
        %v2956 = vadd.f32 %v2949, %v2954
        %v2958 = vlaneseq
        %v2959 = vshrl.u32 %v2958, 7
        %v2960 = vsub.s32 0, %v2959
        %v2961 = vrot.slane %v1161, %v2960
        %v2962 = vlaneseq
        %v2963 = vshrl.u32 %v2962, 7
        %v2964 = vsub.s32 1, %v2963
        %v2965 = vrot.slane %v1161, %v2964
        %v2969 = vsel %vm1231, %v2956, 0
        %2971 = vmatprep.subr.mxu0 %v1146
        %2972 = vmatpush1.msra.mxu0 %v1145
        %2973 = vmatprep.subr.mxu0 %v1148
        %2974 = vmatpush1.msra.mxu0 %v1147
        %2975 = vmatprep.subr.mxu0 %v1150
        %2976 = vmatpush1.msra.mxu0 %v1149
        %2977 = vmatprep.subr.mxu0 %v1152
        %2978 = vmatpush1.msra.mxu0 %v1151
        %2979 = vmatprep.subr.mxu0 %v1154
        %2980 = vmatpush1.msra.mxu0 %v1153
        %2981 = vmatprep.subr.mxu0 %v1156
        %2982 = vmatpush1.msra.mxu0 %v1155
        %2983 = vmatprep.subr.mxu0 %v1158
        %2984 = vmatpush1.msra.mxu0 %v1157
        %2985 = vmatprep.subr.mxu0 %v1160
        %2986 = vmatpush1.msra.mxu0 %v1159
        %2987 = vmatprep.subr.mxu0 0.0
        %2988 = vmatpush1.msra.mxu0 0.0
        %2989 = vmatprep.subr.mxu0 0.0
        %2990 = vmatpush1.msra.mxu0 0.0
        %2991 = vmatprep.subr.mxu0 0.0
        %2992 = vmatpush1.msra.mxu0 0.0
        %2993 = vmatprep.subr.mxu0 0.0
        %2994 = vmatpush1.msra.mxu0 0.0
        %2995 = vmatprep.subr.mxu0 0.0
        %2996 = vmatpush1.msra.mxu0 0.0
        %2997 = vmatprep.subr.mxu0 0.0
        %2998 = vmatpush1.msra.mxu0 0.0
        %2999 = vmatprep.subr.mxu0 0.0
        %3000 = vmatpush1.msra.mxu0 0.0
        %3001 = vmatprep.subr.mxu0 0.0
        %3002 = vmatpush1.msra.mxu0 0.0
        %3003 = vmatprep.subr.mxu0 0.0
        %3004 = vmatpush1.msra.mxu0 0.0
        %3005 = vmatprep.subr.mxu0 0.0
        %3006 = vmatpush1.msra.mxu0 0.0
        %3007 = vmatprep.subr.mxu0 0.0
        %3008 = vmatpush1.msra.mxu0 0.0
        %3009 = vmatprep.subr.mxu0 0.0
        %3010 = vmatpush1.msra.mxu0 0.0
        %3011 = vmatprep.subr.mxu0 0.0
        %3012 = vmatpush1.msra.mxu0 0.0
        %3013 = vmatprep.subr.mxu0 0.0
        %3014 = vmatpush1.msra.mxu0 0.0
        %3015 = vmatprep.subr.mxu0 0.0
        %3016 = vmatpush1.msra.mxu0 0.0
        %3017 = vmatprep.subr.mxu0 0.0
        %3018 = vmatpush1.msra.mxu0 0.0
        %3019 = vmatprep.subr.mxu0 0.0
        %3020 = vmatpush1.msra.mxu0 0.0
        %3021 = vmatprep.subr.mxu0 0.0
        %3022 = vmatpush1.msra.mxu0 0.0
        %3023 = vmatprep.subr.mxu0 0.0
        %3024 = vmatpush1.msra.mxu0 0.0
        %3025 = vmatprep.subr.mxu0 0.0
        %3026 = vmatpush1.msra.mxu0 0.0
        %3027 = vmatprep.subr.mxu0 0.0
        %3028 = vmatpush1.msra.mxu0 0.0
        %3029 = vmatprep.subr.mxu0 0.0
        %3030 = vmatpush1.msra.mxu0 0.0
        %3031 = vmatprep.subr.mxu0 0.0
        %3032 = vmatpush1.msra.mxu0 0.0
        %3033 = vmatprep.subr.mxu0 0.0
        %3034 = vmatpush1.msra.mxu0 0.0
        %3035 = vmatprep.mubr.f32.mxu0 0.0
        %3036 = vmatmul.mubr.f32.gmra.mrb[0].mxu0 %v2969
        %v3037 = vpop.f32.mrb[0].mxu0
        %v3038 = vadd.f32 %v2961, %v3037
        %v3039 = vpop.f32.mrb[0].mxu0
        %v3040 = vadd.f32 %v2965, %v3039
        %3041 = vdwg.mxu0
        %3043 = vrot.lane.b32.xlu0 %v3038, 120
        %v3044 = vpop.permute.xlu0 %3043
        %3045 = vrot.lane.b32.xlu0 %v3038, 112
        %v3046 = vpop.permute.xlu0 %3045
        %3047 = vrot.lane.b32.xlu0 %v3038, 104
        %v3048 = vpop.permute.xlu0 %3047
        %3049 = vrot.lane.b32.xlu0 %v3038, 96
        %v3050 = vpop.permute.xlu0 %3049
        %3051 = vrot.lane.b32.xlu0 %v3038, 88
        %v3052 = vpop.permute.xlu0 %3051
        %3053 = vrot.lane.b32.xlu0 %v3038, 80
        %v3054 = vpop.permute.xlu0 %3053
        %3055 = vrot.lane.b32.xlu0 %v3038, 72
        %v3056 = vpop.permute.xlu0 %3055
        %3058 = vrot.lane.b32.xlu0 %v3040, 120
        %v3059 = vpop.permute.xlu0 %3058
        %3061 = vrot.lane.b32.xlu0 %v3040, 112
        %v3062 = vpop.permute.xlu0 %3061
        %3064 = vrot.lane.b32.xlu0 %v3040, 104
        %v3065 = vpop.permute.xlu0 %3064
        %3067 = vrot.lane.b32.xlu0 %v3040, 96
        %v3068 = vpop.permute.xlu0 %3067
        %3070 = vrot.lane.b32.xlu0 %v3040, 88
        %v3071 = vpop.permute.xlu0 %3070
        %3073 = vrot.lane.b32.xlu0 %v3040, 80
        %v3074 = vpop.permute.xlu0 %3073
        %3076 = vrot.lane.b32.xlu0 %v3040, 72
        %v3077 = vpop.permute.xlu0 %3076
        %3079 = vrot.lane.b32.xlu0 %v3038, 64
        %v3080 = vpop.permute.xlu0 %3079
        %v3081 = vsel %vm1345, %v3038, 0
        %v3083 = vsel %vm1345, %v3080, 0
        %3085 = vmatprep.subr.mxu0 0.0
        %3086 = vmatpush1.xpose.msra.mxu0 %v3083
        %3087 = vmatprep.subr.mxu0 0.0
        %3088 = vmatpush1.xpose.msra.mxu0 0.0
        %3089 = vmatprep.subr.mxu0 0.0
        %3090 = vmatpush1.xpose.msra.mxu0 0.0
        %3091 = vmatprep.subr.mxu0 0.0
        %3092 = vmatpush1.xpose.msra.mxu0 0.0
        %3093 = vmatprep.subr.mxu0 0.0
        %3094 = vmatpush1.xpose.msra.mxu0 0.0
        %3095 = vmatprep.subr.mxu0 0.0
        %3096 = vmatpush1.xpose.msra.mxu0 0.0
        %3097 = vmatprep.subr.mxu0 0.0
        %3098 = vmatpush1.xpose.msra.mxu0 0.0
        %3099 = vmatprep.subr.mxu0 0.0
        %3100 = vmatpush1.xpose.msra.mxu0 0.0
        %3101 = vmatprep.subr.mxu0 0.0
        %3102 = vmatpush1.xpose.msra.mxu0 0.0
        %3103 = vmatprep.subr.mxu0 0.0
        %3104 = vmatpush1.xpose.msra.mxu0 0.0
        %3105 = vmatprep.subr.mxu0 0.0
        %3106 = vmatpush1.xpose.msra.mxu0 0.0
        %3107 = vmatprep.subr.mxu0 0.0
        %3108 = vmatpush1.xpose.msra.mxu0 0.0
        %3109 = vmatprep.subr.mxu0 0.0
        %3110 = vmatpush1.xpose.msra.mxu0 0.0
        %3111 = vmatprep.subr.mxu0 0.0
        %3112 = vmatpush1.xpose.msra.mxu0 0.0
        %3113 = vmatprep.subr.mxu0 0.0
        %3114 = vmatpush1.xpose.msra.mxu0 0.0
        %3115 = vmatprep.subr.mxu0 0.0
        %3116 = vmatpush1.xpose.msra.mxu0 0.0
        %3117 = vmatprep.subr.mxu0 0.0
        %3118 = vmatpush1.xpose.msra.mxu0 0.0
        %3119 = vmatprep.subr.mxu0 0.0
        %3120 = vmatpush1.xpose.msra.mxu0 0.0
        %3121 = vmatprep.subr.mxu0 0.0
        %3122 = vmatpush1.xpose.msra.mxu0 0.0
        %3123 = vmatprep.subr.mxu0 0.0
        %3124 = vmatpush1.xpose.msra.mxu0 0.0
        %3125 = vmatprep.subr.mxu0 0.0
        %3126 = vmatpush1.xpose.msra.mxu0 0.0
        %3127 = vmatprep.subr.mxu0 0.0
        %3128 = vmatpush1.xpose.msra.mxu0 0.0
        %3129 = vmatprep.subr.mxu0 0.0
        %3130 = vmatpush1.xpose.msra.mxu0 0.0
        %3131 = vmatprep.subr.mxu0 0.0
        %3132 = vmatpush1.xpose.msra.mxu0 0.0
        %3133 = vmatprep.subr.mxu0 0.0
        %3134 = vmatpush1.xpose.msra.mxu0 0.0
        %3135 = vmatprep.subr.mxu0 0.0
        %3136 = vmatpush1.xpose.msra.mxu0 0.0
        %3137 = vmatprep.subr.mxu0 0.0
        %3138 = vmatpush1.xpose.msra.mxu0 0.0
        %3139 = vmatprep.subr.mxu0 0.0
        %3140 = vmatpush1.xpose.msra.mxu0 0.0
        %3141 = vmatprep.subr.mxu0 0.0
        %3142 = vmatpush1.xpose.msra.mxu0 0.0
        %3143 = vmatprep.subr.mxu0 0.0
        %3144 = vmatpush1.xpose.msra.mxu0 0.0
        %3145 = vmatprep.subr.mxu0 0.0
        %3146 = vmatpush1.xpose.msra.mxu0 0.0
        %3147 = vmatprep.subr.mxu0 0.0
        %3148 = vmatpush1.xpose.msra.mxu0 0.0
        %3149 = vmatprep.mubr.f32.mxu0 0.0
        %3150 = vmatmul.mubr.f32.gmra.mrb[0].mxu0 %v3081
        %v3151 = vpop.f32.mrb[0].mxu0
        %v3152 = vadd.f32 0.0, %v3151
        %v3153 = vpop.f32.mrb[0].mxu0
        %3154 = vdwg.mxu0
        %3155 = vrot.lane.b32.xlu0 %v3044, 64
        %v3156 = vpop.permute.xlu0 %3155
        %v3157 = vsel %vm1345, %v3044, 0
        %v3159 = vsel %vm1345, %v3156, 0
        %3161 = vmatprep.subr.mxu0 0.0
        %3162 = vmatpush1.xpose.msra.mxu0 %v3159
        %3163 = vmatprep.subr.mxu0 0.0
        %3164 = vmatpush1.xpose.msra.mxu0 0.0
        %3165 = vmatprep.subr.mxu0 0.0
        %3166 = vmatpush1.xpose.msra.mxu0 0.0
        %3167 = vmatprep.subr.mxu0 0.0
        %3168 = vmatpush1.xpose.msra.mxu0 0.0
        %3169 = vmatprep.subr.mxu0 0.0
        %3170 = vmatpush1.xpose.msra.mxu0 0.0
        %3171 = vmatprep.subr.mxu0 0.0
        %3172 = vmatpush1.xpose.msra.mxu0 0.0
        %3173 = vmatprep.subr.mxu0 0.0
        %3174 = vmatpush1.xpose.msra.mxu0 0.0
        %3175 = vmatprep.subr.mxu0 0.0
        %3176 = vmatpush1.xpose.msra.mxu0 0.0
        %3177 = vmatprep.subr.mxu0 0.0
        %3178 = vmatpush1.xpose.msra.mxu0 0.0
        %3179 = vmatprep.subr.mxu0 0.0
        %3180 = vmatpush1.xpose.msra.mxu0 0.0
        %3181 = vmatprep.subr.mxu0 0.0
        %3182 = vmatpush1.xpose.msra.mxu0 0.0
        %3183 = vmatprep.subr.mxu0 0.0
        %3184 = vmatpush1.xpose.msra.mxu0 0.0
        %3185 = vmatprep.subr.mxu0 0.0
        %3186 = vmatpush1.xpose.msra.mxu0 0.0
        %3187 = vmatprep.subr.mxu0 0.0
        %3188 = vmatpush1.xpose.msra.mxu0 0.0
        %3189 = vmatprep.subr.mxu0 0.0
        %3190 = vmatpush1.xpose.msra.mxu0 0.0
        %3191 = vmatprep.subr.mxu0 0.0
        %3192 = vmatpush1.xpose.msra.mxu0 0.0
        %3193 = vmatprep.subr.mxu0 0.0
        %3194 = vmatpush1.xpose.msra.mxu0 0.0
        %3195 = vmatprep.subr.mxu0 0.0
        %3196 = vmatpush1.xpose.msra.mxu0 0.0
        %3197 = vmatprep.subr.mxu0 0.0
        %3198 = vmatpush1.xpose.msra.mxu0 0.0
        %3199 = vmatprep.subr.mxu0 0.0
        %3200 = vmatpush1.xpose.msra.mxu0 0.0
        %3201 = vmatprep.subr.mxu0 0.0
        %3202 = vmatpush1.xpose.msra.mxu0 0.0
        %3203 = vmatprep.subr.mxu0 0.0
        %3204 = vmatpush1.xpose.msra.mxu0 0.0
        %3205 = vmatprep.subr.mxu0 0.0
        %3206 = vmatpush1.xpose.msra.mxu0 0.0
        %3207 = vmatprep.subr.mxu0 0.0
        %3208 = vmatpush1.xpose.msra.mxu0 0.0
        %3209 = vmatprep.subr.mxu0 0.0
        %3210 = vmatpush1.xpose.msra.mxu0 0.0
        %3211 = vmatprep.subr.mxu0 0.0
        %3212 = vmatpush1.xpose.msra.mxu0 0.0
        %3213 = vmatprep.subr.mxu0 0.0
        %3214 = vmatpush1.xpose.msra.mxu0 0.0
        %3215 = vmatprep.subr.mxu0 0.0
        %3216 = vmatpush1.xpose.msra.mxu0 0.0
        %3217 = vmatprep.subr.mxu0 0.0
        %3218 = vmatpush1.xpose.msra.mxu0 0.0
        %3219 = vmatprep.subr.mxu0 0.0
        %3220 = vmatpush1.xpose.msra.mxu0 0.0
        %3221 = vmatprep.subr.mxu0 0.0
        %3222 = vmatpush1.xpose.msra.mxu0 0.0
        %3223 = vmatprep.subr.mxu0 0.0
        %3224 = vmatpush1.xpose.msra.mxu0 0.0
        %3225 = vmatprep.mubr.f32.mxu0 0.0
        %3226 = vmatmul.mubr.f32.gmra.mrb[0].mxu0 %v3157
        %v3227 = vpop.f32.mrb[0].mxu0
        %v3228 = vadd.f32 0.0, %v3227
        %v3229 = vpop.f32.mrb[0].mxu0
        %3230 = vdwg.mxu0
        %3231 = vrot.lane.b32.xlu0 %v3046, 64
        %v3232 = vpop.permute.xlu0 %3231
        %v3233 = vsel %vm1345, %v3046, 0
        %v3235 = vsel %vm1345, %v3232, 0
        %3237 = vmatprep.subr.mxu0 0.0
        %3238 = vmatpush1.xpose.msra.mxu0 %v3235
        %3239 = vmatprep.subr.mxu0 0.0
        %3240 = vmatpush1.xpose.msra.mxu0 0.0
        %3241 = vmatprep.subr.mxu0 0.0
        %3242 = vmatpush1.xpose.msra.mxu0 0.0
        %3243 = vmatprep.subr.mxu0 0.0
        %3244 = vmatpush1.xpose.msra.mxu0 0.0
        %3245 = vmatprep.subr.mxu0 0.0
        %3246 = vmatpush1.xpose.msra.mxu0 0.0
        %3247 = vmatprep.subr.mxu0 0.0
        %3248 = vmatpush1.xpose.msra.mxu0 0.0
        %3249 = vmatprep.subr.mxu0 0.0
        %3250 = vmatpush1.xpose.msra.mxu0 0.0
        %3251 = vmatprep.subr.mxu0 0.0
        %3252 = vmatpush1.xpose.msra.mxu0 0.0
        %3253 = vmatprep.subr.mxu0 0.0
        %3254 = vmatpush1.xpose.msra.mxu0 0.0
        %3255 = vmatprep.subr.mxu0 0.0
        %3256 = vmatpush1.xpose.msra.mxu0 0.0
        %3257 = vmatprep.subr.mxu0 0.0
        %3258 = vmatpush1.xpose.msra.mxu0 0.0
        %3259 = vmatprep.subr.mxu0 0.0
        %3260 = vmatpush1.xpose.msra.mxu0 0.0
        %3261 = vmatprep.subr.mxu0 0.0
        %3262 = vmatpush1.xpose.msra.mxu0 0.0
        %3263 = vmatprep.subr.mxu0 0.0
        %3264 = vmatpush1.xpose.msra.mxu0 0.0
        %3265 = vmatprep.subr.mxu0 0.0
        %3266 = vmatpush1.xpose.msra.mxu0 0.0
        %3267 = vmatprep.subr.mxu0 0.0
        %3268 = vmatpush1.xpose.msra.mxu0 0.0
        %3269 = vmatprep.subr.mxu0 0.0
        %3270 = vmatpush1.xpose.msra.mxu0 0.0
        %3271 = vmatprep.subr.mxu0 0.0
        %3272 = vmatpush1.xpose.msra.mxu0 0.0
        %3273 = vmatprep.subr.mxu0 0.0
        %3274 = vmatpush1.xpose.msra.mxu0 0.0
        %3275 = vmatprep.subr.mxu0 0.0
        %3276 = vmatpush1.xpose.msra.mxu0 0.0
        %3277 = vmatprep.subr.mxu0 0.0
        %3278 = vmatpush1.xpose.msra.mxu0 0.0
        %3279 = vmatprep.subr.mxu0 0.0
        %3280 = vmatpush1.xpose.msra.mxu0 0.0
        %3281 = vmatprep.subr.mxu0 0.0
        %3282 = vmatpush1.xpose.msra.mxu0 0.0
        %3283 = vmatprep.subr.mxu0 0.0
        %3284 = vmatpush1.xpose.msra.mxu0 0.0
        %3285 = vmatprep.subr.mxu0 0.0
        %3286 = vmatpush1.xpose.msra.mxu0 0.0
        %3287 = vmatprep.subr.mxu0 0.0
        %3288 = vmatpush1.xpose.msra.mxu0 0.0
        %3289 = vmatprep.subr.mxu0 0.0
        %3290 = vmatpush1.xpose.msra.mxu0 0.0
        %3291 = vmatprep.subr.mxu0 0.0
        %3292 = vmatpush1.xpose.msra.mxu0 0.0
        %3293 = vmatprep.subr.mxu0 0.0
        %3294 = vmatpush1.xpose.msra.mxu0 0.0
        %3295 = vmatprep.subr.mxu0 0.0
        %3296 = vmatpush1.xpose.msra.mxu0 0.0
        %3297 = vmatprep.subr.mxu0 0.0
        %3298 = vmatpush1.xpose.msra.mxu0 0.0
        %3299 = vmatprep.subr.mxu0 0.0
        %3300 = vmatpush1.xpose.msra.mxu0 0.0
        %3301 = vmatprep.mubr.f32.mxu0 0.0
        %3302 = vmatmul.mubr.f32.gmra.mrb[0].mxu0 %v3233
        %v3303 = vpop.f32.mrb[0].mxu0
        %v3304 = vadd.f32 0.0, %v3303
        %v3305 = vpop.f32.mrb[0].mxu0
        %3306 = vdwg.mxu0
        %3307 = vrot.lane.b32.xlu0 %v3048, 64
        %v3308 = vpop.permute.xlu0 %3307
        %v3309 = vsel %vm1345, %v3048, 0
        %v3311 = vsel %vm1345, %v3308, 0
        %3313 = vmatprep.subr.mxu0 0.0
        %3314 = vmatpush1.xpose.msra.mxu0 %v3311
        %3315 = vmatprep.subr.mxu0 0.0
        %3316 = vmatpush1.xpose.msra.mxu0 0.0
        %3317 = vmatprep.subr.mxu0 0.0
        %3318 = vmatpush1.xpose.msra.mxu0 0.0
        %3319 = vmatprep.subr.mxu0 0.0
        %3320 = vmatpush1.xpose.msra.mxu0 0.0
        %3321 = vmatprep.subr.mxu0 0.0
        %3322 = vmatpush1.xpose.msra.mxu0 0.0
        %3323 = vmatprep.subr.mxu0 0.0
        %3324 = vmatpush1.xpose.msra.mxu0 0.0
        %3325 = vmatprep.subr.mxu0 0.0
        %3326 = vmatpush1.xpose.msra.mxu0 0.0
        %3327 = vmatprep.subr.mxu0 0.0
        %3328 = vmatpush1.xpose.msra.mxu0 0.0
        %3329 = vmatprep.subr.mxu0 0.0
        %3330 = vmatpush1.xpose.msra.mxu0 0.0
        %3331 = vmatprep.subr.mxu0 0.0
        %3332 = vmatpush1.xpose.msra.mxu0 0.0
        %3333 = vmatprep.subr.mxu0 0.0
        %3334 = vmatpush1.xpose.msra.mxu0 0.0
        %3335 = vmatprep.subr.mxu0 0.0
        %3336 = vmatpush1.xpose.msra.mxu0 0.0
        %3337 = vmatprep.subr.mxu0 0.0
        %3338 = vmatpush1.xpose.msra.mxu0 0.0
        %3339 = vmatprep.subr.mxu0 0.0
        %3340 = vmatpush1.xpose.msra.mxu0 0.0
        %3341 = vmatprep.subr.mxu0 0.0
        %3342 = vmatpush1.xpose.msra.mxu0 0.0
        %3343 = vmatprep.subr.mxu0 0.0
        %3344 = vmatpush1.xpose.msra.mxu0 0.0
        %3345 = vmatprep.subr.mxu0 0.0
        %3346 = vmatpush1.xpose.msra.mxu0 0.0
        %3347 = vmatprep.subr.mxu0 0.0
        %3348 = vmatpush1.xpose.msra.mxu0 0.0
        %3349 = vmatprep.subr.mxu0 0.0
        %3350 = vmatpush1.xpose.msra.mxu0 0.0
        %3351 = vmatprep.subr.mxu0 0.0
        %3352 = vmatpush1.xpose.msra.mxu0 0.0
        %3353 = vmatprep.subr.mxu0 0.0
        %3354 = vmatpush1.xpose.msra.mxu0 0.0
        %3355 = vmatprep.subr.mxu0 0.0
        %3356 = vmatpush1.xpose.msra.mxu0 0.0
        %3357 = vmatprep.subr.mxu0 0.0
        %3358 = vmatpush1.xpose.msra.mxu0 0.0
        %3359 = vmatprep.subr.mxu0 0.0
        %3360 = vmatpush1.xpose.msra.mxu0 0.0
        %3361 = vmatprep.subr.mxu0 0.0
        %3362 = vmatpush1.xpose.msra.mxu0 0.0
        %3363 = vmatprep.subr.mxu0 0.0
        %3364 = vmatpush1.xpose.msra.mxu0 0.0
        %3365 = vmatprep.subr.mxu0 0.0
        %3366 = vmatpush1.xpose.msra.mxu0 0.0
        %3367 = vmatprep.subr.mxu0 0.0
        %3368 = vmatpush1.xpose.msra.mxu0 0.0
        %3369 = vmatprep.subr.mxu0 0.0
        %3370 = vmatpush1.xpose.msra.mxu0 0.0
        %3371 = vmatprep.subr.mxu0 0.0
        %3372 = vmatpush1.xpose.msra.mxu0 0.0
        %3373 = vmatprep.subr.mxu0 0.0
        %3374 = vmatpush1.xpose.msra.mxu0 0.0
        %3375 = vmatprep.subr.mxu0 0.0
        %3376 = vmatpush1.xpose.msra.mxu0 0.0
        %3377 = vmatprep.mubr.f32.mxu0 0.0
        %3378 = vmatmul.mubr.f32.gmra.mrb[0].mxu0 %v3309
        %v3379 = vpop.f32.mrb[0].mxu0
        %v3380 = vadd.f32 0.0, %v3379
        %v3381 = vpop.f32.mrb[0].mxu0
        %3382 = vdwg.mxu0
        %3383 = vrot.lane.b32.xlu0 %v3050, 64
        %v3384 = vpop.permute.xlu0 %3383
        %v3385 = vsel %vm1345, %v3050, 0
        %v3387 = vsel %vm1345, %v3384, 0
        %3389 = vmatprep.subr.mxu0 0.0
        %3390 = vmatpush1.xpose.msra.mxu0 %v3387
        %3391 = vmatprep.subr.mxu0 0.0
        %3392 = vmatpush1.xpose.msra.mxu0 0.0
        %3393 = vmatprep.subr.mxu0 0.0
        %3394 = vmatpush1.xpose.msra.mxu0 0.0
        %3395 = vmatprep.subr.mxu0 0.0
        %3396 = vmatpush1.xpose.msra.mxu0 0.0
        %3397 = vmatprep.subr.mxu0 0.0
        %3398 = vmatpush1.xpose.msra.mxu0 0.0
        %3399 = vmatprep.subr.mxu0 0.0
        %3400 = vmatpush1.xpose.msra.mxu0 0.0
        %3401 = vmatprep.subr.mxu0 0.0
        %3402 = vmatpush1.xpose.msra.mxu0 0.0
        %3403 = vmatprep.subr.mxu0 0.0
        %3404 = vmatpush1.xpose.msra.mxu0 0.0
        %3405 = vmatprep.subr.mxu0 0.0
        %3406 = vmatpush1.xpose.msra.mxu0 0.0
        %3407 = vmatprep.subr.mxu0 0.0
        %3408 = vmatpush1.xpose.msra.mxu0 0.0
        %3409 = vmatprep.subr.mxu0 0.0
        %3410 = vmatpush1.xpose.msra.mxu0 0.0
        %3411 = vmatprep.subr.mxu0 0.0
        %3412 = vmatpush1.xpose.msra.mxu0 0.0
        %3413 = vmatprep.subr.mxu0 0.0
        %3414 = vmatpush1.xpose.msra.mxu0 0.0
        %3415 = vmatprep.subr.mxu0 0.0
        %3416 = vmatpush1.xpose.msra.mxu0 0.0
        %3417 = vmatprep.subr.mxu0 0.0
        %3418 = vmatpush1.xpose.msra.mxu0 0.0
        %3419 = vmatprep.subr.mxu0 0.0
        %3420 = vmatpush1.xpose.msra.mxu0 0.0
        %3421 = vmatprep.subr.mxu0 0.0
        %3422 = vmatpush1.xpose.msra.mxu0 0.0
        %3423 = vmatprep.subr.mxu0 0.0
        %3424 = vmatpush1.xpose.msra.mxu0 0.0
        %3425 = vmatprep.subr.mxu0 0.0
        %3426 = vmatpush1.xpose.msra.mxu0 0.0
        %3427 = vmatprep.subr.mxu0 0.0
        %3428 = vmatpush1.xpose.msra.mxu0 0.0
        %3429 = vmatprep.subr.mxu0 0.0
        %3430 = vmatpush1.xpose.msra.mxu0 0.0
        %3431 = vmatprep.subr.mxu0 0.0
        %3432 = vmatpush1.xpose.msra.mxu0 0.0
        %3433 = vmatprep.subr.mxu0 0.0
        %3434 = vmatpush1.xpose.msra.mxu0 0.0
        %3435 = vmatprep.subr.mxu0 0.0
        %3436 = vmatpush1.xpose.msra.mxu0 0.0
        %3437 = vmatprep.subr.mxu0 0.0
        %3438 = vmatpush1.xpose.msra.mxu0 0.0
        %3439 = vmatprep.subr.mxu0 0.0
        %3440 = vmatpush1.xpose.msra.mxu0 0.0
        %3441 = vmatprep.subr.mxu0 0.0
        %3442 = vmatpush1.xpose.msra.mxu0 0.0
        %3443 = vmatprep.subr.mxu0 0.0
        %3444 = vmatpush1.xpose.msra.mxu0 0.0
        %3445 = vmatprep.subr.mxu0 0.0
        %3446 = vmatpush1.xpose.msra.mxu0 0.0
        %3447 = vmatprep.subr.mxu0 0.0
        %3448 = vmatpush1.xpose.msra.mxu0 0.0
        %3449 = vmatprep.subr.mxu0 0.0
        %3450 = vmatpush1.xpose.msra.mxu0 0.0
        %3451 = vmatprep.subr.mxu0 0.0
        %3452 = vmatpush1.xpose.msra.mxu0 0.0
        %3453 = vmatprep.mubr.f32.mxu0 0.0
        %3454 = vmatmul.mubr.f32.gmra.mrb[0].mxu0 %v3385
        %v3455 = vpop.f32.mrb[0].mxu0
        %v3456 = vadd.f32 0.0, %v3455
        %v3457 = vpop.f32.mrb[0].mxu0
        %3458 = vdwg.mxu0
        %3459 = vrot.lane.b32.xlu0 %v3052, 64
        %v3460 = vpop.permute.xlu0 %3459
        %v3461 = vsel %vm1345, %v3052, 0
        %v3463 = vsel %vm1345, %v3460, 0
        %3465 = vmatprep.subr.mxu0 0.0
        %3466 = vmatpush1.xpose.msra.mxu0 %v3463
        %3467 = vmatprep.subr.mxu0 0.0
        %3468 = vmatpush1.xpose.msra.mxu0 0.0
        %3469 = vmatprep.subr.mxu0 0.0
        %3470 = vmatpush1.xpose.msra.mxu0 0.0
        %3471 = vmatprep.subr.mxu0 0.0
        %3472 = vmatpush1.xpose.msra.mxu0 0.0
        %3473 = vmatprep.subr.mxu0 0.0
        %3474 = vmatpush1.xpose.msra.mxu0 0.0
        %3475 = vmatprep.subr.mxu0 0.0
        %3476 = vmatpush1.xpose.msra.mxu0 0.0
        %3477 = vmatprep.subr.mxu0 0.0
        %3478 = vmatpush1.xpose.msra.mxu0 0.0
        %3479 = vmatprep.subr.mxu0 0.0
        %3480 = vmatpush1.xpose.msra.mxu0 0.0
        %3481 = vmatprep.subr.mxu0 0.0
        %3482 = vmatpush1.xpose.msra.mxu0 0.0
        %3483 = vmatprep.subr.mxu0 0.0
        %3484 = vmatpush1.xpose.msra.mxu0 0.0
        %3485 = vmatprep.subr.mxu0 0.0
        %3486 = vmatpush1.xpose.msra.mxu0 0.0
        %3487 = vmatprep.subr.mxu0 0.0
        %3488 = vmatpush1.xpose.msra.mxu0 0.0
        %3489 = vmatprep.subr.mxu0 0.0
        %3490 = vmatpush1.xpose.msra.mxu0 0.0
        %3491 = vmatprep.subr.mxu0 0.0
        %3492 = vmatpush1.xpose.msra.mxu0 0.0
        %3493 = vmatprep.subr.mxu0 0.0
        %3494 = vmatpush1.xpose.msra.mxu0 0.0
        %3495 = vmatprep.subr.mxu0 0.0
        %3496 = vmatpush1.xpose.msra.mxu0 0.0
        %3497 = vmatprep.subr.mxu0 0.0
        %3498 = vmatpush1.xpose.msra.mxu0 0.0
        %3499 = vmatprep.subr.mxu0 0.0
        %3500 = vmatpush1.xpose.msra.mxu0 0.0
        %3501 = vmatprep.subr.mxu0 0.0
        %3502 = vmatpush1.xpose.msra.mxu0 0.0
        %3503 = vmatprep.subr.mxu0 0.0
        %3504 = vmatpush1.xpose.msra.mxu0 0.0
        %3505 = vmatprep.subr.mxu0 0.0
        %3506 = vmatpush1.xpose.msra.mxu0 0.0
        %3507 = vmatprep.subr.mxu0 0.0
        %3508 = vmatpush1.xpose.msra.mxu0 0.0
        %3509 = vmatprep.subr.mxu0 0.0
        %3510 = vmatpush1.xpose.msra.mxu0 0.0
        %3511 = vmatprep.subr.mxu0 0.0
        %3512 = vmatpush1.xpose.msra.mxu0 0.0
        %3513 = vmatprep.subr.mxu0 0.0
        %3514 = vmatpush1.xpose.msra.mxu0 0.0
        %3515 = vmatprep.subr.mxu0 0.0
        %3516 = vmatpush1.xpose.msra.mxu0 0.0
        %3517 = vmatprep.subr.mxu0 0.0
        %3518 = vmatpush1.xpose.msra.mxu0 0.0
        %3519 = vmatprep.subr.mxu0 0.0
        %3520 = vmatpush1.xpose.msra.mxu0 0.0
        %3521 = vmatprep.subr.mxu0 0.0
        %3522 = vmatpush1.xpose.msra.mxu0 0.0
        %3523 = vmatprep.subr.mxu0 0.0
        %3524 = vmatpush1.xpose.msra.mxu0 0.0
        %3525 = vmatprep.subr.mxu0 0.0
        %3526 = vmatpush1.xpose.msra.mxu0 0.0
        %3527 = vmatprep.subr.mxu0 0.0
        %3528 = vmatpush1.xpose.msra.mxu0 0.0
        %3529 = vmatprep.mubr.f32.mxu0 0.0
        %3530 = vmatmul.mubr.f32.gmra.mrb[0].mxu0 %v3461
        %v3531 = vpop.f32.mrb[0].mxu0
        %v3532 = vadd.f32 0.0, %v3531
        %v3533 = vpop.f32.mrb[0].mxu0
        %3534 = vdwg.mxu0
        %3535 = vrot.lane.b32.xlu0 %v3054, 64
        %v3536 = vpop.permute.xlu0 %3535
        %v3537 = vsel %vm1345, %v3054, 0
        %v3539 = vsel %vm1345, %v3536, 0
        %3541 = vmatprep.subr.mxu0 0.0
        %3542 = vmatpush1.xpose.msra.mxu0 %v3539
        %3543 = vmatprep.subr.mxu0 0.0
        %3544 = vmatpush1.xpose.msra.mxu0 0.0
        %3545 = vmatprep.subr.mxu0 0.0
        %3546 = vmatpush1.xpose.msra.mxu0 0.0
        %3547 = vmatprep.subr.mxu0 0.0
        %3548 = vmatpush1.xpose.msra.mxu0 0.0
        %3549 = vmatprep.subr.mxu0 0.0
        %3550 = vmatpush1.xpose.msra.mxu0 0.0
        %3551 = vmatprep.subr.mxu0 0.0
        %3552 = vmatpush1.xpose.msra.mxu0 0.0
        %3553 = vmatprep.subr.mxu0 0.0
        %3554 = vmatpush1.xpose.msra.mxu0 0.0
        %3555 = vmatprep.subr.mxu0 0.0
        %3556 = vmatpush1.xpose.msra.mxu0 0.0
        %3557 = vmatprep.subr.mxu0 0.0
        %3558 = vmatpush1.xpose.msra.mxu0 0.0
        %3559 = vmatprep.subr.mxu0 0.0
        %3560 = vmatpush1.xpose.msra.mxu0 0.0
        %3561 = vmatprep.subr.mxu0 0.0
        %3562 = vmatpush1.xpose.msra.mxu0 0.0
        %3563 = vmatprep.subr.mxu0 0.0
        %3564 = vmatpush1.xpose.msra.mxu0 0.0
        %3565 = vmatprep.subr.mxu0 0.0
        %3566 = vmatpush1.xpose.msra.mxu0 0.0
        %3567 = vmatprep.subr.mxu0 0.0
        %3568 = vmatpush1.xpose.msra.mxu0 0.0
        %3569 = vmatprep.subr.mxu0 0.0
        %3570 = vmatpush1.xpose.msra.mxu0 0.0
        %3571 = vmatprep.subr.mxu0 0.0
        %3572 = vmatpush1.xpose.msra.mxu0 0.0
        %3573 = vmatprep.subr.mxu0 0.0
        %3574 = vmatpush1.xpose.msra.mxu0 0.0
        %3575 = vmatprep.subr.mxu0 0.0
        %3576 = vmatpush1.xpose.msra.mxu0 0.0
        %3577 = vmatprep.subr.mxu0 0.0
        %3578 = vmatpush1.xpose.msra.mxu0 0.0
        %3579 = vmatprep.subr.mxu0 0.0
        %3580 = vmatpush1.xpose.msra.mxu0 0.0
        %3581 = vmatprep.subr.mxu0 0.0
        %3582 = vmatpush1.xpose.msra.mxu0 0.0
        %3583 = vmatprep.subr.mxu0 0.0
        %3584 = vmatpush1.xpose.msra.mxu0 0.0
        %3585 = vmatprep.subr.mxu0 0.0
        %3586 = vmatpush1.xpose.msra.mxu0 0.0
        %3587 = vmatprep.subr.mxu0 0.0
        %3588 = vmatpush1.xpose.msra.mxu0 0.0
        %3589 = vmatprep.subr.mxu0 0.0
        %3590 = vmatpush1.xpose.msra.mxu0 0.0
        %3591 = vmatprep.subr.mxu0 0.0
        %3592 = vmatpush1.xpose.msra.mxu0 0.0
        %3593 = vmatprep.subr.mxu0 0.0
        %3594 = vmatpush1.xpose.msra.mxu0 0.0
        %3595 = vmatprep.subr.mxu0 0.0
        %3596 = vmatpush1.xpose.msra.mxu0 0.0
        %3597 = vmatprep.subr.mxu0 0.0
        %3598 = vmatpush1.xpose.msra.mxu0 0.0
        %3599 = vmatprep.subr.mxu0 0.0
        %3600 = vmatpush1.xpose.msra.mxu0 0.0
        %3601 = vmatprep.subr.mxu0 0.0
        %3602 = vmatpush1.xpose.msra.mxu0 0.0
        %3603 = vmatprep.subr.mxu0 0.0
        %3604 = vmatpush1.xpose.msra.mxu0 0.0
        %3605 = vmatprep.mubr.f32.mxu0 0.0
        %3606 = vmatmul.mubr.f32.gmra.mrb[0].mxu0 %v3537
        %v3607 = vpop.f32.mrb[0].mxu0
        %v3608 = vadd.f32 0.0, %v3607
        %v3609 = vpop.f32.mrb[0].mxu0
        %3610 = vdwg.mxu0
        %3611 = vrot.lane.b32.xlu0 %v3056, 64
        %v3612 = vpop.permute.xlu0 %3611
        %v3613 = vsel %vm1345, %v3056, 0
        %v3615 = vsel %vm1345, %v3612, 0
        %3617 = vmatprep.subr.mxu0 0.0
        %3618 = vmatpush1.xpose.msra.mxu0 %v3615
        %3619 = vmatprep.subr.mxu0 0.0
        %3620 = vmatpush1.xpose.msra.mxu0 0.0
        %3621 = vmatprep.subr.mxu0 0.0
        %3622 = vmatpush1.xpose.msra.mxu0 0.0
        %3623 = vmatprep.subr.mxu0 0.0
        %3624 = vmatpush1.xpose.msra.mxu0 0.0
        %3625 = vmatprep.subr.mxu0 0.0
        %3626 = vmatpush1.xpose.msra.mxu0 0.0
        %3627 = vmatprep.subr.mxu0 0.0
        %3628 = vmatpush1.xpose.msra.mxu0 0.0
        %3629 = vmatprep.subr.mxu0 0.0
        %3630 = vmatpush1.xpose.msra.mxu0 0.0
        %3631 = vmatprep.subr.mxu0 0.0
        %3632 = vmatpush1.xpose.msra.mxu0 0.0
        %3633 = vmatprep.subr.mxu0 0.0
        %3634 = vmatpush1.xpose.msra.mxu0 0.0
        %3635 = vmatprep.subr.mxu0 0.0
        %3636 = vmatpush1.xpose.msra.mxu0 0.0
        %3637 = vmatprep.subr.mxu0 0.0
        %3638 = vmatpush1.xpose.msra.mxu0 0.0
        %3639 = vmatprep.subr.mxu0 0.0
        %3640 = vmatpush1.xpose.msra.mxu0 0.0
        %3641 = vmatprep.subr.mxu0 0.0
        %3642 = vmatpush1.xpose.msra.mxu0 0.0
        %3643 = vmatprep.subr.mxu0 0.0
        %3644 = vmatpush1.xpose.msra.mxu0 0.0
        %3645 = vmatprep.subr.mxu0 0.0
        %3646 = vmatpush1.xpose.msra.mxu0 0.0
        %3647 = vmatprep.subr.mxu0 0.0
        %3648 = vmatpush1.xpose.msra.mxu0 0.0
        %3649 = vmatprep.subr.mxu0 0.0
        %3650 = vmatpush1.xpose.msra.mxu0 0.0
        %3651 = vmatprep.subr.mxu0 0.0
        %3652 = vmatpush1.xpose.msra.mxu0 0.0
        %3653 = vmatprep.subr.mxu0 0.0
        %3654 = vmatpush1.xpose.msra.mxu0 0.0
        %3655 = vmatprep.subr.mxu0 0.0
        %3656 = vmatpush1.xpose.msra.mxu0 0.0
        %3657 = vmatprep.subr.mxu0 0.0
        %3658 = vmatpush1.xpose.msra.mxu0 0.0
        %3659 = vmatprep.subr.mxu0 0.0
        %3660 = vmatpush1.xpose.msra.mxu0 0.0
        %3661 = vmatprep.subr.mxu0 0.0
        %3662 = vmatpush1.xpose.msra.mxu0 0.0
        %3663 = vmatprep.subr.mxu0 0.0
        %3664 = vmatpush1.xpose.msra.mxu0 0.0
        %3665 = vmatprep.subr.mxu0 0.0
        %3666 = vmatpush1.xpose.msra.mxu0 0.0
        %3667 = vmatprep.subr.mxu0 0.0
        %3668 = vmatpush1.xpose.msra.mxu0 0.0
        %3669 = vmatprep.subr.mxu0 0.0
        %3670 = vmatpush1.xpose.msra.mxu0 0.0
        %3671 = vmatprep.subr.mxu0 0.0
        %3672 = vmatpush1.xpose.msra.mxu0 0.0
        %3673 = vmatprep.subr.mxu0 0.0
        %3674 = vmatpush1.xpose.msra.mxu0 0.0
        %3675 = vmatprep.subr.mxu0 0.0
        %3676 = vmatpush1.xpose.msra.mxu0 0.0
        %3677 = vmatprep.subr.mxu0 0.0
        %3678 = vmatpush1.xpose.msra.mxu0 0.0
        %3679 = vmatprep.subr.mxu0 0.0
        %3680 = vmatpush1.xpose.msra.mxu0 0.0
        %3681 = vmatprep.mubr.f32.mxu0 0.0
        %3682 = vmatmul.mubr.f32.gmra.mrb[0].mxu0 %v3613
        %v3683 = vpop.f32.mrb[0].mxu0
        %v3684 = vadd.f32 0.0, %v3683
        %v3685 = vpop.f32.mrb[0].mxu0
        %3686 = vdwg.mxu0
        %v3687 = vsel %vm1345, %v3152, -inf
        %3688 = vmax.xlane.f32.xlu0 %v3687
        %v3689 = vpop.xlane.xlu0 %3688
        %v3690 = vsel %vm1345, %v3228, -inf
        %3691 = vmax.xlane.f32.xlu0 %v3690
        %v3692 = vpop.xlane.xlu0 %3691
        %v3693 = vsel %vm1345, %v3304, -inf
        %3694 = vmax.xlane.f32.xlu0 %v3693
        %v3695 = vpop.xlane.xlu0 %3694
        %v3696 = vsel %vm1345, %v3380, -inf
        %3697 = vmax.xlane.f32.xlu0 %v3696
        %v3698 = vpop.xlane.xlu0 %3697
        %v3699 = vsel %vm1345, %v3456, -inf
        %3700 = vmax.xlane.f32.xlu0 %v3699
        %v3701 = vpop.xlane.xlu0 %3700
        %v3702 = vsel %vm1345, %v3532, -inf
        %3703 = vmax.xlane.f32.xlu0 %v3702
        %v3704 = vpop.xlane.xlu0 %3703
        %v3705 = vsel %vm1345, %v3608, -inf
        %3706 = vmax.xlane.f32.xlu0 %v3705
        %v3707 = vpop.xlane.xlu0 %3706
        %v3708 = vsel %vm1345, %v3684, -inf
        %3709 = vmax.xlane.f32.xlu0 %v3708
        %v3710 = vpop.xlane.xlu0 %3709
        %v3711 = vsub.f32 %v3152, %v3689
        %v3712 = vsub.f32 %v3228, %v3692
        %v3713 = vsub.f32 %v3304, %v3695
        %v3714 = vsub.f32 %v3380, %v3698
        %v3715 = vsub.f32 %v3456, %v3701
        %v3716 = vsub.f32 %v3532, %v3704
        %v3717 = vsub.f32 %v3608, %v3707
        %v3718 = vsub.f32 %v3684, %v3710
        %v3719 = vmul.f32 %v3711, 1.442695
        %v3720 = vpow.pop %v3719
        %v3721 = vmul.f32 %v3712, 1.442695
        %v3722 = vpow.pop %v3721
        %v3723 = vmul.f32 %v3713, 1.442695
        %v3724 = vpow.pop %v3723
        %v3725 = vmul.f32 %v3714, 1.442695
        %v3726 = vpow.pop %v3725
        %v3727 = vmul.f32 %v3715, 1.442695
        %v3728 = vpow.pop %v3727
        %v3729 = vmul.f32 %v3716, 1.442695
        %v3730 = vpow.pop %v3729
        %v3731 = vmul.f32 %v3717, 1.442695
        %v3732 = vpow.pop %v3731
        %v3733 = vmul.f32 %v3718, 1.442695
        %v3734 = vpow.pop %v3733
        %v3735 = vsel %vm1345, %v3720, 0.0
        %3736 = vadd.xlane.f32.xlu0 %v3735
        %v3737 = vpop.xlane.xlu0 %3736
        %v3738 = vsel %vm1345, %v3722, 0.0
        %3739 = vadd.xlane.f32.xlu0 %v3738
        %v3740 = vpop.xlane.xlu0 %3739
        %v3741 = vsel %vm1345, %v3724, 0.0
        %3742 = vadd.xlane.f32.xlu0 %v3741
        %v3743 = vpop.xlane.xlu0 %3742
        %v3744 = vsel %vm1345, %v3726, 0.0
        %3745 = vadd.xlane.f32.xlu0 %v3744
        %v3746 = vpop.xlane.xlu0 %3745
        %v3747 = vsel %vm1345, %v3728, 0.0
        %3748 = vadd.xlane.f32.xlu0 %v3747
        %v3749 = vpop.xlane.xlu0 %3748
        %v3750 = vsel %vm1345, %v3730, 0.0
        %3751 = vadd.xlane.f32.xlu0 %v3750
        %v3752 = vpop.xlane.xlu0 %3751
        %v3753 = vsel %vm1345, %v3732, 0.0
        %3754 = vadd.xlane.f32.xlu0 %v3753
        %v3755 = vpop.xlane.xlu0 %3754
        %v3756 = vsel %vm1345, %v3734, 0.0
        %3757 = vadd.xlane.f32.xlu0 %v3756
        %v3758 = vpop.xlane.xlu0 %3757
        %v3760 = vsel %vm1345, %v3720, 0
        %3762 = vmatprep.subr.mxu0 0.0
        %3763 = vmatpush1.msra.mxu0 %v3040
        %3764 = vmatprep.subr.mxu0 0.0
        %3765 = vmatpush1.msra.mxu0 0.0
        %3766 = vmatprep.subr.mxu0 0.0
        %3767 = vmatpush1.msra.mxu0 0.0
        %3768 = vmatprep.subr.mxu0 0.0
        %3769 = vmatpush1.msra.mxu0 0.0
        %3770 = vmatprep.subr.mxu0 0.0
        %3771 = vmatpush1.msra.mxu0 0.0
        %3772 = vmatprep.subr.mxu0 0.0
        %3773 = vmatpush1.msra.mxu0 0.0
        %3774 = vmatprep.subr.mxu0 0.0
        %3775 = vmatpush1.msra.mxu0 0.0
        %3776 = vmatprep.subr.mxu0 0.0
        %3777 = vmatpush1.msra.mxu0 0.0
        %3778 = vmatprep.subr.mxu0 0.0
        %3779 = vmatpush1.msra.mxu0 0.0
        %3780 = vmatprep.subr.mxu0 0.0
        %3781 = vmatpush1.msra.mxu0 0.0
        %3782 = vmatprep.subr.mxu0 0.0
        %3783 = vmatpush1.msra.mxu0 0.0
        %3784 = vmatprep.subr.mxu0 0.0
        %3785 = vmatpush1.msra.mxu0 0.0
        %3786 = vmatprep.subr.mxu0 0.0
        %3787 = vmatpush1.msra.mxu0 0.0
        %3788 = vmatprep.subr.mxu0 0.0
        %3789 = vmatpush1.msra.mxu0 0.0
        %3790 = vmatprep.subr.mxu0 0.0
        %3791 = vmatpush1.msra.mxu0 0.0
        %3792 = vmatprep.subr.mxu0 0.0
        %3793 = vmatpush1.msra.mxu0 0.0
        %3794 = vmatprep.subr.mxu0 0.0
        %3795 = vmatpush1.msra.mxu0 0.0
        %3796 = vmatprep.subr.mxu0 0.0
        %3797 = vmatpush1.msra.mxu0 0.0
        %3798 = vmatprep.subr.mxu0 0.0
        %3799 = vmatpush1.msra.mxu0 0.0
        %3800 = vmatprep.subr.mxu0 0.0
        %3801 = vmatpush1.msra.mxu0 0.0
        %3802 = vmatprep.subr.mxu0 0.0
        %3803 = vmatpush1.msra.mxu0 0.0
        %3804 = vmatprep.subr.mxu0 0.0
        %3805 = vmatpush1.msra.mxu0 0.0
        %3806 = vmatprep.subr.mxu0 0.0
        %3807 = vmatpush1.msra.mxu0 0.0
        %3808 = vmatprep.subr.mxu0 0.0
        %3809 = vmatpush1.msra.mxu0 0.0
        %3810 = vmatprep.subr.mxu0 0.0
        %3811 = vmatpush1.msra.mxu0 0.0
        %3812 = vmatprep.subr.mxu0 0.0
        %3813 = vmatpush1.msra.mxu0 0.0
        %3814 = vmatprep.subr.mxu0 0.0
        %3815 = vmatpush1.msra.mxu0 0.0
        %3816 = vmatprep.subr.mxu0 0.0
        %3817 = vmatpush1.msra.mxu0 0.0
        %3818 = vmatprep.subr.mxu0 0.0
        %3819 = vmatpush1.msra.mxu0 0.0
        %3820 = vmatprep.subr.mxu0 0.0
        %3821 = vmatpush1.msra.mxu0 0.0
        %3822 = vmatprep.subr.mxu0 0.0
        %3823 = vmatpush1.msra.mxu0 0.0
        %3824 = vmatprep.subr.mxu0 0.0
        %3825 = vmatpush1.msra.mxu0 0.0
        %3826 = vmatprep.mubr.f32.mxu0 0.0
        %3827 = vmatmul.mubr.f32.gmra.mrb[0].mxu0 %v3760
        %v3828 = vpop.f32.mrb[0].mxu0
        %v3829 = vadd.f32 0.0, %v3828
        %v3830 = vpop.f32.mrb[0].mxu0
        %3831 = vdwg.mxu0
        %v3833 = vsel %vm1345, %v3722, 0
        %3835 = vmatprep.subr.mxu0 0.0
        %3836 = vmatpush1.msra.mxu0 %v3059
        %3837 = vmatprep.subr.mxu0 0.0
        %3838 = vmatpush1.msra.mxu0 0.0
        %3839 = vmatprep.subr.mxu0 0.0
        %3840 = vmatpush1.msra.mxu0 0.0
        %3841 = vmatprep.subr.mxu0 0.0
        %3842 = vmatpush1.msra.mxu0 0.0
        %3843 = vmatprep.subr.mxu0 0.0
        %3844 = vmatpush1.msra.mxu0 0.0
        %3845 = vmatprep.subr.mxu0 0.0
        %3846 = vmatpush1.msra.mxu0 0.0
        %3847 = vmatprep.subr.mxu0 0.0
        %3848 = vmatpush1.msra.mxu0 0.0
        %3849 = vmatprep.subr.mxu0 0.0
        %3850 = vmatpush1.msra.mxu0 0.0
        %3851 = vmatprep.subr.mxu0 0.0
        %3852 = vmatpush1.msra.mxu0 0.0
        %3853 = vmatprep.subr.mxu0 0.0
        %3854 = vmatpush1.msra.mxu0 0.0
        %3855 = vmatprep.subr.mxu0 0.0
        %3856 = vmatpush1.msra.mxu0 0.0
        %3857 = vmatprep.subr.mxu0 0.0
        %3858 = vmatpush1.msra.mxu0 0.0
        %3859 = vmatprep.subr.mxu0 0.0
        %3860 = vmatpush1.msra.mxu0 0.0
        %3861 = vmatprep.subr.mxu0 0.0
        %3862 = vmatpush1.msra.mxu0 0.0
        %3863 = vmatprep.subr.mxu0 0.0
        %3864 = vmatpush1.msra.mxu0 0.0
        %3865 = vmatprep.subr.mxu0 0.0
        %3866 = vmatpush1.msra.mxu0 0.0
        %3867 = vmatprep.subr.mxu0 0.0
        %3868 = vmatpush1.msra.mxu0 0.0
        %3869 = vmatprep.subr.mxu0 0.0
        %3870 = vmatpush1.msra.mxu0 0.0
        %3871 = vmatprep.subr.mxu0 0.0
        %3872 = vmatpush1.msra.mxu0 0.0
        %3873 = vmatprep.subr.mxu0 0.0
        %3874 = vmatpush1.msra.mxu0 0.0
        %3875 = vmatprep.subr.mxu0 0.0
        %3876 = vmatpush1.msra.mxu0 0.0
        %3877 = vmatprep.subr.mxu0 0.0
        %3878 = vmatpush1.msra.mxu0 0.0
        %3879 = vmatprep.subr.mxu0 0.0
        %3880 = vmatpush1.msra.mxu0 0.0
        %3881 = vmatprep.subr.mxu0 0.0
        %3882 = vmatpush1.msra.mxu0 0.0
        %3883 = vmatprep.subr.mxu0 0.0
        %3884 = vmatpush1.msra.mxu0 0.0
        %3885 = vmatprep.subr.mxu0 0.0
        %3886 = vmatpush1.msra.mxu0 0.0
        %3887 = vmatprep.subr.mxu0 0.0
        %3888 = vmatpush1.msra.mxu0 0.0
        %3889 = vmatprep.subr.mxu0 0.0
        %3890 = vmatpush1.msra.mxu0 0.0
        %3891 = vmatprep.subr.mxu0 0.0
        %3892 = vmatpush1.msra.mxu0 0.0
        %3893 = vmatprep.subr.mxu0 0.0
        %3894 = vmatpush1.msra.mxu0 0.0
        %3895 = vmatprep.subr.mxu0 0.0
        %3896 = vmatpush1.msra.mxu0 0.0
        %3897 = vmatprep.subr.mxu0 0.0
        %3898 = vmatpush1.msra.mxu0 0.0
        %3899 = vmatprep.mubr.f32.mxu0 0.0
        %3900 = vmatmul.mubr.f32.gmra.mrb[0].mxu0 %v3833
        %v3901 = vpop.f32.mrb[0].mxu0
        %v3902 = vadd.f32 0.0, %v3901
        %v3903 = vpop.f32.mrb[0].mxu0
        %3904 = vdwg.mxu0
        %v3906 = vsel %vm1345, %v3724, 0
        %3908 = vmatprep.subr.mxu0 0.0
        %3909 = vmatpush1.msra.mxu0 %v3062
        %3910 = vmatprep.subr.mxu0 0.0
        %3911 = vmatpush1.msra.mxu0 0.0
        %3912 = vmatprep.subr.mxu0 0.0
        %3913 = vmatpush1.msra.mxu0 0.0
        %3914 = vmatprep.subr.mxu0 0.0
        %3915 = vmatpush1.msra.mxu0 0.0
        %3916 = vmatprep.subr.mxu0 0.0
        %3917 = vmatpush1.msra.mxu0 0.0
        %3918 = vmatprep.subr.mxu0 0.0
        %3919 = vmatpush1.msra.mxu0 0.0
        %3920 = vmatprep.subr.mxu0 0.0
        %3921 = vmatpush1.msra.mxu0 0.0
        %3922 = vmatprep.subr.mxu0 0.0
        %3923 = vmatpush1.msra.mxu0 0.0
        %3924 = vmatprep.subr.mxu0 0.0
        %3925 = vmatpush1.msra.mxu0 0.0
        %3926 = vmatprep.subr.mxu0 0.0
        %3927 = vmatpush1.msra.mxu0 0.0
        %3928 = vmatprep.subr.mxu0 0.0
        %3929 = vmatpush1.msra.mxu0 0.0
        %3930 = vmatprep.subr.mxu0 0.0
        %3931 = vmatpush1.msra.mxu0 0.0
        %3932 = vmatprep.subr.mxu0 0.0
        %3933 = vmatpush1.msra.mxu0 0.0
        %3934 = vmatprep.subr.mxu0 0.0
        %3935 = vmatpush1.msra.mxu0 0.0
        %3936 = vmatprep.subr.mxu0 0.0
        %3937 = vmatpush1.msra.mxu0 0.0
        %3938 = vmatprep.subr.mxu0 0.0
        %3939 = vmatpush1.msra.mxu0 0.0
        %3940 = vmatprep.subr.mxu0 0.0
        %3941 = vmatpush1.msra.mxu0 0.0
        %3942 = vmatprep.subr.mxu0 0.0
        %3943 = vmatpush1.msra.mxu0 0.0
        %3944 = vmatprep.subr.mxu0 0.0
        %3945 = vmatpush1.msra.mxu0 0.0
        %3946 = vmatprep.subr.mxu0 0.0
        %3947 = vmatpush1.msra.mxu0 0.0
        %3948 = vmatprep.subr.mxu0 0.0
        %3949 = vmatpush1.msra.mxu0 0.0
        %3950 = vmatprep.subr.mxu0 0.0
        %3951 = vmatpush1.msra.mxu0 0.0
        %3952 = vmatprep.subr.mxu0 0.0
        %3953 = vmatpush1.msra.mxu0 0.0
        %3954 = vmatprep.subr.mxu0 0.0
        %3955 = vmatpush1.msra.mxu0 0.0
        %3956 = vmatprep.subr.mxu0 0.0
        %3957 = vmatpush1.msra.mxu0 0.0
        %3958 = vmatprep.subr.mxu0 0.0
        %3959 = vmatpush1.msra.mxu0 0.0
        %3960 = vmatprep.subr.mxu0 0.0
        %3961 = vmatpush1.msra.mxu0 0.0
        %3962 = vmatprep.subr.mxu0 0.0
        %3963 = vmatpush1.msra.mxu0 0.0
        %3964 = vmatprep.subr.mxu0 0.0
        %3965 = vmatpush1.msra.mxu0 0.0
        %3966 = vmatprep.subr.mxu0 0.0
        %3967 = vmatpush1.msra.mxu0 0.0
        %3968 = vmatprep.subr.mxu0 0.0
        %3969 = vmatpush1.msra.mxu0 0.0
        %3970 = vmatprep.subr.mxu0 0.0
        %3971 = vmatpush1.msra.mxu0 0.0
        %3972 = vmatprep.mubr.f32.mxu0 0.0
        %3973 = vmatmul.mubr.f32.gmra.mrb[0].mxu0 %v3906
        %v3974 = vpop.f32.mrb[0].mxu0
        %v3975 = vadd.f32 0.0, %v3974
        %v3976 = vpop.f32.mrb[0].mxu0
        %3977 = vdwg.mxu0
        %v3979 = vsel %vm1345, %v3726, 0
        %3981 = vmatprep.subr.mxu0 0.0
        %3982 = vmatpush1.msra.mxu0 %v3065
        %3983 = vmatprep.subr.mxu0 0.0
        %3984 = vmatpush1.msra.mxu0 0.0
        %3985 = vmatprep.subr.mxu0 0.0
        %3986 = vmatpush1.msra.mxu0 0.0
        %3987 = vmatprep.subr.mxu0 0.0
        %3988 = vmatpush1.msra.mxu0 0.0
        %3989 = vmatprep.subr.mxu0 0.0
        %3990 = vmatpush1.msra.mxu0 0.0
        %3991 = vmatprep.subr.mxu0 0.0
        %3992 = vmatpush1.msra.mxu0 0.0
        %3993 = vmatprep.subr.mxu0 0.0
        %3994 = vmatpush1.msra.mxu0 0.0
        %3995 = vmatprep.subr.mxu0 0.0
        %3996 = vmatpush1.msra.mxu0 0.0
        %3997 = vmatprep.subr.mxu0 0.0
        %3998 = vmatpush1.msra.mxu0 0.0
        %3999 = vmatprep.subr.mxu0 0.0
        %4000 = vmatpush1.msra.mxu0 0.0
        %4001 = vmatprep.subr.mxu0 0.0
        %4002 = vmatpush1.msra.mxu0 0.0
        %4003 = vmatprep.subr.mxu0 0.0
        %4004 = vmatpush1.msra.mxu0 0.0
        %4005 = vmatprep.subr.mxu0 0.0
        %4006 = vmatpush1.msra.mxu0 0.0
        %4007 = vmatprep.subr.mxu0 0.0
        %4008 = vmatpush1.msra.mxu0 0.0
        %4009 = vmatprep.subr.mxu0 0.0
        %4010 = vmatpush1.msra.mxu0 0.0
        %4011 = vmatprep.subr.mxu0 0.0
        %4012 = vmatpush1.msra.mxu0 0.0
        %4013 = vmatprep.subr.mxu0 0.0
        %4014 = vmatpush1.msra.mxu0 0.0
        %4015 = vmatprep.subr.mxu0 0.0
        %4016 = vmatpush1.msra.mxu0 0.0
        %4017 = vmatprep.subr.mxu0 0.0
        %4018 = vmatpush1.msra.mxu0 0.0
        %4019 = vmatprep.subr.mxu0 0.0
        %4020 = vmatpush1.msra.mxu0 0.0
        %4021 = vmatprep.subr.mxu0 0.0
        %4022 = vmatpush1.msra.mxu0 0.0
        %4023 = vmatprep.subr.mxu0 0.0
        %4024 = vmatpush1.msra.mxu0 0.0
        %4025 = vmatprep.subr.mxu0 0.0
        %4026 = vmatpush1.msra.mxu0 0.0
        %4027 = vmatprep.subr.mxu0 0.0
        %4028 = vmatpush1.msra.mxu0 0.0
        %4029 = vmatprep.subr.mxu0 0.0
        %4030 = vmatpush1.msra.mxu0 0.0
        %4031 = vmatprep.subr.mxu0 0.0
        %4032 = vmatpush1.msra.mxu0 0.0
        %4033 = vmatprep.subr.mxu0 0.0
        %4034 = vmatpush1.msra.mxu0 0.0
        %4035 = vmatprep.subr.mxu0 0.0
        %4036 = vmatpush1.msra.mxu0 0.0
        %4037 = vmatprep.subr.mxu0 0.0
        %4038 = vmatpush1.msra.mxu0 0.0
        %4039 = vmatprep.subr.mxu0 0.0
        %4040 = vmatpush1.msra.mxu0 0.0
        %4041 = vmatprep.subr.mxu0 0.0
        %4042 = vmatpush1.msra.mxu0 0.0
        %4043 = vmatprep.subr.mxu0 0.0
        %4044 = vmatpush1.msra.mxu0 0.0
        %4045 = vmatprep.mubr.f32.mxu0 0.0
        %4046 = vmatmul.mubr.f32.gmra.mrb[0].mxu0 %v3979
        %v4047 = vpop.f32.mrb[0].mxu0
        %v4048 = vadd.f32 0.0, %v4047
        %v4049 = vpop.f32.mrb[0].mxu0
        %4050 = vdwg.mxu0
        %v4052 = vsel %vm1345, %v3728, 0
        %4054 = vmatprep.subr.mxu0 0.0
        %4055 = vmatpush1.msra.mxu0 %v3068
        %4056 = vmatprep.subr.mxu0 0.0
        %4057 = vmatpush1.msra.mxu0 0.0
        %4058 = vmatprep.subr.mxu0 0.0
        %4059 = vmatpush1.msra.mxu0 0.0
        %4060 = vmatprep.subr.mxu0 0.0
        %4061 = vmatpush1.msra.mxu0 0.0
        %4062 = vmatprep.subr.mxu0 0.0
        %4063 = vmatpush1.msra.mxu0 0.0
        %4064 = vmatprep.subr.mxu0 0.0
        %4065 = vmatpush1.msra.mxu0 0.0
        %4066 = vmatprep.subr.mxu0 0.0
        %4067 = vmatpush1.msra.mxu0 0.0
        %4068 = vmatprep.subr.mxu0 0.0
        %4069 = vmatpush1.msra.mxu0 0.0
        %4070 = vmatprep.subr.mxu0 0.0
        %4071 = vmatpush1.msra.mxu0 0.0
        %4072 = vmatprep.subr.mxu0 0.0
        %4073 = vmatpush1.msra.mxu0 0.0
        %4074 = vmatprep.subr.mxu0 0.0
        %4075 = vmatpush1.msra.mxu0 0.0
        %4076 = vmatprep.subr.mxu0 0.0
        %4077 = vmatpush1.msra.mxu0 0.0
        %4078 = vmatprep.subr.mxu0 0.0
        %4079 = vmatpush1.msra.mxu0 0.0
        %4080 = vmatprep.subr.mxu0 0.0
        %4081 = vmatpush1.msra.mxu0 0.0
        %4082 = vmatprep.subr.mxu0 0.0
        %4083 = vmatpush1.msra.mxu0 0.0
        %4084 = vmatprep.subr.mxu0 0.0
        %4085 = vmatpush1.msra.mxu0 0.0
        %4086 = vmatprep.subr.mxu0 0.0
        %4087 = vmatpush1.msra.mxu0 0.0
        %4088 = vmatprep.subr.mxu0 0.0
        %4089 = vmatpush1.msra.mxu0 0.0
        %4090 = vmatprep.subr.mxu0 0.0
        %4091 = vmatpush1.msra.mxu0 0.0
        %4092 = vmatprep.subr.mxu0 0.0
        %4093 = vmatpush1.msra.mxu0 0.0
        %4094 = vmatprep.subr.mxu0 0.0
        %4095 = vmatpush1.msra.mxu0 0.0
        %4096 = vmatprep.subr.mxu0 0.0
        %4097 = vmatpush1.msra.mxu0 0.0
        %4098 = vmatprep.subr.mxu0 0.0
        %4099 = vmatpush1.msra.mxu0 0.0
        %4100 = vmatprep.subr.mxu0 0.0
        %4101 = vmatpush1.msra.mxu0 0.0
        %4102 = vmatprep.subr.mxu0 0.0
        %4103 = vmatpush1.msra.mxu0 0.0
        %4104 = vmatprep.subr.mxu0 0.0
        %4105 = vmatpush1.msra.mxu0 0.0
        %4106 = vmatprep.subr.mxu0 0.0
        %4107 = vmatpush1.msra.mxu0 0.0
        %4108 = vmatprep.subr.mxu0 0.0
        %4109 = vmatpush1.msra.mxu0 0.0
        %4110 = vmatprep.subr.mxu0 0.0
        %4111 = vmatpush1.msra.mxu0 0.0
        %4112 = vmatprep.subr.mxu0 0.0
        %4113 = vmatpush1.msra.mxu0 0.0
        %4114 = vmatprep.subr.mxu0 0.0
        %4115 = vmatpush1.msra.mxu0 0.0
        %4116 = vmatprep.subr.mxu0 0.0
        %4117 = vmatpush1.msra.mxu0 0.0
        %4118 = vmatprep.mubr.f32.mxu0 0.0
        %4119 = vmatmul.mubr.f32.gmra.mrb[0].mxu0 %v4052
        %v4120 = vpop.f32.mrb[0].mxu0
        %v4121 = vadd.f32 0.0, %v4120
        %v4122 = vpop.f32.mrb[0].mxu0
        %4123 = vdwg.mxu0
        %v4125 = vsel %vm1345, %v3730, 0
        %4127 = vmatprep.subr.mxu0 0.0
        %4128 = vmatpush1.msra.mxu0 %v3071
        %4129 = vmatprep.subr.mxu0 0.0
        %4130 = vmatpush1.msra.mxu0 0.0
        %4131 = vmatprep.subr.mxu0 0.0
        %4132 = vmatpush1.msra.mxu0 0.0
        %4133 = vmatprep.subr.mxu0 0.0
        %4134 = vmatpush1.msra.mxu0 0.0
        %4135 = vmatprep.subr.mxu0 0.0
        %4136 = vmatpush1.msra.mxu0 0.0
        %4137 = vmatprep.subr.mxu0 0.0
        %4138 = vmatpush1.msra.mxu0 0.0
        %4139 = vmatprep.subr.mxu0 0.0
        %4140 = vmatpush1.msra.mxu0 0.0
        %4141 = vmatprep.subr.mxu0 0.0
        %4142 = vmatpush1.msra.mxu0 0.0
        %4143 = vmatprep.subr.mxu0 0.0
        %4144 = vmatpush1.msra.mxu0 0.0
        %4145 = vmatprep.subr.mxu0 0.0
        %4146 = vmatpush1.msra.mxu0 0.0
        %4147 = vmatprep.subr.mxu0 0.0
        %4148 = vmatpush1.msra.mxu0 0.0
        %4149 = vmatprep.subr.mxu0 0.0
        %4150 = vmatpush1.msra.mxu0 0.0
        %4151 = vmatprep.subr.mxu0 0.0
        %4152 = vmatpush1.msra.mxu0 0.0
        %4153 = vmatprep.subr.mxu0 0.0
        %4154 = vmatpush1.msra.mxu0 0.0
        %4155 = vmatprep.subr.mxu0 0.0
        %4156 = vmatpush1.msra.mxu0 0.0
        %4157 = vmatprep.subr.mxu0 0.0
        %4158 = vmatpush1.msra.mxu0 0.0
        %4159 = vmatprep.subr.mxu0 0.0
        %4160 = vmatpush1.msra.mxu0 0.0
        %4161 = vmatprep.subr.mxu0 0.0
        %4162 = vmatpush1.msra.mxu0 0.0
        %4163 = vmatprep.subr.mxu0 0.0
        %4164 = vmatpush1.msra.mxu0 0.0
        %4165 = vmatprep.subr.mxu0 0.0
        %4166 = vmatpush1.msra.mxu0 0.0
        %4167 = vmatprep.subr.mxu0 0.0
        %4168 = vmatpush1.msra.mxu0 0.0
        %4169 = vmatprep.subr.mxu0 0.0
        %4170 = vmatpush1.msra.mxu0 0.0
        %4171 = vmatprep.subr.mxu0 0.0
        %4172 = vmatpush1.msra.mxu0 0.0
        %4173 = vmatprep.subr.mxu0 0.0
        %4174 = vmatpush1.msra.mxu0 0.0
        %4175 = vmatprep.subr.mxu0 0.0
        %4176 = vmatpush1.msra.mxu0 0.0
        %4177 = vmatprep.subr.mxu0 0.0
        %4178 = vmatpush1.msra.mxu0 0.0
        %4179 = vmatprep.subr.mxu0 0.0
        %4180 = vmatpush1.msra.mxu0 0.0
        %4181 = vmatprep.subr.mxu0 0.0
        %4182 = vmatpush1.msra.mxu0 0.0
        %4183 = vmatprep.subr.mxu0 0.0
        %4184 = vmatpush1.msra.mxu0 0.0
        %4185 = vmatprep.subr.mxu0 0.0
        %4186 = vmatpush1.msra.mxu0 0.0
        %4187 = vmatprep.subr.mxu0 0.0
        %4188 = vmatpush1.msra.mxu0 0.0
        %4189 = vmatprep.subr.mxu0 0.0
        %4190 = vmatpush1.msra.mxu0 0.0
        %4191 = vmatprep.mubr.f32.mxu0 0.0
        %4192 = vmatmul.mubr.f32.gmra.mrb[0].mxu0 %v4125
        %v4193 = vpop.f32.mrb[0].mxu0
        %v4194 = vadd.f32 0.0, %v4193
        %v4195 = vpop.f32.mrb[0].mxu0
        %4196 = vdwg.mxu0
        %v4198 = vsel %vm1345, %v3732, 0
        %4200 = vmatprep.subr.mxu0 0.0
        %4201 = vmatpush1.msra.mxu0 %v3074
        %4202 = vmatprep.subr.mxu0 0.0
        %4203 = vmatpush1.msra.mxu0 0.0
        %4204 = vmatprep.subr.mxu0 0.0
        %4205 = vmatpush1.msra.mxu0 0.0
        %4206 = vmatprep.subr.mxu0 0.0
        %4207 = vmatpush1.msra.mxu0 0.0
        %4208 = vmatprep.subr.mxu0 0.0
        %4209 = vmatpush1.msra.mxu0 0.0
        %4210 = vmatprep.subr.mxu0 0.0
        %4211 = vmatpush1.msra.mxu0 0.0
        %4212 = vmatprep.subr.mxu0 0.0
        %4213 = vmatpush1.msra.mxu0 0.0
        %4214 = vmatprep.subr.mxu0 0.0
        %4215 = vmatpush1.msra.mxu0 0.0
        %4216 = vmatprep.subr.mxu0 0.0
        %4217 = vmatpush1.msra.mxu0 0.0
        %4218 = vmatprep.subr.mxu0 0.0
        %4219 = vmatpush1.msra.mxu0 0.0
        %4220 = vmatprep.subr.mxu0 0.0
        %4221 = vmatpush1.msra.mxu0 0.0
        %4222 = vmatprep.subr.mxu0 0.0
        %4223 = vmatpush1.msra.mxu0 0.0
        %4224 = vmatprep.subr.mxu0 0.0
        %4225 = vmatpush1.msra.mxu0 0.0
        %4226 = vmatprep.subr.mxu0 0.0
        %4227 = vmatpush1.msra.mxu0 0.0
        %4228 = vmatprep.subr.mxu0 0.0
        %4229 = vmatpush1.msra.mxu0 0.0
        %4230 = vmatprep.subr.mxu0 0.0
        %4231 = vmatpush1.msra.mxu0 0.0
        %4232 = vmatprep.subr.mxu0 0.0
        %4233 = vmatpush1.msra.mxu0 0.0
        %4234 = vmatprep.subr.mxu0 0.0
        %4235 = vmatpush1.msra.mxu0 0.0
        %4236 = vmatprep.subr.mxu0 0.0
        %4237 = vmatpush1.msra.mxu0 0.0
        %4238 = vmatprep.subr.mxu0 0.0
        %4239 = vmatpush1.msra.mxu0 0.0
        %4240 = vmatprep.subr.mxu0 0.0
        %4241 = vmatpush1.msra.mxu0 0.0
        %4242 = vmatprep.subr.mxu0 0.0
        %4243 = vmatpush1.msra.mxu0 0.0
        %4244 = vmatprep.subr.mxu0 0.0
        %4245 = vmatpush1.msra.mxu0 0.0
        %4246 = vmatprep.subr.mxu0 0.0
        %4247 = vmatpush1.msra.mxu0 0.0
        %4248 = vmatprep.subr.mxu0 0.0
        %4249 = vmatpush1.msra.mxu0 0.0
        %4250 = vmatprep.subr.mxu0 0.0
        %4251 = vmatpush1.msra.mxu0 0.0
        %4252 = vmatprep.subr.mxu0 0.0
        %4253 = vmatpush1.msra.mxu0 0.0
        %4254 = vmatprep.subr.mxu0 0.0
        %4255 = vmatpush1.msra.mxu0 0.0
        %4256 = vmatprep.subr.mxu0 0.0
        %4257 = vmatpush1.msra.mxu0 0.0
        %4258 = vmatprep.subr.mxu0 0.0
        %4259 = vmatpush1.msra.mxu0 0.0
        %4260 = vmatprep.subr.mxu0 0.0
        %4261 = vmatpush1.msra.mxu0 0.0
        %4262 = vmatprep.subr.mxu0 0.0
        %4263 = vmatpush1.msra.mxu0 0.0
        %4264 = vmatprep.mubr.f32.mxu0 0.0
        %4265 = vmatmul.mubr.f32.gmra.mrb[0].mxu0 %v4198
        %v4266 = vpop.f32.mrb[0].mxu0
        %v4267 = vadd.f32 0.0, %v4266
        %v4268 = vpop.f32.mrb[0].mxu0
        %4269 = vdwg.mxu0
        %v4271 = vsel %vm1345, %v3734, 0
        %4273 = vmatprep.subr.mxu0 0.0
        %4274 = vmatpush1.msra.mxu0 %v3077
        %4275 = vmatprep.subr.mxu0 0.0
        %4276 = vmatpush1.msra.mxu0 0.0
        %4277 = vmatprep.subr.mxu0 0.0
        %4278 = vmatpush1.msra.mxu0 0.0
        %4279 = vmatprep.subr.mxu0 0.0
        %4280 = vmatpush1.msra.mxu0 0.0
        %4281 = vmatprep.subr.mxu0 0.0
        %4282 = vmatpush1.msra.mxu0 0.0
        %4283 = vmatprep.subr.mxu0 0.0
        %4284 = vmatpush1.msra.mxu0 0.0
        %4285 = vmatprep.subr.mxu0 0.0
        %4286 = vmatpush1.msra.mxu0 0.0
        %4287 = vmatprep.subr.mxu0 0.0
        %4288 = vmatpush1.msra.mxu0 0.0
        %4289 = vmatprep.subr.mxu0 0.0
        %4290 = vmatpush1.msra.mxu0 0.0
        %4291 = vmatprep.subr.mxu0 0.0
        %4292 = vmatpush1.msra.mxu0 0.0
        %4293 = vmatprep.subr.mxu0 0.0
        %4294 = vmatpush1.msra.mxu0 0.0
        %4295 = vmatprep.subr.mxu0 0.0
        %4296 = vmatpush1.msra.mxu0 0.0
        %4297 = vmatprep.subr.mxu0 0.0
        %4298 = vmatpush1.msra.mxu0 0.0
        %4299 = vmatprep.subr.mxu0 0.0
        %4300 = vmatpush1.msra.mxu0 0.0
        %4301 = vmatprep.subr.mxu0 0.0
        %4302 = vmatpush1.msra.mxu0 0.0
        %4303 = vmatprep.subr.mxu0 0.0
        %4304 = vmatpush1.msra.mxu0 0.0
        %4305 = vmatprep.subr.mxu0 0.0
        %4306 = vmatpush1.msra.mxu0 0.0
        %4307 = vmatprep.subr.mxu0 0.0
        %4308 = vmatpush1.msra.mxu0 0.0
        %4309 = vmatprep.subr.mxu0 0.0
        %4310 = vmatpush1.msra.mxu0 0.0
        %4311 = vmatprep.subr.mxu0 0.0
        %4312 = vmatpush1.msra.mxu0 0.0
        %4313 = vmatprep.subr.mxu0 0.0
        %4314 = vmatpush1.msra.mxu0 0.0
        %4315 = vmatprep.subr.mxu0 0.0
        %4316 = vmatpush1.msra.mxu0 0.0
        %4317 = vmatprep.subr.mxu0 0.0
        %4318 = vmatpush1.msra.mxu0 0.0
        %4319 = vmatprep.subr.mxu0 0.0
        %4320 = vmatpush1.msra.mxu0 0.0
        %4321 = vmatprep.subr.mxu0 0.0
        %4322 = vmatpush1.msra.mxu0 0.0
        %4323 = vmatprep.subr.mxu0 0.0
        %4324 = vmatpush1.msra.mxu0 0.0
        %4325 = vmatprep.subr.mxu0 0.0
        %4326 = vmatpush1.msra.mxu0 0.0
        %4327 = vmatprep.subr.mxu0 0.0
        %4328 = vmatpush1.msra.mxu0 0.0
        %4329 = vmatprep.subr.mxu0 0.0
        %4330 = vmatpush1.msra.mxu0 0.0
        %4331 = vmatprep.subr.mxu0 0.0
        %4332 = vmatpush1.msra.mxu0 0.0
        %4333 = vmatprep.subr.mxu0 0.0
        %4334 = vmatpush1.msra.mxu0 0.0
        %4335 = vmatprep.subr.mxu0 0.0
        %4336 = vmatpush1.msra.mxu0 0.0
        %4337 = vmatprep.mubr.f32.mxu0 0.0
        %4338 = vmatmul.mubr.f32.gmra.mrb[0].mxu0 %v4271
        %v4339 = vpop.f32.mrb[0].mxu0
        %v4340 = vadd.f32 0.0, %v4339
        %v4341 = vpop.f32.mrb[0].mxu0
        %4342 = vdwg.mxu0
        %v4343 = vrcp.pop %v3737
        %v4344 = vrcp.pop %v3740
        %v4345 = vrcp.pop %v3743
        %v4346 = vrcp.pop %v3746
        %v4347 = vrcp.pop %v3749
        %v4348 = vrcp.pop %v3752
        %v4349 = vrcp.pop %v3755
        %v4350 = vrcp.pop %v3758
        %v4351 = vmul.f32 %v3829, %v4343
        %v4352 = vmul.f32 %v3902, %v4344
        %v4353 = vmul.f32 %v3975, %v4345
        %v4354 = vmul.f32 %v4048, %v4346
        %v4355 = vmul.f32 %v4121, %v4347
        %v4356 = vmul.f32 %v4194, %v4348
        %v4357 = vmul.f32 %v4267, %v4349
        %v4358 = vmul.f32 %v4340, %v4350
        %4360 = vrot.lane.b32.xlu0 %v4352, 8
        %v4361 = vpop.permute.xlu0 %4360
        %4364 = vrot.lane.b32.xlu0 %v4353, 16
        %v4365 = vpop.permute.xlu0 %4364
        %4368 = vrot.lane.b32.xlu0 %v4354, 24
        %v4369 = vpop.permute.xlu0 %4368
        %4372 = vrot.lane.b32.xlu0 %v4355, 32
        %v4373 = vpop.permute.xlu0 %4372
        %4376 = vrot.lane.b32.xlu0 %v4356, 40
        %v4377 = vpop.permute.xlu0 %4376
        %4380 = vrot.lane.b32.xlu0 %v4357, 48
        %v4381 = vpop.permute.xlu0 %4380
        %4384 = vrot.lane.b32.xlu0 %v4358, 56
        %v4385 = vpop.permute.xlu0 %4384
        %v4387 = vsel %vm1345, %v4351, %v4361
        %v4388 = vsel %vm2653, %v4387, %v4365
        %v4389 = vsel %vm2655, %v4388, %v4369
        %v4390 = vsel %vm2657, %v4389, %v4373
        %v4391 = vsel %vm2659, %v4390, %v4377
        %v4392 = vsel %vm2661, %v4391, %v4381
        %v4393 = vsel %vm2663, %v4392, %v4385
        %v4395 = vlaneseq
        %v4396 = vshrl.u32 %v4395, 7
        %v4397 = vsub.s32 0, %v4396
        %v4398 = vrot.slane %v1170, %v4397
        %v4401 = vsel %vm1231, %v4393, 0
        %4403 = vmatprep.subr.mxu0 0.0
        %4404 = vmatpush1.msra.mxu0 %v1162
        %4405 = vmatprep.subr.mxu0 0.0
        %4406 = vmatpush1.msra.mxu0 %v1163
        %4407 = vmatprep.subr.mxu0 0.0
        %4408 = vmatpush1.msra.mxu0 %v1164
        %4409 = vmatprep.subr.mxu0 0.0
        %4410 = vmatpush1.msra.mxu0 %v1165
        %4411 = vmatprep.subr.mxu0 0.0
        %4412 = vmatpush1.msra.mxu0 %v1166
        %4413 = vmatprep.subr.mxu0 0.0
        %4414 = vmatpush1.msra.mxu0 %v1167
        %4415 = vmatprep.subr.mxu0 0.0
        %4416 = vmatpush1.msra.mxu0 %v1168
        %4417 = vmatprep.subr.mxu0 0.0
        %4418 = vmatpush1.msra.mxu0 %v1169
        %4419 = vmatprep.subr.mxu0 0.0
        %4420 = vmatpush1.msra.mxu0 0.0
        %4421 = vmatprep.subr.mxu0 0.0
        %4422 = vmatpush1.msra.mxu0 0.0
        %4423 = vmatprep.subr.mxu0 0.0
        %4424 = vmatpush1.msra.mxu0 0.0
        %4425 = vmatprep.subr.mxu0 0.0
        %4426 = vmatpush1.msra.mxu0 0.0
        %4427 = vmatprep.subr.mxu0 0.0
        %4428 = vmatpush1.msra.mxu0 0.0
        %4429 = vmatprep.subr.mxu0 0.0
        %4430 = vmatpush1.msra.mxu0 0.0
        %4431 = vmatprep.subr.mxu0 0.0
        %4432 = vmatpush1.msra.mxu0 0.0
        %4433 = vmatprep.subr.mxu0 0.0
        %4434 = vmatpush1.msra.mxu0 0.0
        %4435 = vmatprep.subr.mxu0 0.0
        %4436 = vmatpush1.msra.mxu0 0.0
        %4437 = vmatprep.subr.mxu0 0.0
        %4438 = vmatpush1.msra.mxu0 0.0
        %4439 = vmatprep.subr.mxu0 0.0
        %4440 = vmatpush1.msra.mxu0 0.0
        %4441 = vmatprep.subr.mxu0 0.0
        %4442 = vmatpush1.msra.mxu0 0.0
        %4443 = vmatprep.subr.mxu0 0.0
        %4444 = vmatpush1.msra.mxu0 0.0
        %4445 = vmatprep.subr.mxu0 0.0
        %4446 = vmatpush1.msra.mxu0 0.0
        %4447 = vmatprep.subr.mxu0 0.0
        %4448 = vmatpush1.msra.mxu0 0.0
        %4449 = vmatprep.subr.mxu0 0.0
        %4450 = vmatpush1.msra.mxu0 0.0
        %4451 = vmatprep.subr.mxu0 0.0
        %4452 = vmatpush1.msra.mxu0 0.0
        %4453 = vmatprep.subr.mxu0 0.0
        %4454 = vmatpush1.msra.mxu0 0.0
        %4455 = vmatprep.subr.mxu0 0.0
        %4456 = vmatpush1.msra.mxu0 0.0
        %4457 = vmatprep.subr.mxu0 0.0
        %4458 = vmatpush1.msra.mxu0 0.0
        %4459 = vmatprep.subr.mxu0 0.0
        %4460 = vmatpush1.msra.mxu0 0.0
        %4461 = vmatprep.subr.mxu0 0.0
        %4462 = vmatpush1.msra.mxu0 0.0
        %4463 = vmatprep.subr.mxu0 0.0
        %4464 = vmatpush1.msra.mxu0 0.0
        %4465 = vmatprep.subr.mxu0 0.0
        %4466 = vmatpush1.msra.mxu0 0.0
        %4467 = vmatprep.mubr.f32.mxu0 0.0
        %4468 = vmatmul.mubr.f32.gmra.mrb[0].mxu0 %v4401
        %v4469 = vpop.f32.mrb[0].mxu0
        %v4470 = vadd.f32 %v4398, %v4469
        %v4471 = vpop.f32.mrb[0].mxu0
        %4472 = vdwg.mxu0
        %v4473 = vadd.f32 %v2956, %v4470
        %v4474 = vsel %vm1231, %v4473, 0.0
        %4475 = vadd.xlane.f32.xlu0 %v4474
        %v4476 = vpop.xlane.xlu0 %4475
        %v4477 = vmul.f32 %v4476, %v2748
        %v4478 = vsub.f32 %v4473, %v4477
        %v4479 = vmul.f32 %v4478, %v4478
        %v4480 = vsel %vm1231, %v4479, 0.0
        %4481 = vadd.xlane.f32.xlu0 %v4480
        %v4482 = vpop.xlane.xlu0 %4481
        %v4483 = vmul.f32 %v4482, %v2748
        %v4484 = vadd.f32 %v4483, 1e-05
        %v4485 = vrsqrt.pop %v4484
        %v4486 = vmul.f32 %v4478, %v4485
        %v4488 = vlaneseq
        %v4489 = vshrl.u32 %v4488, 7
        %v4490 = vsub.s32 0, %v4489
        %v4491 = vrot.slane %v1197, %v4490
        %v4493 = vmul.f32 %v4486, %v4491
        %v4495 = vlaneseq
        %v4496 = vshrl.u32 %v4495, 7
        %v4497 = vsub.s32 0, %v4496
        %v4498 = vrot.slane %v1198, %v4497
        %v4500 = vadd.f32 %v4493, %v4498
        %v4502 = vlaneseq
        %v4503 = vshrl.u32 %v4502, 7
        %v4504 = vsub.s32 0, %v4503
        %v4505 = vrot.slane %v1179, %v4504
        %v4508 = vsel %vm1231, %v4500, 0
        %4510 = vmatprep.subr.mxu0 0.0
        %4511 = vmatpush1.msra.mxu0 %v1171
        %4512 = vmatprep.subr.mxu0 0.0
        %4513 = vmatpush1.msra.mxu0 %v1172
        %4514 = vmatprep.subr.mxu0 0.0
        %4515 = vmatpush1.msra.mxu0 %v1173
        %4516 = vmatprep.subr.mxu0 0.0
        %4517 = vmatpush1.msra.mxu0 %v1174
        %4518 = vmatprep.subr.mxu0 0.0
        %4519 = vmatpush1.msra.mxu0 %v1175
        %4520 = vmatprep.subr.mxu0 0.0
        %4521 = vmatpush1.msra.mxu0 %v1176
        %4522 = vmatprep.subr.mxu0 0.0
        %4523 = vmatpush1.msra.mxu0 %v1177
        %4524 = vmatprep.subr.mxu0 0.0
        %4525 = vmatpush1.msra.mxu0 %v1178
        %4526 = vmatprep.subr.mxu0 0.0
        %4527 = vmatpush1.msra.mxu0 0.0
        %4528 = vmatprep.subr.mxu0 0.0
        %4529 = vmatpush1.msra.mxu0 0.0
        %4530 = vmatprep.subr.mxu0 0.0
        %4531 = vmatpush1.msra.mxu0 0.0
        %4532 = vmatprep.subr.mxu0 0.0
        %4533 = vmatpush1.msra.mxu0 0.0
        %4534 = vmatprep.subr.mxu0 0.0
        %4535 = vmatpush1.msra.mxu0 0.0
        %4536 = vmatprep.subr.mxu0 0.0
        %4537 = vmatpush1.msra.mxu0 0.0
        %4538 = vmatprep.subr.mxu0 0.0
        %4539 = vmatpush1.msra.mxu0 0.0
        %4540 = vmatprep.subr.mxu0 0.0
        %4541 = vmatpush1.msra.mxu0 0.0
        %4542 = vmatprep.subr.mxu0 0.0
        %4543 = vmatpush1.msra.mxu0 0.0
        %4544 = vmatprep.subr.mxu0 0.0
        %4545 = vmatpush1.msra.mxu0 0.0
        %4546 = vmatprep.subr.mxu0 0.0
        %4547 = vmatpush1.msra.mxu0 0.0
        %4548 = vmatprep.subr.mxu0 0.0
        %4549 = vmatpush1.msra.mxu0 0.0
        %4550 = vmatprep.subr.mxu0 0.0
        %4551 = vmatpush1.msra.mxu0 0.0
        %4552 = vmatprep.subr.mxu0 0.0
        %4553 = vmatpush1.msra.mxu0 0.0
        %4554 = vmatprep.subr.mxu0 0.0
        %4555 = vmatpush1.msra.mxu0 0.0
        %4556 = vmatprep.subr.mxu0 0.0
        %4557 = vmatpush1.msra.mxu0 0.0
        %4558 = vmatprep.subr.mxu0 0.0
        %4559 = vmatpush1.msra.mxu0 0.0
        %4560 = vmatprep.subr.mxu0 0.0
        %4561 = vmatpush1.msra.mxu0 0.0
        %4562 = vmatprep.subr.mxu0 0.0
        %4563 = vmatpush1.msra.mxu0 0.0
        %4564 = vmatprep.subr.mxu0 0.0
        %4565 = vmatpush1.msra.mxu0 0.0
        %4566 = vmatprep.subr.mxu0 0.0
        %4567 = vmatpush1.msra.mxu0 0.0
        %4568 = vmatprep.subr.mxu0 0.0
        %4569 = vmatpush1.msra.mxu0 0.0
        %4570 = vmatprep.subr.mxu0 0.0
        %4571 = vmatpush1.msra.mxu0 0.0
        %4572 = vmatprep.subr.mxu0 0.0
        %4573 = vmatpush1.msra.mxu0 0.0
        %4574 = vmatprep.mubr.f32.mxu0 0.0
        %4575 = vmatmul.mubr.f32.gmra.mrb[0].mxu0 %v4508
        %v4576 = vpop.f32.mrb[0].mxu0
        %v4577 = vadd.f32 %v4505, %v4576
        %v4578 = vpop.f32.mrb[0].mxu0
        %4579 = vdwg.mxu0
        %v4580 = vmax.f32 %v4577, 0.0
        %v4582 = vlaneseq
        %v4583 = vshrl.u32 %v4582, 7
        %v4584 = vsub.s32 0, %v4583
        %v4585 = vrot.slane %v1196, %v4584
        %4587 = vmatprep.subr.mxu0 0.0
        %4588 = vmatpush1.msra.mxu0 %v1180
        %4589 = vmatprep.subr.mxu0 0.0
        %4590 = vmatpush1.msra.mxu0 %v1181
        %4591 = vmatprep.subr.mxu0 0.0
        %4592 = vmatpush1.msra.mxu0 %v1182
        %4593 = vmatprep.subr.mxu0 0.0
        %4594 = vmatpush1.msra.mxu0 %v1183
        %4595 = vmatprep.subr.mxu0 0.0
        %4596 = vmatpush1.msra.mxu0 %v1184
        %4597 = vmatprep.subr.mxu0 0.0
        %4598 = vmatpush1.msra.mxu0 %v1185
        %4599 = vmatprep.subr.mxu0 0.0
        %4600 = vmatpush1.msra.mxu0 %v1186
        %4601 = vmatprep.subr.mxu0 0.0
        %4602 = vmatpush1.msra.mxu0 %v1187
        %4603 = vmatprep.subr.mxu0 0.0
        %4604 = vmatpush1.msra.mxu0 %v1188
        %4605 = vmatprep.subr.mxu0 0.0
        %4606 = vmatpush1.msra.mxu0 %v1189
        %4607 = vmatprep.subr.mxu0 0.0
        %4608 = vmatpush1.msra.mxu0 %v1190
        %4609 = vmatprep.subr.mxu0 0.0
        %4610 = vmatpush1.msra.mxu0 %v1191
        %4611 = vmatprep.subr.mxu0 0.0
        %4612 = vmatpush1.msra.mxu0 %v1192
        %4613 = vmatprep.subr.mxu0 0.0
        %4614 = vmatpush1.msra.mxu0 %v1193
        %4615 = vmatprep.subr.mxu0 0.0
        %4616 = vmatpush1.msra.mxu0 %v1194
        %4617 = vmatprep.subr.mxu0 0.0
        %4618 = vmatpush1.msra.mxu0 %v1195
        %4619 = vmatprep.subr.mxu0 0.0
        %4620 = vmatpush1.msra.mxu0 0.0
        %4621 = vmatprep.subr.mxu0 0.0
        %4622 = vmatpush1.msra.mxu0 0.0
        %4623 = vmatprep.subr.mxu0 0.0
        %4624 = vmatpush1.msra.mxu0 0.0
        %4625 = vmatprep.subr.mxu0 0.0
        %4626 = vmatpush1.msra.mxu0 0.0
        %4627 = vmatprep.subr.mxu0 0.0
        %4628 = vmatpush1.msra.mxu0 0.0
        %4629 = vmatprep.subr.mxu0 0.0
        %4630 = vmatpush1.msra.mxu0 0.0
        %4631 = vmatprep.subr.mxu0 0.0
        %4632 = vmatpush1.msra.mxu0 0.0
        %4633 = vmatprep.subr.mxu0 0.0
        %4634 = vmatpush1.msra.mxu0 0.0
        %4635 = vmatprep.subr.mxu0 0.0
        %4636 = vmatpush1.msra.mxu0 0.0
        %4637 = vmatprep.subr.mxu0 0.0
        %4638 = vmatpush1.msra.mxu0 0.0
        %4639 = vmatprep.subr.mxu0 0.0
        %4640 = vmatpush1.msra.mxu0 0.0
        %4641 = vmatprep.subr.mxu0 0.0
        %4642 = vmatpush1.msra.mxu0 0.0
        %4643 = vmatprep.subr.mxu0 0.0
        %4644 = vmatpush1.msra.mxu0 0.0
        %4645 = vmatprep.subr.mxu0 0.0
        %4646 = vmatpush1.msra.mxu0 0.0
        %4647 = vmatprep.subr.mxu0 0.0
        %4648 = vmatpush1.msra.mxu0 0.0
        %4649 = vmatprep.subr.mxu0 0.0
        %4650 = vmatpush1.msra.mxu0 0.0
        %4651 = vmatprep.mubr.f32.mxu0 0.0
        %4652 = vmatmul.mubr.f32.gmra.mrb[0].mxu0 %v4580
        %v4653 = vpop.f32.mrb[0].mxu0
        %v4654 = vadd.f32 %v4585, %v4653
        %v4655 = vpop.f32.mrb[0].mxu0
        %4656 = vdwg.mxu0
        %v4657 = vadd.f32 %v4500, %v4654
        %v4658 = vsel %vm1231, %v4657, 0.0
        %4659 = vadd.xlane.f32.xlu0 %v4658
        %v4660 = vpop.xlane.xlu0 %4659
        %v4661 = vmul.f32 %v4660, %v2748
        %v4662 = vsub.f32 %v4657, %v4661
        %v4663 = vmul.f32 %v4662, %v4662
        %v4664 = vsel %vm1231, %v4663, 0.0
        %4665 = vadd.xlane.f32.xlu0 %v4664
        %v4666 = vpop.xlane.xlu0 %4665
        %v4667 = vmul.f32 %v4666, %v2748
        %v4668 = vadd.f32 %v4667, 1e-05
        %v4669 = vrsqrt.pop %v4668
        %v4670 = vmul.f32 %v4662, %v4669
        %v4672 = vlaneseq
        %v4673 = vshrl.u32 %v4672, 7
        %v4674 = vsub.s32 0, %v4673
        %v4675 = vrot.slane %v1199, %v4674
        %v4677 = vmul.f32 %v4670, %v4675
        %v4679 = vlaneseq
        %v4680 = vshrl.u32 %v4679, 7
        %v4681 = vsub.s32 0, %v4680
        %v4682 = vrot.slane %v1200, %v4681
        %v4684 = vadd.f32 %v4677, %v4682
        %v4686 = vlaneseq
        %v4687 = vshrl.u32 %v4686, 7
        %v4688 = vsub.s32 0, %v4687
        %v4689 = vrot.slane %v1209, %v4688
        %v4692 = vsel %vm1231, %v4684, 0
        %4694 = vmatprep.subr.mxu0 0.0
        %4695 = vmatpush1.msra.mxu0 %v1201
        %4696 = vmatprep.subr.mxu0 0.0
        %4697 = vmatpush1.msra.mxu0 %v1202
        %4698 = vmatprep.subr.mxu0 0.0
        %4699 = vmatpush1.msra.mxu0 %v1203
        %4700 = vmatprep.subr.mxu0 0.0
        %4701 = vmatpush1.msra.mxu0 %v1204
        %4702 = vmatprep.subr.mxu0 0.0
        %4703 = vmatpush1.msra.mxu0 %v1205
        %4704 = vmatprep.subr.mxu0 0.0
        %4705 = vmatpush1.msra.mxu0 %v1206
        %4706 = vmatprep.subr.mxu0 0.0
        %4707 = vmatpush1.msra.mxu0 %v1207
        %4708 = vmatprep.subr.mxu0 0.0
        %4709 = vmatpush1.msra.mxu0 %v1208
        %4710 = vmatprep.subr.mxu0 0.0
        %4711 = vmatpush1.msra.mxu0 0.0
        %4712 = vmatprep.subr.mxu0 0.0
        %4713 = vmatpush1.msra.mxu0 0.0
        %4714 = vmatprep.subr.mxu0 0.0
        %4715 = vmatpush1.msra.mxu0 0.0
        %4716 = vmatprep.subr.mxu0 0.0
        %4717 = vmatpush1.msra.mxu0 0.0
        %4718 = vmatprep.subr.mxu0 0.0
        %4719 = vmatpush1.msra.mxu0 0.0
        %4720 = vmatprep.subr.mxu0 0.0
        %4721 = vmatpush1.msra.mxu0 0.0
        %4722 = vmatprep.subr.mxu0 0.0
        %4723 = vmatpush1.msra.mxu0 0.0
        %4724 = vmatprep.subr.mxu0 0.0
        %4725 = vmatpush1.msra.mxu0 0.0
        %4726 = vmatprep.subr.mxu0 0.0
        %4727 = vmatpush1.msra.mxu0 0.0
        %4728 = vmatprep.subr.mxu0 0.0
        %4729 = vmatpush1.msra.mxu0 0.0
        %4730 = vmatprep.subr.mxu0 0.0
        %4731 = vmatpush1.msra.mxu0 0.0
        %4732 = vmatprep.subr.mxu0 0.0
        %4733 = vmatpush1.msra.mxu0 0.0
        %4734 = vmatprep.subr.mxu0 0.0
        %4735 = vmatpush1.msra.mxu0 0.0
        %4736 = vmatprep.subr.mxu0 0.0
        %4737 = vmatpush1.msra.mxu0 0.0
        %4738 = vmatprep.subr.mxu0 0.0
        %4739 = vmatpush1.msra.mxu0 0.0
        %4740 = vmatprep.subr.mxu0 0.0
        %4741 = vmatpush1.msra.mxu0 0.0
        %4742 = vmatprep.subr.mxu0 0.0
        %4743 = vmatpush1.msra.mxu0 0.0
        %4744 = vmatprep.subr.mxu0 0.0
        %4745 = vmatpush1.msra.mxu0 0.0
        %4746 = vmatprep.subr.mxu0 0.0
        %4747 = vmatpush1.msra.mxu0 0.0
        %4748 = vmatprep.subr.mxu0 0.0
        %4749 = vmatpush1.msra.mxu0 0.0
        %4750 = vmatprep.subr.mxu0 0.0
        %4751 = vmatpush1.msra.mxu0 0.0
        %4752 = vmatprep.subr.mxu0 0.0
        %4753 = vmatpush1.msra.mxu0 0.0
        %4754 = vmatprep.subr.mxu0 0.0
        %4755 = vmatpush1.msra.mxu0 0.0
        %4756 = vmatprep.subr.mxu0 0.0
        %4757 = vmatpush1.msra.mxu0 0.0
        %4758 = vmatprep.mubr.f32.mxu0 0.0
        %4759 = vmatmul.mubr.f32.gmra.mrb[0].mxu0 %v4692
        %v4760 = vpop.f32.mrb[0].mxu0
        %v4761 = vadd.f32 %v4689, %v4760
        %v4762 = vpop.f32.mrb[0].mxu0
        %4763 = vdwg.mxu0
        %v4764 = vmul.f32 %v4761, 0.5
        %v4765 = vmul.f32 %v4761, 0.70710677
        %v4766 = verf.f32.pop %v4765
        %v4767 = vadd.f32 %v4766, 1.0
        %v4768 = vmul.f32 %v4764, %v4767
        %v4770 = vlaneseq
        %v4771 = vshrl.u32 %v4770, 7
        %v4772 = vsub.s32 0, %v4771
        %v4773 = vrot.slane %v1218, %v4772
        %v4776 = vsel %vm1231, %v4768, 0
        %4778 = vmatprep.subr.mxu0 0.0
        %4779 = vmatpush1.msra.mxu0 %v1210
        %4780 = vmatprep.subr.mxu0 0.0
        %4781 = vmatpush1.msra.mxu0 %v1211
        %4782 = vmatprep.subr.mxu0 0.0
        %4783 = vmatpush1.msra.mxu0 %v1212
        %4784 = vmatprep.subr.mxu0 0.0
        %4785 = vmatpush1.msra.mxu0 %v1213
        %4786 = vmatprep.subr.mxu0 0.0
        %4787 = vmatpush1.msra.mxu0 %v1214
        %4788 = vmatprep.subr.mxu0 0.0
        %4789 = vmatpush1.msra.mxu0 %v1215
        %4790 = vmatprep.subr.mxu0 0.0
        %4791 = vmatpush1.msra.mxu0 %v1216
        %4792 = vmatprep.subr.mxu0 0.0
        %4793 = vmatpush1.msra.mxu0 %v1217
        %4794 = vmatprep.subr.mxu0 0.0
        %4795 = vmatpush1.msra.mxu0 0.0
        %4796 = vmatprep.subr.mxu0 0.0
        %4797 = vmatpush1.msra.mxu0 0.0
        %4798 = vmatprep.subr.mxu0 0.0
        %4799 = vmatpush1.msra.mxu0 0.0
        %4800 = vmatprep.subr.mxu0 0.0
        %4801 = vmatpush1.msra.mxu0 0.0
        %4802 = vmatprep.subr.mxu0 0.0
        %4803 = vmatpush1.msra.mxu0 0.0
        %4804 = vmatprep.subr.mxu0 0.0
        %4805 = vmatpush1.msra.mxu0 0.0
        %4806 = vmatprep.subr.mxu0 0.0
        %4807 = vmatpush1.msra.mxu0 0.0
        %4808 = vmatprep.subr.mxu0 0.0
        %4809 = vmatpush1.msra.mxu0 0.0
        %4810 = vmatprep.subr.mxu0 0.0
        %4811 = vmatpush1.msra.mxu0 0.0
        %4812 = vmatprep.subr.mxu0 0.0
        %4813 = vmatpush1.msra.mxu0 0.0
        %4814 = vmatprep.subr.mxu0 0.0
        %4815 = vmatpush1.msra.mxu0 0.0
        %4816 = vmatprep.subr.mxu0 0.0
        %4817 = vmatpush1.msra.mxu0 0.0
        %4818 = vmatprep.subr.mxu0 0.0
        %4819 = vmatpush1.msra.mxu0 0.0
        %4820 = vmatprep.subr.mxu0 0.0
        %4821 = vmatpush1.msra.mxu0 0.0
        %4822 = vmatprep.subr.mxu0 0.0
        %4823 = vmatpush1.msra.mxu0 0.0
        %4824 = vmatprep.subr.mxu0 0.0
        %4825 = vmatpush1.msra.mxu0 0.0
        %4826 = vmatprep.subr.mxu0 0.0
        %4827 = vmatpush1.msra.mxu0 0.0
        %4828 = vmatprep.subr.mxu0 0.0
        %4829 = vmatpush1.msra.mxu0 0.0
        %4830 = vmatprep.subr.mxu0 0.0
        %4831 = vmatpush1.msra.mxu0 0.0
        %4832 = vmatprep.subr.mxu0 0.0
        %4833 = vmatpush1.msra.mxu0 0.0
        %4834 = vmatprep.subr.mxu0 0.0
        %4835 = vmatpush1.msra.mxu0 0.0
        %4836 = vmatprep.subr.mxu0 0.0
        %4837 = vmatpush1.msra.mxu0 0.0
        %4838 = vmatprep.subr.mxu0 0.0
        %4839 = vmatpush1.msra.mxu0 0.0
        %4840 = vmatprep.subr.mxu0 0.0
        %4841 = vmatpush1.msra.mxu0 0.0
        %4842 = vmatprep.mubr.f32.mxu0 0.0
        %4843 = vmatmul.mubr.f32.gmra.mrb[0].mxu0 %v4776
        %v4844 = vpop.f32.mrb[0].mxu0
        %v4845 = vadd.f32 %v4773, %v4844
        %v4846 = vpop.f32.mrb[0].mxu0
        %4847 = vdwg.mxu0
        %4848 = vst.msk [vmem:[%s1088] sm:$0xff] %vm1231, %v4845
        %s4849 = sand.u32 %s705, 1
        %s4850 = scalar_lea.sflag [#allocation4], %s4849
        %s4851 = sand.u32 %s705, 1
        %s4852 = smul.addr %s4851, 8
        %s4853 = scalar_lea.vmem [#allocation25], %s4852
        // Predicated region
        $region193: #{tpu_custom_call.1} parent=135 // pred_check
          %p4854 = pneg %p715
        $region194: #{tpu_custom_call.1} parent=135 // pred_check_branch
          %4856 = sbr.rel (%p4854) target = $region196
        $region195: #{tpu_custom_call.1} parent=135 // pred_region
          %s4858 = ssub.s32 128, 128
          %4859 = vsyncadd %s4850, %s4858
          %s4860 = smul.addr %s83, 128
          %s4861 = scalar_lea.hbm %s59, %s4860
          %s4863 = sshll.u32 %s4853, 4
          %s4864 = int_to_ptr.vmem [resolvable:$true] %s4863
          %4866 = dma.vmem_to_hbm [thread:$0]  %s4864, 128, %s4861, %s4850
        $region196: #{tpu_custom_call.1} parent=135 // pred_fallthru
          _
      $region136: #{tpu_custom_call.1} parent=5 // pred_fallthru
        _
      %p4867 = scmp.le.s32.totalorder 2, %s78
      // Predicated region
      $region197: #{tpu_custom_call.1} parent=5 // pred_check
        %p4868 = pneg %p4867
      $region198: #{tpu_custom_call.1} parent=5 // pred_check_branch
        %4870 = sbr.rel (%p4868) target = $region200
      $region199: #{tpu_custom_call.1} parent=5 // pred_region
        %s4871 = ssub.s32 %s78, 2
        // Predicated region
        $region201: #{tpu_custom_call.1} parent=199 // pred_check
          %p4872 = pneg %p721
        $region202: #{tpu_custom_call.1} parent=199 // pred_check_branch
          %4874 = sbr.rel (%p4872) target = $region204
        $region203: #{tpu_custom_call.1} parent=199 // pred_region
          %s4875 = sand.u32 %s706, 1
          %s4876 = scalar_lea.sflag [#allocation4], %s4875
          %s4877 = sand.u32 %s706, 1
          %s4878 = smul.addr %s4877, 8
          %s4879 = scalar_lea.vmem [#allocation25], %s4878
          %4880 = dma.done %s4876, 128
        $region204: #{tpu_custom_call.1} parent=199 // pred_fallthru
          _
      $region200: #{tpu_custom_call.1} parent=5 // pred_fallthru
        _
    $region6: #{tpu_custom_call.1} parent=1 // loop_footer
      %s82 = sadd.s32 1, %s78
    $region7: #{tpu_custom_call.1} parent=1 // loop_footer_branch
      %77 = sbr.rel target = $region3
    $region8: #{tpu_custom_call.1} parent=1 // loop_exit
      _
    %4881 = vsyncpa [#allocation3], 1
    %s4882 = scalar_lea.sflag [#allocation3], 1
    %4883 = vsyncpa %s4882, 1
    %4884 = vsyncpa [#allocation6], 1
    %4885 = vsyncpa [#allocation9], 1
    %4886 = vsyncpa [#allocation12], 1
    %4887 = vsyncpa [#allocation15], 1
    %4888 = vsyncpa [#allocation18], 1
    %4889 = vsyncpa [#allocation21], 1
    %4890 = vsyncpa [#allocation24], 1
    %4891 = vsyncpa [#allocation4], 1
    %s4892 = scalar_lea.sflag [#allocation4], 1
    %4893 = vsyncpa %s4892, 1

</llo_original>
